<compile_context>
chip_gen: v7x
topology: tpu7x:2x2x1
jax: 0.10.0
libtpu: 0.0.40
codegen_flags: <defaults>
</compile_context>

<pallas_src>
import functools
import math

import jax
import jax.numpy as jnp
from jax import lax
from jax.experimental import pallas as pl
from jax.experimental.pallas import tpu as pltpu

NOISE_DIM = 50
HID = 25
NPARAMS = 15
NWAVES = 5
SEQ = 216                    # 1 initial sample + 215 Euler steps
SEQ_PAD = 256                # padded time axis (multiple of 128)
GROUP = 8                    # rows per aligned sublane store
NGROUPS = SEQ // GROUP       # 27
H_STEP = 1.0 / 512.0         # ode_params.h
A_RESP = 0.005               # ode_params.A   (respiratory amplitude, mV)
F2 = 0.25                    # ode_params.f2  (respiratory frequency, Hz)
OMEGA = 2.0 * math.pi        # constant angular velocity (see TODO above)
BN_EPS = 1e-5
LEAKY_SLOPE = 0.01
TWO_PI = 2.0 * math.pi
INV_TWO_PI = 1.0 / TWO_PI
Z_DECAY = 1.0 - H_STEP       # z_{n+1} = Z_DECAY*z_n + h*(zbase_n - zsum_n)
LANES = 128

_PARAM_BIAS = [1.2, 0.25, -(1.0 / 3.0) * math.pi,
               -5.0, 0.1, -(1.0 / 12.0) * math.pi,
               20.0, 0.1, 0.0,
               -7.5, 0.1, (1.0 / 12.0) * math.pi,
               0.3, 0.4, 0.5 * math.pi]
# Row permutation so fc2 directly emits [a0..a4, b0..b4, th0..th4].
ROW_PERM = [0, 3, 6, 9, 12, 1, 4, 7, 10, 13, 2, 5, 8, 11, 14]
PARAM_BIAS_P = jnp.array([_PARAM_BIAS[i] for i in ROW_PERM],
                         dtype=jnp.float32).reshape(NPARAMS, 1)

# Standard initial ODE state used by the ecg_pytorch training loop.
V0_INIT = jnp.array([-0.417750770388669, -0.9085616622823985, -0.004551233843726818],
                    dtype=jnp.float32)


# ---------------------------------------------------------------------------
# Fused kernel: MLP parameter head + 3-stage Euler integration.
# All arrays carry batch on the lane (last) axis.
# ---------------------------------------------------------------------------
def ode_gen_kernel(noise_ref, w1_ref, b1_ref, gamma_ref, beta_ref,
                   w2_ref, b2_ref, bias15_ref, zbase_h_ref, v0_ref,
                   z_out_ref, xs_ref, ys_ref, f_ref, *, batch):
    bp = z_out_ref.shape[1]                  # padded batch (lanes)

    # ---------------- MLP parameter head ----------------------------------
    x = noise_ref[...]                                                  # (50, Bp)
    h = jnp.dot(w1_ref[...], x,
                preferred_element_type=jnp.float32) + b1_ref[...]       # (25, Bp)

    # BatchNorm1d training-mode batch statistics over the *valid* lanes only,
    # so padding the batch to 128 lanes does not change the numerics.
    inv_n = 1.0 / float(batch)
    if batch < bp:
        lane = lax.broadcasted_iota(jnp.int32, (1, bp), 1)
        mask = (lane < batch).astype(jnp.float32)                       # (1, Bp)
        hm = h * mask
    else:
        mask = None
        hm = h
    mean = jnp.sum(hm, axis=1, keepdims=True) * inv_n                   # (25, 1)
    diff = h - mean
    dm = diff * mask if mask is not None else diff
    var = jnp.sum(dm * dm, axis=1, keepdims=True) * inv_n               # biased var
    hn = diff * lax.rsqrt(var + BN_EPS) * gamma_ref[...] + beta_ref[...]

    # F.leaky_relu (default negative_slope = 0.01)
    hn = jnp.where(hn >= 0.0, hn, LEAKY_SLOPE * hn)

    h2 = jnp.dot(w2_ref[...], hn,
                 preferred_element_type=jnp.float32) + b2_ref[...]      # (15, Bp)
    p = 0.1 * jax.nn.sigmoid(h2) + bias15_ref[...]                      # rows: [a|b|th]

    a_i = p[0:NWAVES, :]                                                # (5, Bp)
    b_i = p[NWAVES:2 * NWAVES, :]
    th_i = p[2 * NWAVES:3 * NWAVES, :]
    neg_inv_2b2 = -0.5 / (b_i * b_i)          # hoisted: no per-step divide

    # ---------------- initial state / padded-tail init --------------------
    x0 = v0_ref[0:1, :]                       # (1, Bp)
    y0 = v0_ref[1:2, :]
    z0 = v0_ref[2:3, :]

    tail0 = jnp.zeros((SEQ_PAD - SEQ, bp), jnp.float32)
    xs_ref[pl.ds(SEQ, SEQ_PAD - SEQ), :] = tail0      # keep atan2/exp inputs finite
    ys_ref[pl.ds(SEQ, SEQ_PAD - SEQ), :] = tail0
    z_out_ref[pl.ds(SEQ, SEQ_PAD - SEQ), :] = tail0   # clear only the padded tail

    # ---------------- stage 1: serial (x, y) Euler recurrence -------------
    # Only this recurrence must stay serial (sqrt + a few VPU ops per step).
    # Carry-in rows are stored as aligned (8, Bp) tiles.
    def xy_group(g, carry):
        x_t, y_t = carry
        base = pl.multiple_of(g * GROUP, GROUP)
        xrows, yrows = [], []
        for _ in range(GROUP):
            xrows.append(x_t)
            yrows.append(y_t)
            alpha = 1.0 - jnp.sqrt(x_t * x_t + y_t * y_t)
            x_n = x_t + H_STEP * (alpha * x_t - OMEGA * y_t)
            y_n = y_t + H_STEP * (alpha * y_t + OMEGA * x_t)
            x_t, y_t = x_n, y_n
        xs_ref[pl.ds(base, GROUP), :] = jnp.concatenate(xrows, axis=0)
        ys_ref[pl.ds(base, GROUP), :] = jnp.concatenate(yrows, axis=0)
        return (x_t, y_t)

    lax.fori_loop(0, NGROUPS, xy_group, (x0, y0))     # 27 groups x 8 steps

    # ---------------- stage 2: time-vectorized forcing ---------------------
    xs = xs_ref[...]                                                    # (256, Bp)
    ys = ys_ref[...]
    theta = jnp.arctan2(ys, xs)                                         # (256, Bp)
    zsum = jnp.zeros_like(theta)
    for k in range(NWAVES):
        d = theta - th_i[k:k + 1, :]
        # fmod(d, 2*pi) via range reduction (trunc toward zero, keeps sign of d)
        q = d * INV_TWO_PI
        q = jnp.where(q >= 0.0, jnp.floor(q), jnp.ceil(q))
        d = d - TWO_PI * q
        zsum = zsum + a_i[k:k + 1, :] * d * jnp.exp(d * d * neg_inv_2b2[k:k + 1, :])
    # forcing_n = h * (A*sin(2*pi*f2*t_n) - zsum_n); baseline column precomputed.
    f_ref[...] = zbase_h_ref[...] - H_STEP * zsum

    # ---------------- stage 3: z linear scan (1 FMA / step) ----------------
    def z_group(g, z_c):
        base = pl.multiple_of(g * GROUP, GROUP)
        gblk = f_ref[pl.ds(base, GROUP), :]           # (8, Bp) forcing
        rows = []
        cur = z_c
        for j in range(GROUP):
            rows.append(cur)
            cur = Z_DECAY * cur + gblk[j:j + 1, :]
        z_out_ref[pl.ds(base, GROUP), :] = jnp.concatenate(rows, axis=0)
        return cur                                    # carry into next group

    lax.fori_loop(0, NGROUPS, z_group, z0)


# ---------------------------------------------------------------------------
# Wrapper
# ---------------------------------------------------------------------------
def _round_up(n, m):
    return ((n + m - 1) // m) * m


def init_params(key):
    """Deterministic parameter init mimicking PyTorch nn.Linear defaults."""
    k1, k2, k3, k4 = jax.random.split(key, 4)
    bound1 = 1.0 / math.sqrt(NOISE_DIM)
    w1 = jax.random.uniform(k1, (HID, NOISE_DIM), jnp.float32, -bound1, bound1)
    b1 = jax.random.uniform(k2, (HID,), jnp.float32, -bound1, bound1)
    bound2 = 1.0 / math.sqrt(HID)
    w2 = jax.random.uniform(k3, (NPARAMS, HID), jnp.float32, -bound2, bound2)
    b2 = jax.random.uniform(k4, (NPARAMS,), jnp.float32, -bound2, bound2)
    gamma = jnp.ones((HID,), jnp.float32)
    beta = jnp.zeros((HID,), jnp.float32)
    # Column-vector biases/scales so they broadcast over the lane (batch) axis.
    return (w1, b1.reshape(HID, 1), gamma.reshape(HID, 1), beta.reshape(HID, 1),
            w2, b2.reshape(NPARAMS, 1))


@jax.jit
def ode_generator_forward(noise_input, v0, w1, b1, gamma, beta, w2, b2):
    B = noise_input.shape[0]
    bp = _round_up(max(B, LANES), LANES)              # pad batch to 128-lane multiple

    # Pre-permute fc2 rows so the kernel sees [a0..a4 | b0..b4 | th0..th4].
    perm = jnp.array(ROW_PERM, dtype=jnp.int32)
    w2p = jnp.take(w2, perm, axis=0)
    b2p = jnp.take(b2, perm, axis=0)

    # Batch on the lane (last) axis, zero-padded; BN stats use only valid lanes.
    noise_t = jnp.zeros((NOISE_DIM, bp), jnp.float32).at[:, :B].set(noise_input.T)
    v0_t = jnp.zeros((3, bp), jnp.float32).at[:, :B].set(v0.T)

    # Respiratory baseline column, already scaled by the Euler step h.
    t_idx = jnp.arange(SEQ_PAD, dtype=jnp.float32).reshape(SEQ_PAD, 1)
    zbase_h = (H_STEP * A_RESP) * jnp.sin((TWO_PI * F2 * H_STEP) * t_idx)

    kernel = functools.partial(ode_gen_kernel, batch=B)
    z_pad = pl.pallas_call(
        kernel,
        out_shape=jax.ShapeDtypeStruct((SEQ_PAD, bp), jnp.float32),
        scratch_shapes=[pltpu.VMEM((SEQ_PAD, bp), jnp.float32),   # x trajectory
                        pltpu.VMEM((SEQ_PAD, bp), jnp.float32),   # y trajectory
                        pltpu.VMEM((SEQ_PAD, bp), jnp.float32)],  # forcing
    )(noise_t, w1, b1, gamma, beta, w2p, b2p, PARAM_BIAS_P, zbase_h, v0_t)

    # Slice off padded time rows / padded batch lanes; return batch-major (B, 216).
    return z_pad[:SEQ, :B].T


if __name__ == "__main__":
    key = jax.random.PRNGKey(0)
    k_params, k_noise = jax.random.split(key)

    params = init_params(k_params)

    B = 2
    noise_input = jax.random.normal(k_noise, (B, NOISE_DIM), dtype=jnp.float32)
    v0 = jnp.tile(V0_INIT.reshape(1, 3), (B, 1))

    z_t = ode_generator_forward(noise_input, v0, *params)
    z_t = jax.block_until_ready(z_t)

    assert z_t.shape == (B, SEQ), z_t.shape
    assert bool(jnp.all(jnp.isfinite(z_t)))
    print("KERNEL_OK")
</pallas_src>

<mosaic_0001>
module attributes {stable_mosaic.version = 11 : i64} {
  func.func @ode_gen_kernel(%arg0: memref<50x128xf32, #tpu.memory_space<vmem>>, %arg1: memref<25x50xf32, #tpu.memory_space<vmem>>, %arg2: memref<25x1xf32, #tpu.memory_space<vmem>>, %arg3: memref<25x1xf32, #tpu.memory_space<vmem>>, %arg4: memref<25x1xf32, #tpu.memory_space<vmem>>, %arg5: memref<15x25xf32, #tpu.memory_space<vmem>>, %arg6: memref<15x1xf32, #tpu.memory_space<vmem>>, %arg7: memref<15x1xf32, #tpu.memory_space<vmem>>, %arg8: memref<256x1xf32, #tpu.memory_space<vmem>>, %arg9: memref<3x128xf32, #tpu.memory_space<vmem>>, %arg10: memref<256x128xf32, #tpu.memory_space<vmem>>, %arg11: memref<256x128xf32, #tpu.memory_space<vmem>>, %arg12: memref<256x128xf32, #tpu.memory_space<vmem>>, %arg13: memref<256x128xf32, #tpu.memory_space<vmem>>) attributes {dimension_semantics = [], scalar_prefetch = 0 : i64, scratch_operands = 3 : i64, tpu.core_type = #tpu.core_type<tc>} {
    %c0 = arith.constant 0 : index
    %c0_0 = arith.constant 0 : index
    %0 = vector.load %arg0[%c0, %c0_0] : memref<50x128xf32, #tpu.memory_space<vmem>>, vector<50x128xf32>
    %c0_1 = arith.constant 0 : index
    %c0_2 = arith.constant 0 : index
    %1 = vector.load %arg1[%c0_1, %c0_2] : memref<25x50xf32, #tpu.memory_space<vmem>>, vector<25x50xf32>
    %cst = arith.constant dense<0.000000e+00> : vector<25x128xf32>
    %2 = tpu.matmul %1, %0, %cst {dimension_numbers = #tpu.dot_dimension_numbers<[1], [0], [0], [1], [0, 0, 1, 1], [], []>} : vector<25x50xf32>, vector<50x128xf32>, vector<25x128xf32> -> vector<25x128xf32>
    %c0_3 = arith.constant 0 : index
    %c0_4 = arith.constant 0 : index
    %3 = vector.load %arg2[%c0_3, %c0_4] : memref<25x1xf32, #tpu.memory_space<vmem>>, vector<25x1xf32>
    %4 = vector.broadcast %3 : vector<25x1xf32> to vector<25x128xf32>
    %5 = arith.addf %2, %4 : vector<25x128xf32>
    %6 = tpu.iota {dimensions = array<i32: 1>} : vector<1x128xi32>
    %c2_i32 = arith.constant 2 : i32
    %7 = vector.broadcast %c2_i32 : i32 to vector<1x128xi32>
    %8 = arith.cmpi slt, %6, %7 : vector<1x128xi32>
    %9 = arith.extui %8 : vector<1x128xi1> to vector<1x128xi32>
    %10 = arith.sitofp %9 : vector<1x128xi32> to vector<1x128xf32>
    %11 = vector.broadcast %10 : vector<1x128xf32> to vector<25x128xf32>
    %12 = arith.mulf %5, %11 : vector<25x128xf32>
    %cst_5 = arith.constant dense<0.000000e+00> : vector<25xf32>
    %13 = vector.multi_reduction <add>, %12, %cst_5 [1] : vector<25x128xf32> to vector<25xf32>
    %14 = vector.shape_cast %13 : vector<25xf32> to vector<25x1xf32>
    %cst_6 = arith.constant 5.000000e-01 : f32
    %15 = vector.broadcast %cst_6 : f32 to vector<25x1xf32>
    %16 = arith.mulf %14, %15 : vector<25x1xf32>
    %17 = vector.broadcast %16 : vector<25x1xf32> to vector<25x128xf32>
    %18 = arith.subf %5, %17 : vector<25x128xf32>
    %19 = vector.broadcast %10 : vector<1x128xf32> to vector<25x128xf32>
    %20 = arith.mulf %18, %19 : vector<25x128xf32>
    %21 = arith.mulf %20, %20 : vector<25x128xf32>
    %cst_7 = arith.constant dense<0.000000e+00> : vector<25xf32>
    %22 = vector.multi_reduction <add>, %21, %cst_7 [1] : vector<25x128xf32> to vector<25xf32>
    %23 = vector.shape_cast %22 : vector<25xf32> to vector<25x1xf32>
    %cst_8 = arith.constant 5.000000e-01 : f32
    %24 = vector.broadcast %cst_8 : f32 to vector<25x1xf32>
    %25 = arith.mulf %23, %24 : vector<25x1xf32>
    %cst_9 = arith.constant 9.99999974E-6 : f32
    %26 = vector.broadcast %cst_9 : f32 to vector<25x1xf32>
    %27 = arith.addf %25, %26 : vector<25x1xf32>
    %28 = math.rsqrt %27 : vector<25x1xf32>
    %29 = vector.broadcast %28 : vector<25x1xf32> to vector<25x128xf32>
    %30 = arith.mulf %18, %29 : vector<25x128xf32>
    %c0_10 = arith.constant 0 : index
    %c0_11 = arith.constant 0 : index
    %31 = vector.load %arg3[%c0_10, %c0_11] : memref<25x1xf32, #tpu.memory_space<vmem>>, vector<25x1xf32>
    %32 = vector.broadcast %31 : vector<25x1xf32> to vector<25x128xf32>
    %33 = arith.mulf %30, %32 : vector<25x128xf32>
    %c0_12 = arith.constant 0 : index
    %c0_13 = arith.constant 0 : index
    %34 = vector.load %arg4[%c0_12, %c0_13] : memref<25x1xf32, #tpu.memory_space<vmem>>, vector<25x1xf32>
    %35 = vector.broadcast %34 : vector<25x1xf32> to vector<25x128xf32>
    %36 = arith.addf %33, %35 : vector<25x128xf32>
    %cst_14 = arith.constant 0.000000e+00 : f32
    %37 = vector.broadcast %cst_14 : f32 to vector<25x128xf32>
    %38 = arith.cmpf oge, %36, %37 : vector<25x128xf32>
    %cst_15 = arith.constant 0.00999999977 : f32
    %39 = vector.broadcast %cst_15 : f32 to vector<25x128xf32>
    %40 = arith.mulf %39, %36 : vector<25x128xf32>
    %41 = arith.select %38, %36, %40 : vector<25x128xi1>, vector<25x128xf32>
    %c0_16 = arith.constant 0 : index
    %c0_17 = arith.constant 0 : index
    %42 = vector.load %arg5[%c0_16, %c0_17] : memref<15x25xf32, #tpu.memory_space<vmem>>, vector<15x25xf32>
    %cst_18 = arith.constant dense<0.000000e+00> : vector<15x128xf32>
    %43 = tpu.matmul %42, %41, %cst_18 {dimension_numbers = #tpu.dot_dimension_numbers<[1], [0], [0], [1], [0, 0, 1, 1], [], []>} : vector<15x25xf32>, vector<25x128xf32>, vector<15x128xf32> -> vector<15x128xf32>
    %c0_19 = arith.constant 0 : index
    %c0_20 = arith.constant 0 : index
    %44 = vector.load %arg6[%c0_19, %c0_20] : memref<15x1xf32, #tpu.memory_space<vmem>>, vector<15x1xf32>
    %45 = vector.broadcast %44 : vector<15x1xf32> to vector<15x128xf32>
    %46 = arith.addf %43, %45 : vector<15x128xf32>
    %47 = arith.negf %46 : vector<15x128xf32>
    %48 = math.exp %47 : vector<15x128xf32>
    %cst_21 = arith.constant 1.000000e+00 : f32
    %49 = vector.broadcast %cst_21 : f32 to vector<15x128xf32>
    %50 = arith.addf %49, %48 : vector<15x128xf32>
    %51 = arith.divf %49, %50 : vector<15x128xf32>
    %cst_22 = arith.constant 1.000000e-01 : f32
    %52 = vector.broadcast %cst_22 : f32 to vector<15x128xf32>
    %53 = arith.mulf %52, %51 : vector<15x128xf32>
    %c0_23 = arith.constant 0 : index
    %c0_24 = arith.constant 0 : index
    %54 = vector.load %arg7[%c0_23, %c0_24] : memref<15x1xf32, #tpu.memory_space<vmem>>, vector<15x1xf32>
    %55 = vector.broadcast %54 : vector<15x1xf32> to vector<15x128xf32>
    %56 = arith.addf %53, %55 : vector<15x128xf32>
    %57 = vector.extract_strided_slice %56 {offsets = [0, 0], sizes = [5, 128], strides = [1, 1]} : vector<15x128xf32> to vector<5x128xf32>
    %58 = vector.extract_strided_slice %56 {offsets = [5, 0], sizes = [5, 128], strides = [1, 1]} : vector<15x128xf32> to vector<5x128xf32>
    %59 = vector.extract_strided_slice %56 {offsets = [10, 0], sizes = [5, 128], strides = [1, 1]} : vector<15x128xf32> to vector<5x128xf32>
    %60 = arith.mulf %58, %58 : vector<5x128xf32>
    %cst_25 = arith.constant -5.000000e-01 : f32
    %61 = vector.broadcast %cst_25 : f32 to vector<5x128xf32>
    %62 = arith.divf %61, %60 : vector<5x128xf32>
    %c0_26 = arith.constant 0 : index
    %c0_27 = arith.constant 0 : index
    %63 = vector.load %arg9[%c0_26, %c0_27] : memref<3x128xf32, #tpu.memory_space<vmem>>, vector<1x128xf32>
    %c1 = arith.constant 1 : index
    %c0_28 = arith.constant 0 : index
    %64 = vector.load %arg9[%c1, %c0_28] : memref<3x128xf32, #tpu.memory_space<vmem>>, vector<1x128xf32>
    %c2 = arith.constant 2 : index
    %c0_29 = arith.constant 0 : index
    %65 = vector.load %arg9[%c2, %c0_29] : memref<3x128xf32, #tpu.memory_space<vmem>>, vector<1x128xf32>
    %cst_30 = arith.constant 0.000000e+00 : f32
    %66 = vector.broadcast %cst_30 : f32 to vector<40x128xf32>
    %c216 = arith.constant 216 : index
    %c0_31 = arith.constant 0 : index
    %67 = vector.load %arg11[%c216, %c0_31] : memref<256x128xf32, #tpu.memory_space<vmem>>, vector<40x128xf32>
    tpu.vector_store %arg11[%c216, %c0_31], %66 {strides = array<i32>} : memref<256x128xf32, #tpu.memory_space<vmem>>, vector<40x128xf32>,
    %c216_32 = arith.constant 216 : index
    %c0_33 = arith.constant 0 : index
    %68 = vector.load %arg12[%c216_32, %c0_33] : memref<256x128xf32, #tpu.memory_space<vmem>>, vector<40x128xf32>
    tpu.vector_store %arg12[%c216_32, %c0_33], %66 {strides = array<i32>} : memref<256x128xf32, #tpu.memory_space<vmem>>, vector<40x128xf32>,
    %c216_34 = arith.constant 216 : index
    %c0_35 = arith.constant 0 : index
    %69 = vector.load %arg10[%c216_34, %c0_35] : memref<256x128xf32, #tpu.memory_space<vmem>>, vector<40x128xf32>
    tpu.vector_store %arg10[%c216_34, %c0_35], %66 {strides = array<i32>} : memref<256x128xf32, #tpu.memory_space<vmem>>, vector<40x128xf32>,
    %c0_i32 = arith.constant 0 : i32
    %c27_i32 = arith.constant 27 : i32
    %70 = arith.addi %c0_i32, %c27_i32 : i32
    %c1_i32 = arith.constant 1 : i32
    %71:2 = scf.for %arg14 = %c0_i32 to %70 step %c1_i32 iter_args(%arg15 = %63, %arg16 = %64) -> (vector<1x128xf32>, vector<1x128xf32>)  : i32 {
      %c8_i32 = arith.constant 8 : i32
      %199 = arith.muli %arg14, %c8_i32 : i32
      %200 = tpu.assume_multiple %199, 8 : i32
      %201 = arith.mulf %arg15, %arg15 : vector<1x128xf32>
      %202 = arith.mulf %arg16, %arg16 : vector<1x128xf32>
      %203 = arith.addf %201, %202 : vector<1x128xf32>
      %204 = math.sqrt %203 : vector<1x128xf32>
      %cst_66 = arith.constant 1.000000e+00 : f32
      %205 = vector.broadcast %cst_66 : f32 to vector<1x128xf32>
      %206 = arith.subf %205, %204 : vector<1x128xf32>
      %207 = arith.mulf %206, %arg15 : vector<1x128xf32>
      %cst_67 = arith.constant 6.28318548 : f32
      %208 = vector.broadcast %cst_67 : f32 to vector<1x128xf32>
      %209 = arith.mulf %208, %arg16 : vector<1x128xf32>
      %210 = arith.subf %207, %209 : vector<1x128xf32>
      %cst_68 = arith.constant 0.001953125 : f32
      %211 = vector.broadcast %cst_68 : f32 to vector<1x128xf32>
      %212 = arith.mulf %211, %210 : vector<1x128xf32>
      %213 = arith.addf %arg15, %212 : vector<1x128xf32>
      %214 = arith.mulf %206, %arg16 : vector<1x128xf32>
      %cst_69 = arith.constant 6.28318548 : f32
      %215 = vector.broadcast %cst_69 : f32 to vector<1x128xf32>
      %216 = arith.mulf %215, %arg15 : vector<1x128xf32>
      %217 = arith.addf %214, %216 : vector<1x128xf32>
      %cst_70 = arith.constant 0.001953125 : f32
      %218 = vector.broadcast %cst_70 : f32 to vector<1x128xf32>
      %219 = arith.mulf %218, %217 : vector<1x128xf32>
      %220 = arith.addf %arg16, %219 : vector<1x128xf32>
      %221 = arith.mulf %213, %213 : vector<1x128xf32>
      %222 = arith.mulf %220, %220 : vector<1x128xf32>
      %223 = arith.addf %221, %222 : vector<1x128xf32>
      %224 = math.sqrt %223 : vector<1x128xf32>
      %cst_71 = arith.constant 1.000000e+00 : f32
      %225 = vector.broadcast %cst_71 : f32 to vector<1x128xf32>
      %226 = arith.subf %225, %224 : vector<1x128xf32>
      %227 = arith.mulf %226, %213 : vector<1x128xf32>
      %cst_72 = arith.constant 6.28318548 : f32
      %228 = vector.broadcast %cst_72 : f32 to vector<1x128xf32>
      %229 = arith.mulf %228, %220 : vector<1x128xf32>
      %230 = arith.subf %227, %229 : vector<1x128xf32>
      %cst_73 = arith.constant 0.001953125 : f32
      %231 = vector.broadcast %cst_73 : f32 to vector<1x128xf32>
      %232 = arith.mulf %231, %230 : vector<1x128xf32>
      %233 = arith.addf %213, %232 : vector<1x128xf32>
      %234 = arith.mulf %226, %220 : vector<1x128xf32>
      %cst_74 = arith.constant 6.28318548 : f32
      %235 = vector.broadcast %cst_74 : f32 to vector<1x128xf32>
      %236 = arith.mulf %235, %213 : vector<1x128xf32>
      %237 = arith.addf %234, %236 : vector<1x128xf32>
      %cst_75 = arith.constant 0.001953125 : f32
      %238 = vector.broadcast %cst_75 : f32 to vector<1x128xf32>
      %239 = arith.mulf %238, %237 : vector<1x128xf32>
      %240 = arith.addf %220, %239 : vector<1x128xf32>
      %241 = arith.mulf %233, %233 : vector<1x128xf32>
      %242 = arith.mulf %240, %240 : vector<1x128xf32>
      %243 = arith.addf %241, %242 : vector<1x128xf32>
      %244 = math.sqrt %243 : vector<1x128xf32>
      %cst_76 = arith.constant 1.000000e+00 : f32
      %245 = vector.broadcast %cst_76 : f32 to vector<1x128xf32>
      %246 = arith.subf %245, %244 : vector<1x128xf32>
      %247 = arith.mulf %246, %233 : vector<1x128xf32>
      %cst_77 = arith.constant 6.28318548 : f32
      %248 = vector.broadcast %cst_77 : f32 to vector<1x128xf32>
      %249 = arith.mulf %248, %240 : vector<1x128xf32>
      %250 = arith.subf %247, %249 : vector<1x128xf32>
      %cst_78 = arith.constant 0.001953125 : f32
      %251 = vector.broadcast %cst_78 : f32 to vector<1x128xf32>
      %252 = arith.mulf %251, %250 : vector<1x128xf32>
      %253 = arith.addf %233, %252 : vector<1x128xf32>
      %254 = arith.mulf %246, %240 : vector<1x128xf32>
      %cst_79 = arith.constant 6.28318548 : f32
      %255 = vector.broadcast %cst_79 : f32 to vector<1x128xf32>
      %256 = arith.mulf %255, %233 : vector<1x128xf32>
      %257 = arith.addf %254, %256 : vector<1x128xf32>
      %cst_80 = arith.constant 0.001953125 : f32
      %258 = vector.broadcast %cst_80 : f32 to vector<1x128xf32>
      %259 = arith.mulf %258, %257 : vector<1x128xf32>
      %260 = arith.addf %240, %259 : vector<1x128xf32>
      %261 = arith.mulf %253, %253 : vector<1x128xf32>
      %262 = arith.mulf %260, %260 : vector<1x128xf32>
      %263 = arith.addf %261, %262 : vector<1x128xf32>
      %264 = math.sqrt %263 : vector<1x128xf32>
      %cst_81 = arith.constant 1.000000e+00 : f32
      %265 = vector.broadcast %cst_81 : f32 to vector<1x128xf32>
      %266 = arith.subf %265, %264 : vector<1x128xf32>
      %267 = arith.mulf %266, %253 : vector<1x128xf32>
      %cst_82 = arith.constant 6.28318548 : f32
      %268 = vector.broadcast %cst_82 : f32 to vector<1x128xf32>
      %269 = arith.mulf %268, %260 : vector<1x128xf32>
      %270 = arith.subf %267, %269 : vector<1x128xf32>
      %cst_83 = arith.constant 0.001953125 : f32
      %271 = vector.broadcast %cst_83 : f32 to vector<1x128xf32>
      %272 = arith.mulf %271, %270 : vector<1x128xf32>
      %273 = arith.addf %253, %272 : vector<1x128xf32>
      %274 = arith.mulf %266, %260 : vector<1x128xf32>
      %cst_84 = arith.constant 6.28318548 : f32
      %275 = vector.broadcast %cst_84 : f32 to vector<1x128xf32>
      %276 = arith.mulf %275, %253 : vector<1x128xf32>
      %277 = arith.addf %274, %276 : vector<1x128xf32>
      %cst_85 = arith.constant 0.001953125 : f32
      %278 = vector.broadcast %cst_85 : f32 to vector<1x128xf32>
      %279 = arith.mulf %278, %277 : vector<1x128xf32>
      %280 = arith.addf %260, %279 : vector<1x128xf32>
      %281 = arith.mulf %273, %273 : vector<1x128xf32>
      %282 = arith.mulf %280, %280 : vector<1x128xf32>
      %283 = arith.addf %281, %282 : vector<1x128xf32>
      %284 = math.sqrt %283 : vector<1x128xf32>
      %cst_86 = arith.constant 1.000000e+00 : f32
      %285 = vector.broadcast %cst_86 : f32 to vector<1x128xf32>
      %286 = arith.subf %285, %284 : vector<1x128xf32>
      %287 = arith.mulf %286, %273 : vector<1x128xf32>
      %cst_87 = arith.constant 6.28318548 : f32
      %288 = vector.broadcast %cst_87 : f32 to vector<1x128xf32>
      %289 = arith.mulf %288, %280 : vector<1x128xf32>
      %290 = arith.subf %287, %289 : vector<1x128xf32>
      %cst_88 = arith.constant 0.001953125 : f32
      %291 = vector.broadcast %cst_88 : f32 to vector<1x128xf32>
      %292 = arith.mulf %291, %290 : vector<1x128xf32>
      %293 = arith.addf %273, %292 : vector<1x128xf32>
      %294 = arith.mulf %286, %280 : vector<1x128xf32>
      %cst_89 = arith.constant 6.28318548 : f32
      %295 = vector.broadcast %cst_89 : f32 to vector<1x128xf32>
      %296 = arith.mulf %295, %273 : vector<1x128xf32>
      %297 = arith.addf %294, %296 : vector<1x128xf32>
      %cst_90 = arith.constant 0.001953125 : f32
      %298 = vector.broadcast %cst_90 : f32 to vector<1x128xf32>
      %299 = arith.mulf %298, %297 : vector<1x128xf32>
      %300 = arith.addf %280, %299 : vector<1x128xf32>
      %301 = arith.mulf %293, %293 : vector<1x128xf32>
      %302 = arith.mulf %300, %300 : vector<1x128xf32>
      %303 = arith.addf %301, %302 : vector<1x128xf32>
      %304 = math.sqrt %303 : vector<1x128xf32>
      %cst_91 = arith.constant 1.000000e+00 : f32
      %305 = vector.broadcast %cst_91 : f32 to vector<1x128xf32>
      %306 = arith.subf %305, %304 : vector<1x128xf32>
      %307 = arith.mulf %306, %293 : vector<1x128xf32>
      %cst_92 = arith.constant 6.28318548 : f32
      %308 = vector.broadcast %cst_92 : f32 to vector<1x128xf32>
      %309 = arith.mulf %308, %300 : vector<1x128xf32>
      %310 = arith.subf %307, %309 : vector<1x128xf32>
      %cst_93 = arith.constant 0.001953125 : f32
      %311 = vector.broadcast %cst_93 : f32 to vector<1x128xf32>
      %312 = arith.mulf %311, %310 : vector<1x128xf32>
      %313 = arith.addf %293, %312 : vector<1x128xf32>
      %314 = arith.mulf %306, %300 : vector<1x128xf32>
      %cst_94 = arith.constant 6.28318548 : f32
      %315 = vector.broadcast %cst_94 : f32 to vector<1x128xf32>
      %316 = arith.mulf %315, %293 : vector<1x128xf32>
      %317 = arith.addf %314, %316 : vector<1x128xf32>
      %cst_95 = arith.constant 0.001953125 : f32
      %318 = vector.broadcast %cst_95 : f32 to vector<1x128xf32>
      %319 = arith.mulf %318, %317 : vector<1x128xf32>
      %320 = arith.addf %300, %319 : vector<1x128xf32>
      %321 = arith.mulf %313, %313 : vector<1x128xf32>
      %322 = arith.mulf %320, %320 : vector<1x128xf32>
      %323 = arith.addf %321, %322 : vector<1x128xf32>
      %324 = math.sqrt %323 : vector<1x128xf32>
      %cst_96 = arith.constant 1.000000e+00 : f32
      %325 = vector.broadcast %cst_96 : f32 to vector<1x128xf32>
      %326 = arith.subf %325, %324 : vector<1x128xf32>
      %327 = arith.mulf %326, %313 : vector<1x128xf32>
      %cst_97 = arith.constant 6.28318548 : f32
      %328 = vector.broadcast %cst_97 : f32 to vector<1x128xf32>
      %329 = arith.mulf %328, %320 : vector<1x128xf32>
      %330 = arith.subf %327, %329 : vector<1x128xf32>
      %cst_98 = arith.constant 0.001953125 : f32
      %331 = vector.broadcast %cst_98 : f32 to vector<1x128xf32>
      %332 = arith.mulf %331, %330 : vector<1x128xf32>
      %333 = arith.addf %313, %332 : vector<1x128xf32>
      %334 = arith.mulf %326, %320 : vector<1x128xf32>
      %cst_99 = arith.constant 6.28318548 : f32
      %335 = vector.broadcast %cst_99 : f32 to vector<1x128xf32>
      %336 = arith.mulf %335, %313 : vector<1x128xf32>
      %337 = arith.addf %334, %336 : vector<1x128xf32>
      %cst_100 = arith.constant 0.001953125 : f32
      %338 = vector.broadcast %cst_100 : f32 to vector<1x128xf32>
      %339 = arith.mulf %338, %337 : vector<1x128xf32>
      %340 = arith.addf %320, %339 : vector<1x128xf32>
      %341 = arith.mulf %333, %333 : vector<1x128xf32>
      %342 = arith.mulf %340, %340 : vector<1x128xf32>
      %343 = arith.addf %341, %342 : vector<1x128xf32>
      %344 = math.sqrt %343 : vector<1x128xf32>
      %cst_101 = arith.constant 1.000000e+00 : f32
      %345 = vector.broadcast %cst_101 : f32 to vector<1x128xf32>
      %346 = arith.subf %345, %344 : vector<1x128xf32>
      %347 = arith.mulf %346, %333 : vector<1x128xf32>
      %cst_102 = arith.constant 6.28318548 : f32
      %348 = vector.broadcast %cst_102 : f32 to vector<1x128xf32>
      %349 = arith.mulf %348, %340 : vector<1x128xf32>
      %350 = arith.subf %347, %349 : vector<1x128xf32>
      %cst_103 = arith.constant 0.001953125 : f32
      %351 = vector.broadcast %cst_103 : f32 to vector<1x128xf32>
      %352 = arith.mulf %351, %350 : vector<1x128xf32>
      %353 = arith.addf %333, %352 : vector<1x128xf32>
      %354 = arith.mulf %346, %340 : vector<1x128xf32>
      %cst_104 = arith.constant 6.28318548 : f32
      %355 = vector.broadcast %cst_104 : f32 to vector<1x128xf32>
      %356 = arith.mulf %355, %333 : vector<1x128xf32>
      %357 = arith.addf %354, %356 : vector<1x128xf32>
      %cst_105 = arith.constant 0.001953125 : f32
      %358 = vector.broadcast %cst_105 : f32 to vector<1x128xf32>
      %359 = arith.mulf %358, %357 : vector<1x128xf32>
      %360 = arith.addf %340, %359 : vector<1x128xf32>
      %361 = tpu.concatenate %arg15, %213, %233, %253, %273, %293, %313, %333 in 0 : vector<1x128xf32>, vector<1x128xf32>, vector<1x128xf32>, vector<1x128xf32>, vector<1x128xf32>, vector<1x128xf32>, vector<1x128xf32>, vector<1x128xf32> -> vector<8x128xf32>
      %362 = arith.index_cast %200 : i32 to index
      %c0_106 = arith.constant 0 : index
      %363 = vector.load %arg11[%362, %c0_106] : memref<256x128xf32, #tpu.memory_space<vmem>>, vector<8x128xf32>
      tpu.vector_store %arg11[%362, %c0_106], %361 {strides = array<i32>} : memref<256x128xf32, #tpu.memory_space<vmem>>, vector<8x128xf32>,
      %364 = tpu.concatenate %arg16, %220, %240, %260, %280, %300, %320, %340 in 0 : vector<1x128xf32>, vector<1x128xf32>, vector<1x128xf32>, vector<1x128xf32>, vector<1x128xf32>, vector<1x128xf32>, vector<1x128xf32>, vector<1x128xf32> -> vector<8x128xf32>
      %365 = arith.index_cast %200 : i32 to index
      %c0_107 = arith.constant 0 : index
      %366 = vector.load %arg12[%365, %c0_107] : memref<256x128xf32, #tpu.memory_space<vmem>>, vector<8x128xf32>
      tpu.vector_store %arg12[%365, %c0_107], %364 {strides = array<i32>} : memref<256x128xf32, #tpu.memory_space<vmem>>, vector<8x128xf32>,
      scf.yield %353, %360 : vector<1x128xf32>, vector<1x128xf32>
    }
    %c27_i32_36 = arith.constant 27 : i32
    %c0_37 = arith.constant 0 : index
    %c0_38 = arith.constant 0 : index
    %72 = vector.load %arg11[%c0_37, %c0_38] : memref<256x128xf32, #tpu.memory_space<vmem>>, vector<256x128xf32>
    %c0_39 = arith.constant 0 : index
    %c0_40 = arith.constant 0 : index
    %73 = vector.load %arg12[%c0_39, %c0_40] : memref<256x128xf32, #tpu.memory_space<vmem>>, vector<256x128xf32>
    %74 = math.atan2 %73, %72 : vector<256x128xf32>
    %cst_41 = arith.constant 0.000000e+00 : f32
    %75 = vector.broadcast %cst_41 : f32 to vector<256x128xf32>
    %76 = vector.extract_strided_slice %59 {offsets = [0, 0], sizes = [1, 128], strides = [1, 1]} : vector<5x128xf32> to vector<1x128xf32>
    %77 = vector.broadcast %76 : vector<1x128xf32> to vector<256x128xf32>
    %78 = arith.subf %74, %77 : vector<256x128xf32>
    %cst_42 = arith.constant 0.159154937 : f32
    %79 = vector.broadcast %cst_42 : f32 to vector<256x128xf32>
    %80 = arith.mulf %78, %79 : vector<256x128xf32>
    %cst_43 = arith.constant 0.000000e+00 : f32
    %81 = vector.broadcast %cst_43 : f32 to vector<256x128xf32>
    %82 = arith.cmpf oge, %80, %81 : vector<256x128xf32>
    %83 = math.floor %80 : vector<256x128xf32>
    %84 = math.ceil %80 : vector<256x128xf32>
    %85 = arith.select %82, %83, %84 : vector<256x128xi1>, vector<256x128xf32>
    %cst_44 = arith.constant 6.28318548 : f32
    %86 = vector.broadcast %cst_44 : f32 to vector<256x128xf32>
    %87 = arith.mulf %86, %85 : vector<256x128xf32>
    %88 = arith.subf %78, %87 : vector<256x128xf32>
    %89 = vector.extract_strided_slice %57 {offsets = [0, 0], sizes = [1, 128], strides = [1, 1]} : vector<5x128xf32> to vector<1x128xf32>
    %90 = vector.broadcast %89 : vector<1x128xf32> to vector<256x128xf32>
    %91 = arith.mulf %90, %88 : vector<256x128xf32>
    %92 = arith.mulf %88, %88 : vector<256x128xf32>
    %93 = vector.extract_strided_slice %62 {offsets = [0, 0], sizes = [1, 128], strides = [1, 1]} : vector<5x128xf32> to vector<1x128xf32>
    %94 = vector.broadcast %93 : vector<1x128xf32> to vector<256x128xf32>
    %95 = arith.mulf %92, %94 : vector<256x128xf32>
    %96 = math.exp %95 : vector<256x128xf32>
    %97 = arith.mulf %91, %96 : vector<256x128xf32>
    %98 = arith.addf %75, %97 : vector<256x128xf32>
    %99 = vector.extract_strided_slice %59 {offsets = [1, 0], sizes = [1, 128], strides = [1, 1]} : vector<5x128xf32> to vector<1x128xf32>
    %100 = vector.broadcast %99 : vector<1x128xf32> to vector<256x128xf32>
    %101 = arith.subf %74, %100 : vector<256x128xf32>
    %cst_45 = arith.constant 0.159154937 : f32
    %102 = vector.broadcast %cst_45 : f32 to vector<256x128xf32>
    %103 = arith.mulf %101, %102 : vector<256x128xf32>
    %cst_46 = arith.constant 0.000000e+00 : f32
    %104 = vector.broadcast %cst_46 : f32 to vector<256x128xf32>
    %105 = arith.cmpf oge, %103, %104 : vector<256x128xf32>
    %106 = math.floor %103 : vector<256x128xf32>
    %107 = math.ceil %103 : vector<256x128xf32>
    %108 = arith.select %105, %106, %107 : vector<256x128xi1>, vector<256x128xf32>
    %cst_47 = arith.constant 6.28318548 : f32
    %109 = vector.broadcast %cst_47 : f32 to vector<256x128xf32>
    %110 = arith.mulf %109, %108 : vector<256x128xf32>
    %111 = arith.subf %101, %110 : vector<256x128xf32>
    %112 = vector.extract_strided_slice %57 {offsets = [1, 0], sizes = [1, 128], strides = [1, 1]} : vector<5x128xf32> to vector<1x128xf32>
    %113 = vector.broadcast %112 : vector<1x128xf32> to vector<256x128xf32>
    %114 = arith.mulf %113, %111 : vector<256x128xf32>
    %115 = arith.mulf %111, %111 : vector<256x128xf32>
    %116 = vector.extract_strided_slice %62 {offsets = [1, 0], sizes = [1, 128], strides = [1, 1]} : vector<5x128xf32> to vector<1x128xf32>
    %117 = vector.broadcast %116 : vector<1x128xf32> to vector<256x128xf32>
    %118 = arith.mulf %115, %117 : vector<256x128xf32>
    %119 = math.exp %118 : vector<256x128xf32>
    %120 = arith.mulf %114, %119 : vector<256x128xf32>
    %121 = arith.addf %98, %120 : vector<256x128xf32>
    %122 = vector.extract_strided_slice %59 {offsets = [2, 0], sizes = [1, 128], strides = [1, 1]} : vector<5x128xf32> to vector<1x128xf32>
    %123 = vector.broadcast %122 : vector<1x128xf32> to vector<256x128xf32>
    %124 = arith.subf %74, %123 : vector<256x128xf32>
    %cst_48 = arith.constant 0.159154937 : f32
    %125 = vector.broadcast %cst_48 : f32 to vector<256x128xf32>
    %126 = arith.mulf %124, %125 : vector<256x128xf32>
    %cst_49 = arith.constant 0.000000e+00 : f32
    %127 = vector.broadcast %cst_49 : f32 to vector<256x128xf32>
    %128 = arith.cmpf oge, %126, %127 : vector<256x128xf32>
    %129 = math.floor %126 : vector<256x128xf32>
    %130 = math.ceil %126 : vector<256x128xf32>
    %131 = arith.select %128, %129, %130 : vector<256x128xi1>, vector<256x128xf32>
    %cst_50 = arith.constant 6.28318548 : f32
    %132 = vector.broadcast %cst_50 : f32 to vector<256x128xf32>
    %133 = arith.mulf %132, %131 : vector<256x128xf32>
    %134 = arith.subf %124, %133 : vector<256x128xf32>
    %135 = vector.extract_strided_slice %57 {offsets = [2, 0], sizes = [1, 128], strides = [1, 1]} : vector<5x128xf32> to vector<1x128xf32>
    %136 = vector.broadcast %135 : vector<1x128xf32> to vector<256x128xf32>
    %137 = arith.mulf %136, %134 : vector<256x128xf32>
    %138 = arith.mulf %134, %134 : vector<256x128xf32>
    %139 = vector.extract_strided_slice %62 {offsets = [2, 0], sizes = [1, 128], strides = [1, 1]} : vector<5x128xf32> to vector<1x128xf32>
    %140 = vector.broadcast %139 : vector<1x128xf32> to vector<256x128xf32>
    %141 = arith.mulf %138, %140 : vector<256x128xf32>
    %142 = math.exp %141 : vector<256x128xf32>
    %143 = arith.mulf %137, %142 : vector<256x128xf32>
    %144 = arith.addf %121, %143 : vector<256x128xf32>
    %145 = vector.extract_strided_slice %59 {offsets = [3, 0], sizes = [1, 128], strides = [1, 1]} : vector<5x128xf32> to vector<1x128xf32>
    %146 = vector.broadcast %145 : vector<1x128xf32> to vector<256x128xf32>
    %147 = arith.subf %74, %146 : vector<256x128xf32>
    %cst_51 = arith.constant 0.159154937 : f32
    %148 = vector.broadcast %cst_51 : f32 to vector<256x128xf32>
    %149 = arith.mulf %147, %148 : vector<256x128xf32>
    %cst_52 = arith.constant 0.000000e+00 : f32
    %150 = vector.broadcast %cst_52 : f32 to vector<256x128xf32>
    %151 = arith.cmpf oge, %149, %150 : vector<256x128xf32>
    %152 = math.floor %149 : vector<256x128xf32>
    %153 = math.ceil %149 : vector<256x128xf32>
    %154 = arith.select %151, %152, %153 : vector<256x128xi1>, vector<256x128xf32>
    %cst_53 = arith.constant 6.28318548 : f32
    %155 = vector.broadcast %cst_53 : f32 to vector<256x128xf32>
    %156 = arith.mulf %155, %154 : vector<256x128xf32>
    %157 = arith.subf %147, %156 : vector<256x128xf32>
    %158 = vector.extract_strided_slice %57 {offsets = [3, 0], sizes = [1, 128], strides = [1, 1]} : vector<5x128xf32> to vector<1x128xf32>
    %159 = vector.broadcast %158 : vector<1x128xf32> to vector<256x128xf32>
    %160 = arith.mulf %159, %157 : vector<256x128xf32>
    %161 = arith.mulf %157, %157 : vector<256x128xf32>
    %162 = vector.extract_strided_slice %62 {offsets = [3, 0], sizes = [1, 128], strides = [1, 1]} : vector<5x128xf32> to vector<1x128xf32>
    %163 = vector.broadcast %162 : vector<1x128xf32> to vector<256x128xf32>
    %164 = arith.mulf %161, %163 : vector<256x128xf32>
    %165 = math.exp %164 : vector<256x128xf32>
    %166 = arith.mulf %160, %165 : vector<256x128xf32>
    %167 = arith.addf %144, %166 : vector<256x128xf32>
    %168 = vector.extract_strided_slice %59 {offsets = [4, 0], sizes = [1, 128], strides = [1, 1]} : vector<5x128xf32> to vector<1x128xf32>
    %169 = vector.broadcast %168 : vector<1x128xf32> to vector<256x128xf32>
    %170 = arith.subf %74, %169 : vector<256x128xf32>
    %cst_54 = arith.constant 0.159154937 : f32
    %171 = vector.broadcast %cst_54 : f32 to vector<256x128xf32>
    %172 = arith.mulf %170, %171 : vector<256x128xf32>
    %cst_55 = arith.constant 0.000000e+00 : f32
    %173 = vector.broadcast %cst_55 : f32 to vector<256x128xf32>
    %174 = arith.cmpf oge, %172, %173 : vector<256x128xf32>
    %175 = math.floor %172 : vector<256x128xf32>
    %176 = math.ceil %172 : vector<256x128xf32>
    %177 = arith.select %174, %175, %176 : vector<256x128xi1>, vector<256x128xf32>
    %cst_56 = arith.constant 6.28318548 : f32
    %178 = vector.broadcast %cst_56 : f32 to vector<256x128xf32>
    %179 = arith.mulf %178, %177 : vector<256x128xf32>
    %180 = arith.subf %170, %179 : vector<256x128xf32>
    %181 = vector.extract_strided_slice %57 {offsets = [4, 0], sizes = [1, 128], strides = [1, 1]} : vector<5x128xf32> to vector<1x128xf32>
    %182 = vector.broadcast %181 : vector<1x128xf32> to vector<256x128xf32>
    %183 = arith.mulf %182, %180 : vector<256x128xf32>
    %184 = arith.mulf %180, %180 : vector<256x128xf32>
    %185 = vector.extract_strided_slice %62 {offsets = [4, 0], sizes = [1, 128], strides = [1, 1]} : vector<5x128xf32> to vector<1x128xf32>
    %186 = vector.broadcast %185 : vector<1x128xf32> to vector<256x128xf32>
    %187 = arith.mulf %184, %186 : vector<256x128xf32>
    %188 = math.exp %187 : vector<256x128xf32>
    %189 = arith.mulf %183, %188 : vector<256x128xf32>
    %190 = arith.addf %167, %189 : vector<256x128xf32>
    %c0_57 = arith.constant 0 : index
    %c0_58 = arith.constant 0 : index
    %191 = vector.load %arg8[%c0_57, %c0_58] : memref<256x1xf32, #tpu.memory_space<vmem>>, vector<256x1xf32>
    %cst_59 = arith.constant 0.001953125 : f32
    %192 = vector.broadcast %cst_59 : f32 to vector<256x128xf32>
    %193 = arith.mulf %192, %190 : vector<256x128xf32>
    %194 = vector.broadcast %191 : vector<256x1xf32> to vector<256x128xf32>
    %195 = arith.subf %194, %193 : vector<256x128xf32>
    %c0_60 = arith.constant 0 : index
    %c0_61 = arith.constant 0 : index
    %196 = vector.load %arg13[%c0_60, %c0_61] : memref<256x128xf32, #tpu.memory_space<vmem>>, vector<256x128xf32>
    tpu.vector_store %arg13[%c0_60, %c0_61], %195 {strides = array<i32>} : memref<256x128xf32, #tpu.memory_space<vmem>>, vector<256x128xf32>,
    %c0_i32_62 = arith.constant 0 : i32
    %c27_i32_63 = arith.constant 27 : i32
    %197 = arith.addi %c0_i32_62, %c27_i32_63 : i32
    %c1_i32_64 = arith.constant 1 : i32
    %198 = scf.for %arg14 = %c0_i32_62 to %197 step %c1_i32_64 iter_args(%arg15 = %65) -> (vector<1x128xf32>)  : i32 {
      %c8_i32 = arith.constant 8 : i32
      %199 = arith.muli %arg14, %c8_i32 : i32
      %200 = tpu.assume_multiple %199, 8 : i32
      %201 = arith.index_cast %200 : i32 to index
      %c0_66 = arith.constant 0 : index
      %202 = vector.load %arg13[%201, %c0_66] : memref<256x128xf32, #tpu.memory_space<vmem>>, vector<8x128xf32>
      %cst_67 = arith.constant 0.998046875 : f32
      %203 = vector.broadcast %cst_67 : f32 to vector<1x128xf32>
      %204 = arith.mulf %203, %arg15 : vector<1x128xf32>
      %205 = vector.extract_strided_slice %202 {offsets = [0, 0], sizes = [1, 128], strides = [1, 1]} : vector<8x128xf32> to vector<1x128xf32>
      %206 = arith.addf %204, %205 : vector<1x128xf32>
      %cst_68 = arith.constant 0.998046875 : f32
      %207 = vector.broadcast %cst_68 : f32 to vector<1x128xf32>
      %208 = arith.mulf %207, %206 : vector<1x128xf32>
      %209 = vector.extract_strided_slice %202 {offsets = [1, 0], sizes = [1, 128], strides = [1, 1]} : vector<8x128xf32> to vector<1x128xf32>
      %210 = arith.addf %208, %209 : vector<1x128xf32>
      %cst_69 = arith.constant 0.998046875 : f32
      %211 = vector.broadcast %cst_69 : f32 to vector<1x128xf32>
      %212 = arith.mulf %211, %210 : vector<1x128xf32>
      %213 = vector.extract_strided_slice %202 {offsets = [2, 0], sizes = [1, 128], strides = [1, 1]} : vector<8x128xf32> to vector<1x128xf32>
      %214 = arith.addf %212, %213 : vector<1x128xf32>
      %cst_70 = arith.constant 0.998046875 : f32
      %215 = vector.broadcast %cst_70 : f32 to vector<1x128xf32>
      %216 = arith.mulf %215, %214 : vector<1x128xf32>
      %217 = vector.extract_strided_slice %202 {offsets = [3, 0], sizes = [1, 128], strides = [1, 1]} : vector<8x128xf32> to vector<1x128xf32>
      %218 = arith.addf %216, %217 : vector<1x128xf32>
      %cst_71 = arith.constant 0.998046875 : f32
      %219 = vector.broadcast %cst_71 : f32 to vector<1x128xf32>
      %220 = arith.mulf %219, %218 : vector<1x128xf32>
      %221 = vector.extract_strided_slice %202 {offsets = [4, 0], sizes = [1, 128], strides = [1, 1]} : vector<8x128xf32> to vector<1x128xf32>
      %222 = arith.addf %220, %221 : vector<1x128xf32>
      %cst_72 = arith.constant 0.998046875 : f32
      %223 = vector.broadcast %cst_72 : f32 to vector<1x128xf32>
      %224 = arith.mulf %223, %222 : vector<1x128xf32>
      %225 = vector.extract_strided_slice %202 {offsets = [5, 0], sizes = [1, 128], strides = [1, 1]} : vector<8x128xf32> to vector<1x128xf32>
      %226 = arith.addf %224, %225 : vector<1x128xf32>
      %cst_73 = arith.constant 0.998046875 : f32
      %227 = vector.broadcast %cst_73 : f32 to vector<1x128xf32>
      %228 = arith.mulf %227, %226 : vector<1x128xf32>
      %229 = vector.extract_strided_slice %202 {offsets = [6, 0], sizes = [1, 128], strides = [1, 1]} : vector<8x128xf32> to vector<1x128xf32>
      %230 = arith.addf %228, %229 : vector<1x128xf32>
      %cst_74 = arith.constant 0.998046875 : f32
      %231 = vector.broadcast %cst_74 : f32 to vector<1x128xf32>
      %232 = arith.mulf %231, %230 : vector<1x128xf32>
      %233 = vector.extract_strided_slice %202 {offsets = [7, 0], sizes = [1, 128], strides = [1, 1]} : vector<8x128xf32> to vector<1x128xf32>
      %234 = arith.addf %232, %233 : vector<1x128xf32>
      %235 = tpu.concatenate %arg15, %206, %210, %214, %218, %222, %226, %230 in 0 : vector<1x128xf32>, vector<1x128xf32>, vector<1x128xf32>, vector<1x128xf32>, vector<1x128xf32>, vector<1x128xf32>, vector<1x128xf32>, vector<1x128xf32> -> vector<8x128xf32>
      %236 = arith.index_cast %200 : i32 to index
      %c0_75 = arith.constant 0 : index
      %237 = vector.load %arg10[%236, %c0_75] : memref<256x128xf32, #tpu.memory_space<vmem>>, vector<8x128xf32>
      tpu.vector_store %arg10[%236, %c0_75], %235 {strides = array<i32>} : memref<256x128xf32, #tpu.memory_space<vmem>>, vector<8x128xf32>,
      scf.yield %234 : vector<1x128xf32>
    }
    %c27_i32_65 = arith.constant 27 : i32
    return
  }
}

</mosaic_0001>

<llo_original>
// kernel: ode_generator_forward.1
$region0: #{ode_generator_forward.1}
  #allocation0 [shape = 'u32[]', space=smem, size = 0x4, offset = 0x4, fixed_abs, tag = 'smem constant byte address 0x4 - core index']
  #allocation1 [shape = 'u32[144,128]{1,0:T(1,128)}', space=vmem, size = 0x12000, scoped, tag = 'internal scratch']
  #allocation2 [shape = 'f32[256,128]{1,0:T(8,128)}', space=vmem, size = 0x20000, scoped, tag = 'scratch operand']
  #allocation3 [shape = 'f32[256,128]{1,0:T(8,128)}', space=vmem, size = 0x20000, scoped, tag = 'scratch operand']
  #allocation4 [shape = 'f32[256,128]{1,0:T(8,128)}', space=vmem, size = 0x20000, scoped, tag = 'scratch operand']
  %s0 = inlined_call_operand.vmem [shape: f32[50,128], index: 0, kind: input, shape index: {}]
  %s1 = inlined_call_operand.vmem [shape: f32[25,50], index: 1, kind: input, shape index: {}]
  %s2 = inlined_call_operand.vmem [shape: f32[25,1], index: 2, kind: input, shape index: {}]
  %s3 = inlined_call_operand.vmem [shape: f32[25,1], index: 3, kind: input, shape index: {}]
  %s4 = inlined_call_operand.vmem [shape: f32[25,1], index: 4, kind: input, shape index: {}]
  %s5 = inlined_call_operand.vmem [shape: f32[15,25], index: 5, kind: input, shape index: {}]
  %s6 = inlined_call_operand.vmem [shape: f32[15,1], index: 6, kind: input, shape index: {}]
  %s7 = inlined_call_operand.vmem [shape: f32[15,1], index: 7, kind: input, shape index: {}]
  %s8 = inlined_call_operand.vmem [shape: f32[256,1], index: 8, kind: input, shape index: {}]
  %s9 = inlined_call_operand.vmem [shape: f32[3,128], index: 9, kind: input, shape index: {}]
  %s10 = inlined_call_operand.vmem [shape: f32[256,128], index: 10, kind: output, shape index: {}]
  %s11 = sld [smem:[#allocation0]]
  $region64: #{ode_generator_forward.1} parent=0
    _
  %s13 = ssub.s32 1, %s11
  %s14 = scalar_select 0, %s13, %s11
  // Predicated region
  $region2: #{ode_generator_forward.1} parent=0 // pred_check
    _
  $region3: #{ode_generator_forward.1} parent=0 // pred_check_branch
    %16 = sbr.rel (0) target = $region5
  $region4: #{ode_generator_forward.1} parent=0 // pred_region
    _
  $region5: #{ode_generator_forward.1} parent=0 // pred_fallthru
    _
  // Predicated region
  $region6: #{ode_generator_forward.1} parent=0 // pred_check
    _
  $region7: #{ode_generator_forward.1} parent=0 // pred_check_branch
    %18 = sbr.rel (0) target = $region9
  $region8: #{ode_generator_forward.1} parent=0 // pred_region
    _
  $region9: #{ode_generator_forward.1} parent=0 // pred_fallthru
    _
  // Predicated region
  $region10: #{ode_generator_forward.1} parent=0 // pred_check
    _
  $region11: #{ode_generator_forward.1} parent=0 // pred_check_branch
    %20 = sbr.rel (0) target = $region13
  $region12: #{ode_generator_forward.1} parent=0 // pred_region
    _
  $region13: #{ode_generator_forward.1} parent=0 // pred_fallthru
    _
  // Predicated region
  $region14: #{ode_generator_forward.1} parent=0 // pred_check
    _
  $region15: #{ode_generator_forward.1} parent=0 // pred_check_branch
    %22 = sbr.rel (0) target = $region17
  $region16: #{ode_generator_forward.1} parent=0 // pred_region
    _
  $region17: #{ode_generator_forward.1} parent=0 // pred_fallthru
    _
  // Predicated region
  $region18: #{ode_generator_forward.1} parent=0 // pred_check
    _
  $region19: #{ode_generator_forward.1} parent=0 // pred_check_branch
    %24 = sbr.rel (0) target = $region21
  $region20: #{ode_generator_forward.1} parent=0 // pred_region
    _
  $region21: #{ode_generator_forward.1} parent=0 // pred_fallthru
    _
  // Predicated region
  $region22: #{ode_generator_forward.1} parent=0 // pred_check
    _
  $region23: #{ode_generator_forward.1} parent=0 // pred_check_branch
    %26 = sbr.rel (0) target = $region25
  $region24: #{ode_generator_forward.1} parent=0 // pred_region
    _
  $region25: #{ode_generator_forward.1} parent=0 // pred_fallthru
    _
  // Predicated region
  $region26: #{ode_generator_forward.1} parent=0 // pred_check
    _
  $region27: #{ode_generator_forward.1} parent=0 // pred_check_branch
    %28 = sbr.rel (0) target = $region29
  $region28: #{ode_generator_forward.1} parent=0 // pred_region
    _
  $region29: #{ode_generator_forward.1} parent=0 // pred_fallthru
    _
  // Predicated region
  $region30: #{ode_generator_forward.1} parent=0 // pred_check
    _
  $region31: #{ode_generator_forward.1} parent=0 // pred_check_branch
    %30 = sbr.rel (0) target = $region33
  $region32: #{ode_generator_forward.1} parent=0 // pred_region
    _
  $region33: #{ode_generator_forward.1} parent=0 // pred_fallthru
    _
  // Predicated region
  $region34: #{ode_generator_forward.1} parent=0 // pred_check
    _
  $region35: #{ode_generator_forward.1} parent=0 // pred_check_branch
    %32 = sbr.rel (0) target = $region37
  $region36: #{ode_generator_forward.1} parent=0 // pred_region
    _
  $region37: #{ode_generator_forward.1} parent=0 // pred_fallthru
    _
  // Predicated region
  $region38: #{ode_generator_forward.1} parent=0 // pred_check
    _
  $region39: #{ode_generator_forward.1} parent=0 // pred_check_branch
    %34 = sbr.rel (0) target = $region41
  $region40: #{ode_generator_forward.1} parent=0 // pred_region
    _
  $region41: #{ode_generator_forward.1} parent=0 // pred_fallthru
    _
  %v35 = vld [vmem:[%s0] sm:$0xff]
  %v36 = vld [vmem:[%s0 + $0x8] sm:$0xff]
  %v37 = vld [vmem:[%s0 + $0x10] sm:$0xff]
  %v38 = vld [vmem:[%s0 + $0x18] sm:$0xff]
  %v39 = vld [vmem:[%s0 + $0x20] sm:$0xff]
  %v40 = vld [vmem:[%s0 + $0x28] sm:$0xff]
  %v41 = vld [vmem:[%s0 + $0x30] sm:$0x3]
  %v42 = vld [vmem:[%s1] sm:$0xff]
  %v43 = vld [vmem:[%s1 + $0x8] sm:$0xff]
  %v44 = vld [vmem:[%s1 + $0x10] sm:$0xff]
  %v45 = vld [vmem:[%s1 + $0x18] sm:$0x1]
  %v46 = vld [vmem:[%s2] sm:$0xff]
  %v47 = vld [vmem:[%s2 + $0x8] sm:$0xff]
  %v48 = vld [vmem:[%s2 + $0x10] sm:$0xff]
  %v49 = vld [vmem:[%s2 + $0x18] sm:$0x1]
  %51 = vset.pattern.permute.xlu0 0
  %52 = vperm.xlu0 %51, %v46
  %v53 = vpop.permute.xlu0 %52
  %56 = vset.pattern.permute.xlu0 0
  %57 = vperm.xlu0 %56, %v47
  %v58 = vpop.permute.xlu0 %57
  %61 = vset.pattern.permute.xlu0 0
  %62 = vperm.xlu0 %61, %v48
  %v63 = vpop.permute.xlu0 %62
  %66 = vset.pattern.permute.xlu0 0
  %67 = vperm.xlu0 %66, %v49
  %v68 = vpop.permute.xlu0 %67
  %vm70 = vcmask 408576
  %v72 = vsel %vm70, %v42, 0
  %v75 = vsel %vm70, %v43, 0
  %v78 = vsel %vm70, %v44, 0
  %v81 = vsel %vm70, %v45, 0
  %vm83 = vcmask 1041408
  %v85 = vsel %vm83, %v41, 0
  %87 = vmatprep.subr.mxu0 0.0
  %88 = vmatpush1.msra.mxu0 %v35
  %89 = vmatprep.subr.mxu0 0.0
  %90 = vmatpush1.msra.mxu0 %v36
  %91 = vmatprep.subr.mxu0 0.0
  %92 = vmatpush1.msra.mxu0 %v37
  %93 = vmatprep.subr.mxu0 0.0
  %94 = vmatpush1.msra.mxu0 %v38
  %95 = vmatprep.subr.mxu0 0.0
  %96 = vmatpush1.msra.mxu0 %v39
  %97 = vmatprep.subr.mxu0 0.0
  %98 = vmatpush1.msra.mxu0 %v40
  %99 = vmatprep.subr.mxu0 0.0
  %100 = vmatpush1.msra.mxu0 %v85
  %101 = vmatprep.subr.mxu0 0.0
  %102 = vmatpush1.msra.mxu0 0.0
  %103 = vmatprep.subr.mxu0 0.0
  %104 = vmatpush1.msra.mxu0 0.0
  %105 = vmatprep.subr.mxu0 0.0
  %106 = vmatpush1.msra.mxu0 0.0
  %107 = vmatprep.subr.mxu0 0.0
  %108 = vmatpush1.msra.mxu0 0.0
  %109 = vmatprep.subr.mxu0 0.0
  %110 = vmatpush1.msra.mxu0 0.0
  %111 = vmatprep.subr.mxu0 0.0
  %112 = vmatpush1.msra.mxu0 0.0
  %113 = vmatprep.subr.mxu0 0.0
  %114 = vmatpush1.msra.mxu0 0.0
  %115 = vmatprep.subr.mxu0 0.0
  %116 = vmatpush1.msra.mxu0 0.0
  %117 = vmatprep.subr.mxu0 0.0
  %118 = vmatpush1.msra.mxu0 0.0
  %119 = vmatprep.subr.mxu0 0.0
  %120 = vmatpush1.msra.mxu0 0.0
  %121 = vmatprep.subr.mxu0 0.0
  %122 = vmatpush1.msra.mxu0 0.0
  %123 = vmatprep.subr.mxu0 0.0
  %124 = vmatpush1.msra.mxu0 0.0
  %125 = vmatprep.subr.mxu0 0.0
  %126 = vmatpush1.msra.mxu0 0.0
  %127 = vmatprep.subr.mxu0 0.0
  %128 = vmatpush1.msra.mxu0 0.0
  %129 = vmatprep.subr.mxu0 0.0
  %130 = vmatpush1.msra.mxu0 0.0
  %131 = vmatprep.subr.mxu0 0.0
  %132 = vmatpush1.msra.mxu0 0.0
  %133 = vmatprep.subr.mxu0 0.0
  %134 = vmatpush1.msra.mxu0 0.0
  %135 = vmatprep.subr.mxu0 0.0
  %136 = vmatpush1.msra.mxu0 0.0
  %137 = vmatprep.subr.mxu0 0.0
  %138 = vmatpush1.msra.mxu0 0.0
  %139 = vmatprep.subr.mxu0 0.0
  %140 = vmatpush1.msra.mxu0 0.0
  %141 = vmatprep.subr.mxu0 0.0
  %142 = vmatpush1.msra.mxu0 0.0
  %143 = vmatprep.subr.mxu0 0.0
  %144 = vmatpush1.msra.mxu0 0.0
  %145 = vmatprep.subr.mxu0 0.0
  %146 = vmatpush1.msra.mxu0 0.0
  %147 = vmatprep.subr.mxu0 0.0
  %148 = vmatpush1.msra.mxu0 0.0
  %149 = vmatprep.subr.mxu0 0.0
  %150 = vmatpush1.msra.mxu0 0.0
  %151 = vmatprep.mubr.f32.mxu0 0.0
  %152 = vmatmul.mubr.f32.gmra.mrb[0].mxu0 %v72
  %v153 = vpop.f32.mrb[0].mxu0
  %v154 = vadd.f32 %v53, %v153
  %v155 = vpop.f32.mrb[0].mxu0
  %156 = vmatprep.mubr.f32.mxu0 0.0
  %157 = vmatmul.mubr.f32.gmra.mrb[0].mxu0 %v75
  %v158 = vpop.f32.mrb[0].mxu0
  %v159 = vadd.f32 %v58, %v158
  %v160 = vpop.f32.mrb[0].mxu0
  %161 = vmatprep.mubr.f32.mxu0 0.0
  %162 = vmatmul.mubr.f32.gmra.mrb[0].mxu0 %v78
  %v163 = vpop.f32.mrb[0].mxu0
  %v164 = vadd.f32 %v63, %v163
  %v165 = vpop.f32.mrb[0].mxu0
  %166 = vmatprep.mubr.f32.mxu0 0.0
  %167 = vmatmul.mubr.f32.gmra.mrb[0].mxu0 %v81
  %v168 = vpop.f32.mrb[0].mxu0
  %v169 = vadd.f32 %v68, %v168
  %v170 = vpop.f32.mrb[0].mxu0
  %171 = vdwg.mxu0
  %v172 = vlaneseq
  %v173 = vand.u32 %v172, 127
  %vm174 = vcmp.lt.s32.totalorder %v173, 2
  %v175 = vsel %vm174, 1, 0
  %v176 = vcvt.s32.f32 %v175
  %v177 = vmul.f32 %v154, %v176
  %v178 = vmul.f32 %v159, %v176
  %v179 = vmul.f32 %v164, %v176
  %v180 = vmul.f32 %v169, %v176
  %181 = vadd.xlane.f32.xlu0 %v177
  %v182 = vpop.xlane.xlu0 %181
  %183 = vadd.xlane.f32.xlu0 %v178
  %v184 = vpop.xlane.xlu0 %183
  %185 = vadd.xlane.f32.xlu0 %v179
  %v186 = vpop.xlane.xlu0 %185
  %vm187 = vcmask 1040384
  %v188 = vsel %vm187, %v180, 0.0
  %189 = vadd.xlane.f32.xlu0 %v188
  %v190 = vpop.xlane.xlu0 %189
  %v191 = vmul.f32 %v182, 0.5
  %v192 = vmul.f32 %v184, 0.5
  %v193 = vmul.f32 %v186, 0.5
  %v194 = vmul.f32 %v190, 0.5
  %v195 = vsub.f32 %v154, %v191
  %v196 = vsub.f32 %v159, %v192
  %v197 = vsub.f32 %v164, %v193
  %v198 = vsub.f32 %v169, %v194
  %v199 = vmul.f32 %v195, %v176
  %v200 = vmul.f32 %v196, %v176
  %v201 = vmul.f32 %v197, %v176
  %v202 = vmul.f32 %v198, %v176
  %v203 = vmul.f32 %v199, %v199
  %v204 = vmul.f32 %v200, %v200
  %v205 = vmul.f32 %v201, %v201
  %v206 = vmul.f32 %v202, %v202
  %207 = vadd.xlane.f32.xlu0 %v203
  %v208 = vpop.xlane.xlu0 %207
  %209 = vadd.xlane.f32.xlu0 %v204
  %v210 = vpop.xlane.xlu0 %209
  %211 = vadd.xlane.f32.xlu0 %v205
  %v212 = vpop.xlane.xlu0 %211
  %v213 = vsel %vm187, %v206, 0.0
  %214 = vadd.xlane.f32.xlu0 %v213
  %v215 = vpop.xlane.xlu0 %214
  %v216 = vmul.f32 %v208, 0.5
  %v217 = vmul.f32 %v210, 0.5
  %v218 = vmul.f32 %v212, 0.5
  %v219 = vmul.f32 %v215, 0.5
  %v220 = vadd.f32 %v216, 1e-05
  %v221 = vadd.f32 %v217, 1e-05
  %v222 = vadd.f32 %v218, 1e-05
  %v223 = vadd.f32 %v219, 1e-05
  %v224 = vrsqrt.pop %v220
  %v225 = vrsqrt.pop %v221
  %v226 = vrsqrt.pop %v222
  %v227 = vrsqrt.pop %v223
  %v228 = vmul.f32 %v195, %v224
  %v229 = vmul.f32 %v196, %v225
  %v230 = vmul.f32 %v197, %v226
  %v231 = vmul.f32 %v198, %v227
  %v232 = vld [vmem:[%s3] sm:$0xff]
  %v233 = vld [vmem:[%s3 + $0x8] sm:$0xff]
  %v234 = vld [vmem:[%s3 + $0x10] sm:$0xff]
  %v235 = vld [vmem:[%s3 + $0x18] sm:$0x1]
  %237 = vset.pattern.permute.xlu0 0
  %238 = vperm.xlu0 %237, %v232
  %v239 = vpop.permute.xlu0 %238
  %242 = vset.pattern.permute.xlu0 0
  %243 = vperm.xlu0 %242, %v233
  %v244 = vpop.permute.xlu0 %243
  %247 = vset.pattern.permute.xlu0 0
  %248 = vperm.xlu0 %247, %v234
  %v249 = vpop.permute.xlu0 %248
  %252 = vset.pattern.permute.xlu0 0
  %253 = vperm.xlu0 %252, %v235
  %v254 = vpop.permute.xlu0 %253
  %v256 = vmul.f32 %v228, %v239
  %v257 = vmul.f32 %v229, %v244
  %v258 = vmul.f32 %v230, %v249
  %v259 = vmul.f32 %v231, %v254
  %v260 = vld [vmem:[%s4] sm:$0xff]
  %v261 = vld [vmem:[%s4 + $0x8] sm:$0xff]
  %v262 = vld [vmem:[%s4 + $0x10] sm:$0xff]
  %v263 = vld [vmem:[%s4 + $0x18] sm:$0x1]
  %265 = vset.pattern.permute.xlu0 0
  %266 = vperm.xlu0 %265, %v260
  %v267 = vpop.permute.xlu0 %266
  %270 = vset.pattern.permute.xlu0 0
  %271 = vperm.xlu0 %270, %v261
  %v272 = vpop.permute.xlu0 %271
  %275 = vset.pattern.permute.xlu0 0
  %276 = vperm.xlu0 %275, %v262
  %v277 = vpop.permute.xlu0 %276
  %280 = vset.pattern.permute.xlu0 0
  %281 = vperm.xlu0 %280, %v263
  %v282 = vpop.permute.xlu0 %281
  %v284 = vadd.f32 %v256, %v267
  %v285 = vadd.f32 %v257, %v272
  %v286 = vadd.f32 %v258, %v277
  %v287 = vadd.f32 %v259, %v282
  %vm288 = vcmp.ge.f32.partialorder %v284, 0.0
  %vm289 = vcmp.ge.f32.partialorder %v285, 0.0
  %vm290 = vcmp.ge.f32.partialorder %v286, 0.0
  %vm291 = vcmp.ge.f32.partialorder %v287, 0.0
  %v292 = vmul.f32 %v284, 0.01
  %v293 = vmul.f32 %v285, 0.01
  %v294 = vmul.f32 %v286, 0.01
  %v295 = vmul.f32 %v287, 0.01
  %v296 = vsel %vm288, %v284, %v292
  %v297 = vsel %vm289, %v285, %v293
  %v298 = vsel %vm290, %v286, %v294
  %v299 = vsel %vm291, %v287, %v295
  %v300 = vld [vmem:[%s5] sm:$0xff]
  %v301 = vld [vmem:[%s5 + $0x8] sm:$0x7f]
  %v302 = vld [vmem:[%s6] sm:$0xff]
  %v303 = vld [vmem:[%s6 + $0x8] sm:$0x7f]
  %305 = vset.pattern.permute.xlu0 0
  %306 = vperm.xlu0 %305, %v302
  %v307 = vpop.permute.xlu0 %306
  %310 = vset.pattern.permute.xlu0 0
  %311 = vperm.xlu0 %310, %v303
  %v312 = vpop.permute.xlu0 %311
  %vm314 = vcmask 203776
  %v316 = vsel %vm314, %v300, 0
  %v319 = vsel %vm314, %v301, 0
  %v322 = vsel %vm187, %v299, 0
  %324 = vmatprep.subr.mxu0 0.0
  %325 = vmatpush1.msra.mxu0 %v296
  %326 = vmatprep.subr.mxu0 0.0
  %327 = vmatpush1.msra.mxu0 %v297
  %328 = vmatprep.subr.mxu0 0.0
  %329 = vmatpush1.msra.mxu0 %v298
  %330 = vmatprep.subr.mxu0 0.0
  %331 = vmatpush1.msra.mxu0 %v322
  %332 = vmatprep.subr.mxu0 0.0
  %333 = vmatpush1.msra.mxu0 0.0
  %334 = vmatprep.subr.mxu0 0.0
  %335 = vmatpush1.msra.mxu0 0.0
  %336 = vmatprep.subr.mxu0 0.0
  %337 = vmatpush1.msra.mxu0 0.0
  %338 = vmatprep.subr.mxu0 0.0
  %339 = vmatpush1.msra.mxu0 0.0
  %340 = vmatprep.subr.mxu0 0.0
  %341 = vmatpush1.msra.mxu0 0.0
  %342 = vmatprep.subr.mxu0 0.0
  %343 = vmatpush1.msra.mxu0 0.0
  %344 = vmatprep.subr.mxu0 0.0
  %345 = vmatpush1.msra.mxu0 0.0
  %346 = vmatprep.subr.mxu0 0.0
  %347 = vmatpush1.msra.mxu0 0.0
  %348 = vmatprep.subr.mxu0 0.0
  %349 = vmatpush1.msra.mxu0 0.0
  %350 = vmatprep.subr.mxu0 0.0
  %351 = vmatpush1.msra.mxu0 0.0
  %352 = vmatprep.subr.mxu0 0.0
  %353 = vmatpush1.msra.mxu0 0.0
  %354 = vmatprep.subr.mxu0 0.0
  %355 = vmatpush1.msra.mxu0 0.0
  %356 = vmatprep.subr.mxu0 0.0
  %357 = vmatpush1.msra.mxu0 0.0
  %358 = vmatprep.subr.mxu0 0.0
  %359 = vmatpush1.msra.mxu0 0.0
  %360 = vmatprep.subr.mxu0 0.0
  %361 = vmatpush1.msra.mxu0 0.0
  %362 = vmatprep.subr.mxu0 0.0
  %363 = vmatpush1.msra.mxu0 0.0
  %364 = vmatprep.subr.mxu0 0.0
  %365 = vmatpush1.msra.mxu0 0.0
  %366 = vmatprep.subr.mxu0 0.0
  %367 = vmatpush1.msra.mxu0 0.0
  %368 = vmatprep.subr.mxu0 0.0
  %369 = vmatpush1.msra.mxu0 0.0
  %370 = vmatprep.subr.mxu0 0.0
  %371 = vmatpush1.msra.mxu0 0.0
  %372 = vmatprep.subr.mxu0 0.0
  %373 = vmatpush1.msra.mxu0 0.0
  %374 = vmatprep.subr.mxu0 0.0
  %375 = vmatpush1.msra.mxu0 0.0
  %376 = vmatprep.subr.mxu0 0.0
  %377 = vmatpush1.msra.mxu0 0.0
  %378 = vmatprep.subr.mxu0 0.0
  %379 = vmatpush1.msra.mxu0 0.0
  %380 = vmatprep.subr.mxu0 0.0
  %381 = vmatpush1.msra.mxu0 0.0
  %382 = vmatprep.subr.mxu0 0.0
  %383 = vmatpush1.msra.mxu0 0.0
  %384 = vmatprep.subr.mxu0 0.0
  %385 = vmatpush1.msra.mxu0 0.0
  %386 = vmatprep.subr.mxu0 0.0
  %387 = vmatpush1.msra.mxu0 0.0
  %388 = vmatprep.mubr.f32.mxu0 0.0
  %389 = vmatmul.mubr.f32.gmra.mrb[0].mxu0 %v316
  %v390 = vpop.f32.mrb[0].mxu0
  %v391 = vadd.f32 %v307, %v390
  %v392 = vpop.f32.mrb[0].mxu0
  %393 = vmatprep.mubr.f32.mxu0 0.0
  %394 = vmatmul.mubr.f32.gmra.mrb[0].mxu0 %v319
  %v395 = vpop.f32.mrb[0].mxu0
  %v396 = vadd.f32 %v312, %v395
  %v397 = vpop.f32.mrb[0].mxu0
  %398 = vdwg.mxu0
  %v399 = vxor.u32 %v391, 2147483648
  %v400 = vxor.u32 %v396, 2147483648
  %v401 = vmul.f32 %v399, 1.442695
  %v402 = vpow.pop %v401
  %v403 = vmul.f32 %v400, 1.442695
  %v404 = vpow.pop %v403
  %v405 = vadd.f32 %v402, 1.0
  %v406 = vadd.f32 %v404, 1.0
  %v407 = vrcp.pop %v405
  %v408 = vmul.f32 1.0, %v407
  %v409 = vrcp.pop %v406
  %v410 = vmul.f32 1.0, %v409
  %v411 = vmul.f32 %v408, 0.1
  %v412 = vmul.f32 %v410, 0.1
  %v413 = vld [vmem:[%s7] sm:$0xff]
  %v414 = vld [vmem:[%s7 + $0x8] sm:$0x7f]
  %416 = vset.pattern.permute.xlu0 0
  %417 = vperm.xlu0 %416, %v413
  %v418 = vpop.permute.xlu0 %417
  %421 = vset.pattern.permute.xlu0 0
  %422 = vperm.xlu0 %421, %v414
  %v423 = vpop.permute.xlu0 %422
  %v425 = vadd.f32 %v411, %v418
  %v426 = vadd.f32 %v412, %v423
  %v427 = vmul.f32 %v425, %v425
  %v428 = vmul.f32 %v426, %v426
  %v429 = vrcp.pop %v427
  %v430 = vmul.f32 -0.5, %v429
  %v431 = vrcp.pop %v428
  %v432 = vmul.f32 -0.5, %v431
  %v433 = vld [vmem:[%s9] sm:$0x1]
  %v434 = vld [vmem:[%s9 + $0x1] sm:$0x1]
  %v435 = vld [vmem:[%s9 + $0x2] sm:$0x1]
  %436 = vst [vmem:[#allocation2 + $0xd8] sm:$0xff] 0.0
  %437 = vst [vmem:[#allocation2 + $0xe0] sm:$0xff] 0.0
  %438 = vst [vmem:[#allocation2 + $0xe8] sm:$0xff] 0.0
  %439 = vst [vmem:[#allocation2 + $0xf0] sm:$0xff] 0.0
  %440 = vst [vmem:[#allocation2 + $0xf8] sm:$0xff] 0.0
  %441 = vst [vmem:[#allocation3 + $0xd8] sm:$0xff] 0.0
  %442 = vst [vmem:[#allocation3 + $0xe0] sm:$0xff] 0.0
  %443 = vst [vmem:[#allocation3 + $0xe8] sm:$0xff] 0.0
  %444 = vst [vmem:[#allocation3 + $0xf0] sm:$0xff] 0.0
  %445 = vst [vmem:[#allocation3 + $0xf8] sm:$0xff] 0.0
  %446 = vst [vmem:[%s10 + $0xd8] sm:$0xff] 0.0
  %447 = vst [vmem:[%s10 + $0xe0] sm:$0xff] 0.0
  %448 = vst [vmem:[%s10 + $0xe8] sm:$0xff] 0.0
  %449 = vst [vmem:[%s10 + $0xf0] sm:$0xff] 0.0
  %450 = vst [vmem:[%s10 + $0xf8] sm:$0xff] 0.0
  loop: start=0, step=1, limit=27
  $region42: #{ode_generator_forward.1} parent=0 // loop_pre_header
    _
  $region43: #{ode_generator_forward.1} parent=0 // loop_header
    %s452 = sphi 0, %s456
    %p453 = scmp.ge.s32.totalorder %s452, 27
    %v457 = vphi %v433, %v622
    %v458 = vphi %v434, %v627
  $region44: #{ode_generator_forward.1} parent=0 // loop_header_branch
    %455 = sbr.rel (%p453) target = $region48
  $region45: #{ode_generator_forward.1} parent=0 // loop_body
    %s459 = smul.u32 %s452, 8
    %v460 = vmul.f32 %v457, %v457
    %v461 = vmul.f32 %v458, %v458
    %v462 = vadd.f32 %v460, %v461
    %v463 = vrsqrt.pop %v462
    %v464 = vmul.f32 %v462, %v463
    %vm465 = vcmp.eq.f32.partialorder %v462, inf
    %v466 = vsel %vm465, %v462, %v464
    %vm467 = vcmp.eq.f32.partialorder %v462, 0.0
    %v468 = vand.u32 %v462, 2147483648
    %v469 = vsel %vm467, %v468, %v466
    %v470 = vsub.f32 1.0, %v469
    %v471 = vmul.f32 %v470, %v457
    %v472 = vmul.f32 %v458, 6.2831855
    %v473 = vsub.f32 %v471, %v472
    %v474 = vmul.f32 %v473, 0.001953125
    %v475 = vadd.f32 %v457, %v474
    %v476 = vmul.f32 %v470, %v458
    %v477 = vmul.f32 %v457, 6.2831855
    %v478 = vadd.f32 %v476, %v477
    %v479 = vmul.f32 %v478, 0.001953125
    %v480 = vadd.f32 %v458, %v479
    %v481 = vmul.f32 %v475, %v475
    %v482 = vmul.f32 %v480, %v480
    %v483 = vadd.f32 %v481, %v482
    %v484 = vrsqrt.pop %v483
    %v485 = vmul.f32 %v483, %v484
    %vm486 = vcmp.eq.f32.partialorder %v483, inf
    %v487 = vsel %vm486, %v483, %v485
    %vm488 = vcmp.eq.f32.partialorder %v483, 0.0
    %v489 = vand.u32 %v483, 2147483648
    %v490 = vsel %vm488, %v489, %v487
    %v491 = vsub.f32 1.0, %v490
    %v492 = vmul.f32 %v491, %v475
    %v493 = vmul.f32 %v480, 6.2831855
    %v494 = vsub.f32 %v492, %v493
    %v495 = vmul.f32 %v494, 0.001953125
    %v496 = vadd.f32 %v475, %v495
    %v497 = vmul.f32 %v491, %v480
    %v498 = vmul.f32 %v475, 6.2831855
    %v499 = vadd.f32 %v497, %v498
    %v500 = vmul.f32 %v499, 0.001953125
    %v501 = vadd.f32 %v480, %v500
    %v502 = vmul.f32 %v496, %v496
    %v503 = vmul.f32 %v501, %v501
    %v504 = vadd.f32 %v502, %v503
    %v505 = vrsqrt.pop %v504
    %v506 = vmul.f32 %v504, %v505
    %vm507 = vcmp.eq.f32.partialorder %v504, inf
    %v508 = vsel %vm507, %v504, %v506
    %vm509 = vcmp.eq.f32.partialorder %v504, 0.0
    %v510 = vand.u32 %v504, 2147483648
    %v511 = vsel %vm509, %v510, %v508
    %v512 = vsub.f32 1.0, %v511
    %v513 = vmul.f32 %v512, %v496
    %v514 = vmul.f32 %v501, 6.2831855
    %v515 = vsub.f32 %v513, %v514
    %v516 = vmul.f32 %v515, 0.001953125
    %v517 = vadd.f32 %v496, %v516
    %v518 = vmul.f32 %v512, %v501
    %v519 = vmul.f32 %v496, 6.2831855
    %v520 = vadd.f32 %v518, %v519
    %v521 = vmul.f32 %v520, 0.001953125
    %v522 = vadd.f32 %v501, %v521
    %v523 = vmul.f32 %v517, %v517
    %v524 = vmul.f32 %v522, %v522
    %v525 = vadd.f32 %v523, %v524
    %v526 = vrsqrt.pop %v525
    %v527 = vmul.f32 %v525, %v526
    %vm528 = vcmp.eq.f32.partialorder %v525, inf
    %v529 = vsel %vm528, %v525, %v527
    %vm530 = vcmp.eq.f32.partialorder %v525, 0.0
    %v531 = vand.u32 %v525, 2147483648
    %v532 = vsel %vm530, %v531, %v529
    %v533 = vsub.f32 1.0, %v532
    %v534 = vmul.f32 %v533, %v517
    %v535 = vmul.f32 %v522, 6.2831855
    %v536 = vsub.f32 %v534, %v535
    %v537 = vmul.f32 %v536, 0.001953125
    %v538 = vadd.f32 %v517, %v537
    %v539 = vmul.f32 %v533, %v522
    %v540 = vmul.f32 %v517, 6.2831855
    %v541 = vadd.f32 %v539, %v540
    %v542 = vmul.f32 %v541, 0.001953125
    %v543 = vadd.f32 %v522, %v542
    %v544 = vmul.f32 %v538, %v538
    %v545 = vmul.f32 %v543, %v543
    %v546 = vadd.f32 %v544, %v545
    %v547 = vrsqrt.pop %v546
    %v548 = vmul.f32 %v546, %v547
    %vm549 = vcmp.eq.f32.partialorder %v546, inf
    %v550 = vsel %vm549, %v546, %v548
    %vm551 = vcmp.eq.f32.partialorder %v546, 0.0
    %v552 = vand.u32 %v546, 2147483648
    %v553 = vsel %vm551, %v552, %v550
    %v554 = vsub.f32 1.0, %v553
    %v555 = vmul.f32 %v554, %v538
    %v556 = vmul.f32 %v543, 6.2831855
    %v557 = vsub.f32 %v555, %v556
    %v558 = vmul.f32 %v557, 0.001953125
    %v559 = vadd.f32 %v538, %v558
    %v560 = vmul.f32 %v554, %v543
    %v561 = vmul.f32 %v538, 6.2831855
    %v562 = vadd.f32 %v560, %v561
    %v563 = vmul.f32 %v562, 0.001953125
    %v564 = vadd.f32 %v543, %v563
    %v565 = vmul.f32 %v559, %v559
    %v566 = vmul.f32 %v564, %v564
    %v567 = vadd.f32 %v565, %v566
    %v568 = vrsqrt.pop %v567
    %v569 = vmul.f32 %v567, %v568
    %vm570 = vcmp.eq.f32.partialorder %v567, inf
    %v571 = vsel %vm570, %v567, %v569
    %vm572 = vcmp.eq.f32.partialorder %v567, 0.0
    %v573 = vand.u32 %v567, 2147483648
    %v574 = vsel %vm572, %v573, %v571
    %v575 = vsub.f32 1.0, %v574
    %v576 = vmul.f32 %v575, %v559
    %v577 = vmul.f32 %v564, 6.2831855
    %v578 = vsub.f32 %v576, %v577
    %v579 = vmul.f32 %v578, 0.001953125
    %v580 = vadd.f32 %v559, %v579
    %v581 = vmul.f32 %v575, %v564
    %v582 = vmul.f32 %v559, 6.2831855
    %v583 = vadd.f32 %v581, %v582
    %v584 = vmul.f32 %v583, 0.001953125
    %v585 = vadd.f32 %v564, %v584
    %v586 = vmul.f32 %v580, %v580
    %v587 = vmul.f32 %v585, %v585
    %v588 = vadd.f32 %v586, %v587
    %v589 = vrsqrt.pop %v588
    %v590 = vmul.f32 %v588, %v589
    %vm591 = vcmp.eq.f32.partialorder %v588, inf
    %v592 = vsel %vm591, %v588, %v590
    %vm593 = vcmp.eq.f32.partialorder %v588, 0.0
    %v594 = vand.u32 %v588, 2147483648
    %v595 = vsel %vm593, %v594, %v592
    %v596 = vsub.f32 1.0, %v595
    %v597 = vmul.f32 %v596, %v580
    %v598 = vmul.f32 %v585, 6.2831855
    %v599 = vsub.f32 %v597, %v598
    %v600 = vmul.f32 %v599, 0.001953125
    %v601 = vadd.f32 %v580, %v600
    %v602 = vmul.f32 %v596, %v585
    %v603 = vmul.f32 %v580, 6.2831855
    %v604 = vadd.f32 %v602, %v603
    %v605 = vmul.f32 %v604, 0.001953125
    %v606 = vadd.f32 %v585, %v605
    %v607 = vmul.f32 %v601, %v601
    %v608 = vmul.f32 %v606, %v606
    %v609 = vadd.f32 %v607, %v608
    %v610 = vrsqrt.pop %v609
    %v611 = vmul.f32 %v609, %v610
    %vm612 = vcmp.eq.f32.partialorder %v609, inf
    %v613 = vsel %vm612, %v609, %v611
    %vm614 = vcmp.eq.f32.partialorder %v609, 0.0
    %v615 = vand.u32 %v609, 2147483648
    %v616 = vsel %vm614, %v615, %v613
    %v617 = vsub.f32 1.0, %v616
    %v618 = vmul.f32 %v617, %v601
    %v619 = vmul.f32 %v606, 6.2831855
    %v620 = vsub.f32 %v618, %v619
    %v621 = vmul.f32 %v620, 0.001953125
    %v622 = vadd.f32 %v601, %v621
    %v623 = vmul.f32 %v617, %v606
    %v624 = vmul.f32 %v601, 6.2831855
    %v625 = vadd.f32 %v623, %v624
    %v626 = vmul.f32 %v625, 0.001953125
    %v627 = vadd.f32 %v606, %v626
    %v629 = vrot.slane %v475, 7
    %v632 = vrot.slane %v496, 6
    %v635 = vrot.slane %v517, 5
    %v638 = vrot.slane %v538, 4
    %v641 = vrot.slane %v559, 3
    %v644 = vrot.slane %v580, 2
    %v647 = vrot.slane %v601, 1
    %v649 = vsel %vm187, %v457, %v629
    %v650 = vsel %vm83, %v649, %v632
    %vm651 = vcmask 1042432
    %v652 = vsel %vm651, %v650, %v635
    %vm653 = vcmask 1043456
    %v654 = vsel %vm653, %v652, %v638
    %vm655 = vcmask 1044480
    %v656 = vsel %vm655, %v654, %v641
    %vm657 = vcmask 1045504
    %v658 = vsel %vm657, %v656, %v644
    %vm659 = vcmask 1046528
    %v660 = vsel %vm659, %v658, %v647
    %s661 = scalar_lea.vmem [#allocation2], %s459
    %662 = vst [vmem:[%s661] sm:$0xff] %v660
    %v664 = vrot.slane %v480, 7
    %v667 = vrot.slane %v501, 6
    %v670 = vrot.slane %v522, 5
    %v673 = vrot.slane %v543, 4
    %v676 = vrot.slane %v564, 3
    %v679 = vrot.slane %v585, 2
    %v682 = vrot.slane %v606, 1
    %v684 = vsel %vm187, %v458, %v664
    %v685 = vsel %vm83, %v684, %v667
    %v686 = vsel %vm651, %v685, %v670
    %v687 = vsel %vm653, %v686, %v673
    %v688 = vsel %vm655, %v687, %v676
    %v689 = vsel %vm657, %v688, %v679
    %v690 = vsel %vm659, %v689, %v682
    %s691 = scalar_lea.vmem [#allocation3], %s459
    %692 = vst [vmem:[%s691] sm:$0xff] %v690
  $region46: #{ode_generator_forward.1} parent=0 // loop_footer
    %s456 = sadd.s32 1, %s452
  $region47: #{ode_generator_forward.1} parent=0 // loop_footer_branch
    %451 = sbr.rel target = $region43
  $region48: #{ode_generator_forward.1} parent=0 // loop_exit
    _
  %v693 = vld [vmem:[#allocation2] sm:$0xff]
  %v694 = vld [vmem:[#allocation2 + $0x8] sm:$0xff]
  %v695 = vld [vmem:[#allocation2 + $0x10] sm:$0xff]
  %v696 = vld [vmem:[#allocation2 + $0x18] sm:$0xff]
  %v697 = vld [vmem:[#allocation2 + $0x20] sm:$0xff]
  %v698 = vld [vmem:[#allocation2 + $0x28] sm:$0xff]
  %v699 = vld [vmem:[#allocation2 + $0x30] sm:$0xff]
  %v700 = vld [vmem:[#allocation2 + $0x38] sm:$0xff]
  %v701 = vld [vmem:[#allocation2 + $0x40] sm:$0xff]
  %v702 = vld [vmem:[#allocation2 + $0x48] sm:$0xff]
  %v703 = vld [vmem:[#allocation2 + $0x50] sm:$0xff]
  %v704 = vld [vmem:[#allocation2 + $0x58] sm:$0xff]
  %v705 = vld [vmem:[#allocation2 + $0x60] sm:$0xff]
  %v706 = vld [vmem:[#allocation2 + $0x68] sm:$0xff]
  %v707 = vld [vmem:[#allocation2 + $0x70] sm:$0xff]
  %v708 = vld [vmem:[#allocation2 + $0x78] sm:$0xff]
  %v709 = vld [vmem:[#allocation2 + $0x80] sm:$0xff]
  %v710 = vld [vmem:[#allocation2 + $0x88] sm:$0xff]
  %v711 = vld [vmem:[#allocation2 + $0x90] sm:$0xff]
  %v712 = vld [vmem:[#allocation2 + $0x98] sm:$0xff]
  %v713 = vld [vmem:[#allocation2 + $0xa0] sm:$0xff]
  %v714 = vld [vmem:[#allocation2 + $0xa8] sm:$0xff]
  %v715 = vld [vmem:[#allocation2 + $0xb0] sm:$0xff]
  %v716 = vld [vmem:[#allocation2 + $0xb8] sm:$0xff]
  %v717 = vld [vmem:[#allocation2 + $0xc0] sm:$0xff]
  %v718 = vld [vmem:[#allocation2 + $0xc8] sm:$0xff]
  %v719 = vld [vmem:[#allocation2 + $0xd0] sm:$0xff]
  %v720 = vld [vmem:[#allocation2 + $0xd8] sm:$0xff]
  %v721 = vld [vmem:[#allocation2 + $0xe0] sm:$0xff]
  %v722 = vld [vmem:[#allocation2 + $0xe8] sm:$0xff]
  %v723 = vld [vmem:[#allocation2 + $0xf0] sm:$0xff]
  %v724 = vld [vmem:[#allocation2 + $0xf8] sm:$0xff]
  %v725 = vld [vmem:[#allocation3] sm:$0xff]
  %v726 = vld [vmem:[#allocation3 + $0x8] sm:$0xff]
  %v727 = vld [vmem:[#allocation3 + $0x10] sm:$0xff]
  %v728 = vld [vmem:[#allocation3 + $0x18] sm:$0xff]
  %v729 = vld [vmem:[#allocation3 + $0x20] sm:$0xff]
  %v730 = vld [vmem:[#allocation3 + $0x28] sm:$0xff]
  %v731 = vld [vmem:[#allocation3 + $0x30] sm:$0xff]
  %v732 = vld [vmem:[#allocation3 + $0x38] sm:$0xff]
  %v733 = vld [vmem:[#allocation3 + $0x40] sm:$0xff]
  %v734 = vld [vmem:[#allocation3 + $0x48] sm:$0xff]
  %v735 = vld [vmem:[#allocation3 + $0x50] sm:$0xff]
  %v736 = vld [vmem:[#allocation3 + $0x58] sm:$0xff]
  %v737 = vld [vmem:[#allocation3 + $0x60] sm:$0xff]
  %v738 = vld [vmem:[#allocation3 + $0x68] sm:$0xff]
  %v739 = vld [vmem:[#allocation3 + $0x70] sm:$0xff]
  %v740 = vld [vmem:[#allocation3 + $0x78] sm:$0xff]
  %v741 = vld [vmem:[#allocation3 + $0x80] sm:$0xff]
  %v742 = vld [vmem:[#allocation3 + $0x88] sm:$0xff]
  %v743 = vld [vmem:[#allocation3 + $0x90] sm:$0xff]
  %v744 = vld [vmem:[#allocation3 + $0x98] sm:$0xff]
  %v745 = vld [vmem:[#allocation3 + $0xa0] sm:$0xff]
  %v746 = vld [vmem:[#allocation3 + $0xa8] sm:$0xff]
  %v747 = vld [vmem:[#allocation3 + $0xb0] sm:$0xff]
  %v748 = vld [vmem:[#allocation3 + $0xb8] sm:$0xff]
  %v749 = vld [vmem:[#allocation3 + $0xc0] sm:$0xff]
  %v750 = vld [vmem:[#allocation3 + $0xc8] sm:$0xff]
  %v751 = vld [vmem:[#allocation3 + $0xd0] sm:$0xff]
  %v752 = vld [vmem:[#allocation3 + $0xd8] sm:$0xff]
  %v753 = vld [vmem:[#allocation3 + $0xe0] sm:$0xff]
  %v754 = vld [vmem:[#allocation3 + $0xe8] sm:$0xff]
  %v755 = vld [vmem:[#allocation3 + $0xf0] sm:$0xff]
  %v756 = vld [vmem:[#allocation3 + $0xf8] sm:$0xff]
  %v757 = vand.u32 2147483647, %v693
  %v758 = vand.u32 2147483647, %v725
  %v759 = vmin.f32 %v757, %v758
  %v760 = vmax.f32 %v757, %v758
  %v761 = vrcp.pop %v760
  %v762 = vmul.f32 %v759, %v761
  %v763 = vmul.f32 %v762, %v762
  %v764 = vmul.f32 0.002785687, %v763
  %v765 = vadd.f32 %v764, -0.015866
  %v766 = vmul.f32 %v765, %v763
  %v767 = vadd.f32 %v766, 0.04247222
  %v768 = vmul.f32 %v767, %v763
  %v769 = vadd.f32 %v768, -0.074975304
  %v770 = vmul.f32 %v769, %v763
  %v771 = vadd.f32 %v770, 0.1064488
  %v772 = vmul.f32 %v771, %v763
  %v773 = vadd.f32 %v772, -0.14207031
  %v774 = vmul.f32 %v773, %v763
  %v775 = vadd.f32 %v774, 0.19993454
  %v776 = vmul.f32 %v775, %v763
  %v777 = vadd.f32 %v776, -0.33333147
  %v778 = vmul.f32 %v777, %v763
  %v779 = vmul.f32 %v778, %v762
  %v780 = vadd.f32 %v779, %v762
  %vm781 = vcmp.gt.f32.partialorder %v758, %v757
  %v782 = vsub.f32 1.5707964, %v780
  %v783 = vsel %vm781, %v782, %v780
  %vm784 = vcmp.lt.f32.partialorder %v693, 0.0
  %v785 = vsub.f32 3.1415927, %v783
  %v786 = vsel %vm784, %v785, %v783
  %vm787 = vcmp.lt.s32.totalorder %v693, 0
  %v788 = vsel %vm787, 3.1415927, 0.0
  %vm789 = vcmp.eq.f32.partialorder %v725, 0.0
  %v790 = vsel %vm789, %v788, %v786
  %vm791 = vcmp.ne.f32.partialorder %v693, %v693
  %vm792 = vcmp.ne.f32.partialorder %v725, %v725
  %vm793 = vmor %vm791, %vm792
  %v794 = vsel %vm793, nan, %v790
  %vm795 = vcmp.lt.f32.partialorder %v693, 0.0
  %v796 = vsel %vm795, 2.3561945, 0.7853982
  %vm797 = vcmp.eq.s32.totalorder %v757, inf
  %vm798 = vcmp.eq.s32.totalorder %v758, inf
  %vm799 = vmand %vm797, %vm798
  %v800 = vsel %vm799, %v796, %v794
  %v801 = vand.u32 2147483647, %v800
  %v802 = vand.u32 %v725, 2147483648
  %v803 = vor.u32 %v801, %v802
  %v804 = vand.u32 2147483647, %v694
  %v805 = vand.u32 2147483647, %v726
  %v806 = vmin.f32 %v804, %v805
  %v807 = vmax.f32 %v804, %v805
  %v808 = vrcp.pop %v807
  %v809 = vmul.f32 %v806, %v808
  %v810 = vmul.f32 %v809, %v809
  %v811 = vmul.f32 0.002785687, %v810
  %v812 = vadd.f32 %v811, -0.015866
  %v813 = vmul.f32 %v812, %v810
  %v814 = vadd.f32 %v813, 0.04247222
  %v815 = vmul.f32 %v814, %v810
  %v816 = vadd.f32 %v815, -0.074975304
  %v817 = vmul.f32 %v816, %v810
  %v818 = vadd.f32 %v817, 0.1064488
  %v819 = vmul.f32 %v818, %v810
  %v820 = vadd.f32 %v819, -0.14207031
  %v821 = vmul.f32 %v820, %v810
  %v822 = vadd.f32 %v821, 0.19993454
  %v823 = vmul.f32 %v822, %v810
  %v824 = vadd.f32 %v823, -0.33333147
  %v825 = vmul.f32 %v824, %v810
  %v826 = vmul.f32 %v825, %v809
  %v827 = vadd.f32 %v826, %v809
  %vm828 = vcmp.gt.f32.partialorder %v805, %v804
  %v829 = vsub.f32 1.5707964, %v827
  %v830 = vsel %vm828, %v829, %v827
  %vm831 = vcmp.lt.f32.partialorder %v694, 0.0
  %v832 = vsub.f32 3.1415927, %v830
  %v833 = vsel %vm831, %v832, %v830
  %vm834 = vcmp.lt.s32.totalorder %v694, 0
  %v835 = vsel %vm834, 3.1415927, 0.0
  %vm836 = vcmp.eq.f32.partialorder %v726, 0.0
  %v837 = vsel %vm836, %v835, %v833
  %vm838 = vcmp.ne.f32.partialorder %v694, %v694
  %vm839 = vcmp.ne.f32.partialorder %v726, %v726
  %vm840 = vmor %vm838, %vm839
  %v841 = vsel %vm840, nan, %v837
  %vm842 = vcmp.lt.f32.partialorder %v694, 0.0
  %v843 = vsel %vm842, 2.3561945, 0.7853982
  %vm844 = vcmp.eq.s32.totalorder %v804, inf
  %vm845 = vcmp.eq.s32.totalorder %v805, inf
  %vm846 = vmand %vm844, %vm845
  %v847 = vsel %vm846, %v843, %v841
  %v848 = vand.u32 2147483647, %v847
  %v849 = vand.u32 %v726, 2147483648
  %v850 = vor.u32 %v848, %v849
  %v851 = vand.u32 2147483647, %v695
  %v852 = vand.u32 2147483647, %v727
  %v853 = vmin.f32 %v851, %v852
  %v854 = vmax.f32 %v851, %v852
  %v855 = vrcp.pop %v854
  %v856 = vmul.f32 %v853, %v855
  %v857 = vmul.f32 %v856, %v856
  %v858 = vmul.f32 0.002785687, %v857
  %v859 = vadd.f32 %v858, -0.015866
  %v860 = vmul.f32 %v859, %v857
  %v861 = vadd.f32 %v860, 0.04247222
  %v862 = vmul.f32 %v861, %v857
  %v863 = vadd.f32 %v862, -0.074975304
  %v864 = vmul.f32 %v863, %v857
  %v865 = vadd.f32 %v864, 0.1064488
  %v866 = vmul.f32 %v865, %v857
  %v867 = vadd.f32 %v866, -0.14207031
  %v868 = vmul.f32 %v867, %v857
  %v869 = vadd.f32 %v868, 0.19993454
  %v870 = vmul.f32 %v869, %v857
  %v871 = vadd.f32 %v870, -0.33333147
  %v872 = vmul.f32 %v871, %v857
  %v873 = vmul.f32 %v872, %v856
  %v874 = vadd.f32 %v873, %v856
  %vm875 = vcmp.gt.f32.partialorder %v852, %v851
  %v876 = vsub.f32 1.5707964, %v874
  %v877 = vsel %vm875, %v876, %v874
  %vm878 = vcmp.lt.f32.partialorder %v695, 0.0
  %v879 = vsub.f32 3.1415927, %v877
  %v880 = vsel %vm878, %v879, %v877
  %vm881 = vcmp.lt.s32.totalorder %v695, 0
  %v882 = vsel %vm881, 3.1415927, 0.0
  %vm883 = vcmp.eq.f32.partialorder %v727, 0.0
  %v884 = vsel %vm883, %v882, %v880
  %vm885 = vcmp.ne.f32.partialorder %v695, %v695
  %vm886 = vcmp.ne.f32.partialorder %v727, %v727
  %vm887 = vmor %vm885, %vm886
  %v888 = vsel %vm887, nan, %v884
  %vm889 = vcmp.lt.f32.partialorder %v695, 0.0
  %v890 = vsel %vm889, 2.3561945, 0.7853982
  %vm891 = vcmp.eq.s32.totalorder %v851, inf
  %vm892 = vcmp.eq.s32.totalorder %v852, inf
  %vm893 = vmand %vm891, %vm892
  %v894 = vsel %vm893, %v890, %v888
  %v895 = vand.u32 2147483647, %v894
  %v896 = vand.u32 %v727, 2147483648
  %v897 = vor.u32 %v895, %v896
  %v898 = vand.u32 2147483647, %v696
  %v899 = vand.u32 2147483647, %v728
  %v900 = vmin.f32 %v898, %v899
  %v901 = vmax.f32 %v898, %v899
  %v902 = vrcp.pop %v901
  %v903 = vmul.f32 %v900, %v902
  %v904 = vmul.f32 %v903, %v903
  %v905 = vmul.f32 0.002785687, %v904
  %v906 = vadd.f32 %v905, -0.015866
  %v907 = vmul.f32 %v906, %v904
  %v908 = vadd.f32 %v907, 0.04247222
  %v909 = vmul.f32 %v908, %v904
  %v910 = vadd.f32 %v909, -0.074975304
  %v911 = vmul.f32 %v910, %v904
  %v912 = vadd.f32 %v911, 0.1064488
  %v913 = vmul.f32 %v912, %v904
  %v914 = vadd.f32 %v913, -0.14207031
  %v915 = vmul.f32 %v914, %v904
  %v916 = vadd.f32 %v915, 0.19993454
  %v917 = vmul.f32 %v916, %v904
  %v918 = vadd.f32 %v917, -0.33333147
  %v919 = vmul.f32 %v918, %v904
  %v920 = vmul.f32 %v919, %v903
  %v921 = vadd.f32 %v920, %v903
  %vm922 = vcmp.gt.f32.partialorder %v899, %v898
  %v923 = vsub.f32 1.5707964, %v921
  %v924 = vsel %vm922, %v923, %v921
  %vm925 = vcmp.lt.f32.partialorder %v696, 0.0
  %v926 = vsub.f32 3.1415927, %v924
  %v927 = vsel %vm925, %v926, %v924
  %vm928 = vcmp.lt.s32.totalorder %v696, 0
  %v929 = vsel %vm928, 3.1415927, 0.0
  %vm930 = vcmp.eq.f32.partialorder %v728, 0.0
  %v931 = vsel %vm930, %v929, %v927
  %vm932 = vcmp.ne.f32.partialorder %v696, %v696
  %vm933 = vcmp.ne.f32.partialorder %v728, %v728
  %vm934 = vmor %vm932, %vm933
  %v935 = vsel %vm934, nan, %v931
  %vm936 = vcmp.lt.f32.partialorder %v696, 0.0
  %v937 = vsel %vm936, 2.3561945, 0.7853982
  %vm938 = vcmp.eq.s32.totalorder %v898, inf
  %vm939 = vcmp.eq.s32.totalorder %v899, inf
  %vm940 = vmand %vm938, %vm939
  %v941 = vsel %vm940, %v937, %v935
  %v942 = vand.u32 2147483647, %v941
  %v943 = vand.u32 %v728, 2147483648
  %v944 = vor.u32 %v942, %v943
  %v945 = vand.u32 2147483647, %v697
  %v946 = vand.u32 2147483647, %v729
  %v947 = vmin.f32 %v945, %v946
  %v948 = vmax.f32 %v945, %v946
  %v949 = vrcp.pop %v948
  %v950 = vmul.f32 %v947, %v949
  %v951 = vmul.f32 %v950, %v950
  %v952 = vmul.f32 0.002785687, %v951
  %v953 = vadd.f32 %v952, -0.015866
  %v954 = vmul.f32 %v953, %v951
  %v955 = vadd.f32 %v954, 0.04247222
  %v956 = vmul.f32 %v955, %v951
  %v957 = vadd.f32 %v956, -0.074975304
  %v958 = vmul.f32 %v957, %v951
  %v959 = vadd.f32 %v958, 0.1064488
  %v960 = vmul.f32 %v959, %v951
  %v961 = vadd.f32 %v960, -0.14207031
  %v962 = vmul.f32 %v961, %v951
  %v963 = vadd.f32 %v962, 0.19993454
  %v964 = vmul.f32 %v963, %v951
  %v965 = vadd.f32 %v964, -0.33333147
  %v966 = vmul.f32 %v965, %v951
  %v967 = vmul.f32 %v966, %v950
  %v968 = vadd.f32 %v967, %v950
  %vm969 = vcmp.gt.f32.partialorder %v946, %v945
  %v970 = vsub.f32 1.5707964, %v968
  %v971 = vsel %vm969, %v970, %v968
  %vm972 = vcmp.lt.f32.partialorder %v697, 0.0
  %v973 = vsub.f32 3.1415927, %v971
  %v974 = vsel %vm972, %v973, %v971
  %vm975 = vcmp.lt.s32.totalorder %v697, 0
  %v976 = vsel %vm975, 3.1415927, 0.0
  %vm977 = vcmp.eq.f32.partialorder %v729, 0.0
  %v978 = vsel %vm977, %v976, %v974
  %vm979 = vcmp.ne.f32.partialorder %v697, %v697
  %vm980 = vcmp.ne.f32.partialorder %v729, %v729
  %vm981 = vmor %vm979, %vm980
  %v982 = vsel %vm981, nan, %v978
  %vm983 = vcmp.lt.f32.partialorder %v697, 0.0
  %v984 = vsel %vm983, 2.3561945, 0.7853982
  %vm985 = vcmp.eq.s32.totalorder %v945, inf
  %vm986 = vcmp.eq.s32.totalorder %v946, inf
  %vm987 = vmand %vm985, %vm986
  %v988 = vsel %vm987, %v984, %v982
  %v989 = vand.u32 2147483647, %v988
  %v990 = vand.u32 %v729, 2147483648
  %v991 = vor.u32 %v989, %v990
  %v992 = vand.u32 2147483647, %v698
  %v993 = vand.u32 2147483647, %v730
  %v994 = vmin.f32 %v992, %v993
  %v995 = vmax.f32 %v992, %v993
  %v996 = vrcp.pop %v995
  %v997 = vmul.f32 %v994, %v996
  %v998 = vmul.f32 %v997, %v997
  %v999 = vmul.f32 0.002785687, %v998
  %v1000 = vadd.f32 %v999, -0.015866
  %v1001 = vmul.f32 %v1000, %v998
  %v1002 = vadd.f32 %v1001, 0.04247222
  %v1003 = vmul.f32 %v1002, %v998
  %v1004 = vadd.f32 %v1003, -0.074975304
  %v1005 = vmul.f32 %v1004, %v998
  %v1006 = vadd.f32 %v1005, 0.1064488
  %v1007 = vmul.f32 %v1006, %v998
  %v1008 = vadd.f32 %v1007, -0.14207031
  %v1009 = vmul.f32 %v1008, %v998
  %v1010 = vadd.f32 %v1009, 0.19993454
  %v1011 = vmul.f32 %v1010, %v998
  %v1012 = vadd.f32 %v1011, -0.33333147
  %v1013 = vmul.f32 %v1012, %v998
  %v1014 = vmul.f32 %v1013, %v997
  %v1015 = vadd.f32 %v1014, %v997
  %vm1016 = vcmp.gt.f32.partialorder %v993, %v992
  %v1017 = vsub.f32 1.5707964, %v1015
  %v1018 = vsel %vm1016, %v1017, %v1015
  %vm1019 = vcmp.lt.f32.partialorder %v698, 0.0
  %v1020 = vsub.f32 3.1415927, %v1018
  %v1021 = vsel %vm1019, %v1020, %v1018
  %vm1022 = vcmp.lt.s32.totalorder %v698, 0
  %v1023 = vsel %vm1022, 3.1415927, 0.0
  %vm1024 = vcmp.eq.f32.partialorder %v730, 0.0
  %v1025 = vsel %vm1024, %v1023, %v1021
  %vm1026 = vcmp.ne.f32.partialorder %v698, %v698
  %vm1027 = vcmp.ne.f32.partialorder %v730, %v730
  %vm1028 = vmor %vm1026, %vm1027
  %v1029 = vsel %vm1028, nan, %v1025
  %vm1030 = vcmp.lt.f32.partialorder %v698, 0.0
  %v1031 = vsel %vm1030, 2.3561945, 0.7853982
  %vm1032 = vcmp.eq.s32.totalorder %v992, inf
  %vm1033 = vcmp.eq.s32.totalorder %v993, inf
  %vm1034 = vmand %vm1032, %vm1033
  %v1035 = vsel %vm1034, %v1031, %v1029
  %v1036 = vand.u32 2147483647, %v1035
  %v1037 = vand.u32 %v730, 2147483648
  %v1038 = vor.u32 %v1036, %v1037
  %v1039 = vand.u32 2147483647, %v699
  %v1040 = vand.u32 2147483647, %v731
  %v1041 = vmin.f32 %v1039, %v1040
  %v1042 = vmax.f32 %v1039, %v1040
  %v1043 = vrcp.pop %v1042
  %v1044 = vmul.f32 %v1041, %v1043
  %v1045 = vmul.f32 %v1044, %v1044
  %v1046 = vmul.f32 0.002785687, %v1045
  %v1047 = vadd.f32 %v1046, -0.015866
  %v1048 = vmul.f32 %v1047, %v1045
  %v1049 = vadd.f32 %v1048, 0.04247222
  %v1050 = vmul.f32 %v1049, %v1045
  %v1051 = vadd.f32 %v1050, -0.074975304
  %v1052 = vmul.f32 %v1051, %v1045
  %v1053 = vadd.f32 %v1052, 0.1064488
  %v1054 = vmul.f32 %v1053, %v1045
  %v1055 = vadd.f32 %v1054, -0.14207031
  %v1056 = vmul.f32 %v1055, %v1045
  %v1057 = vadd.f32 %v1056, 0.19993454
  %v1058 = vmul.f32 %v1057, %v1045
  %v1059 = vadd.f32 %v1058, -0.33333147
  %v1060 = vmul.f32 %v1059, %v1045
  %v1061 = vmul.f32 %v1060, %v1044
  %v1062 = vadd.f32 %v1061, %v1044
  %vm1063 = vcmp.gt.f32.partialorder %v1040, %v1039
  %v1064 = vsub.f32 1.5707964, %v1062
  %v1065 = vsel %vm1063, %v1064, %v1062
  %vm1066 = vcmp.lt.f32.partialorder %v699, 0.0
  %v1067 = vsub.f32 3.1415927, %v1065
  %v1068 = vsel %vm1066, %v1067, %v1065
  %vm1069 = vcmp.lt.s32.totalorder %v699, 0
  %v1070 = vsel %vm1069, 3.1415927, 0.0
  %vm1071 = vcmp.eq.f32.partialorder %v731, 0.0
  %v1072 = vsel %vm1071, %v1070, %v1068
  %vm1073 = vcmp.ne.f32.partialorder %v699, %v699
  %vm1074 = vcmp.ne.f32.partialorder %v731, %v731
  %vm1075 = vmor %vm1073, %vm1074
  %v1076 = vsel %vm1075, nan, %v1072
  %vm1077 = vcmp.lt.f32.partialorder %v699, 0.0
  %v1078 = vsel %vm1077, 2.3561945, 0.7853982
  %vm1079 = vcmp.eq.s32.totalorder %v1039, inf
  %vm1080 = vcmp.eq.s32.totalorder %v1040, inf
  %vm1081 = vmand %vm1079, %vm1080
  %v1082 = vsel %vm1081, %v1078, %v1076
  %v1083 = vand.u32 2147483647, %v1082
  %v1084 = vand.u32 %v731, 2147483648
  %v1085 = vor.u32 %v1083, %v1084
  %v1086 = vand.u32 2147483647, %v700
  %v1087 = vand.u32 2147483647, %v732
  %v1088 = vmin.f32 %v1086, %v1087
  %v1089 = vmax.f32 %v1086, %v1087
  %v1090 = vrcp.pop %v1089
  %v1091 = vmul.f32 %v1088, %v1090
  %v1092 = vmul.f32 %v1091, %v1091
  %v1093 = vmul.f32 0.002785687, %v1092
  %v1094 = vadd.f32 %v1093, -0.015866
  %v1095 = vmul.f32 %v1094, %v1092
  %v1096 = vadd.f32 %v1095, 0.04247222
  %v1097 = vmul.f32 %v1096, %v1092
  %v1098 = vadd.f32 %v1097, -0.074975304
  %v1099 = vmul.f32 %v1098, %v1092
  %v1100 = vadd.f32 %v1099, 0.1064488
  %v1101 = vmul.f32 %v1100, %v1092
  %v1102 = vadd.f32 %v1101, -0.14207031
  %v1103 = vmul.f32 %v1102, %v1092
  %v1104 = vadd.f32 %v1103, 0.19993454
  %v1105 = vmul.f32 %v1104, %v1092
  %v1106 = vadd.f32 %v1105, -0.33333147
  %v1107 = vmul.f32 %v1106, %v1092
  %v1108 = vmul.f32 %v1107, %v1091
  %v1109 = vadd.f32 %v1108, %v1091
  %vm1110 = vcmp.gt.f32.partialorder %v1087, %v1086
  %v1111 = vsub.f32 1.5707964, %v1109
  %v1112 = vsel %vm1110, %v1111, %v1109
  %vm1113 = vcmp.lt.f32.partialorder %v700, 0.0
  %v1114 = vsub.f32 3.1415927, %v1112
  %v1115 = vsel %vm1113, %v1114, %v1112
  %vm1116 = vcmp.lt.s32.totalorder %v700, 0
  %v1117 = vsel %vm1116, 3.1415927, 0.0
  %vm1118 = vcmp.eq.f32.partialorder %v732, 0.0
  %v1119 = vsel %vm1118, %v1117, %v1115
  %vm1120 = vcmp.ne.f32.partialorder %v700, %v700
  %vm1121 = vcmp.ne.f32.partialorder %v732, %v732
  %vm1122 = vmor %vm1120, %vm1121
  %v1123 = vsel %vm1122, nan, %v1119
  %vm1124 = vcmp.lt.f32.partialorder %v700, 0.0
  %v1125 = vsel %vm1124, 2.3561945, 0.7853982
  %vm1126 = vcmp.eq.s32.totalorder %v1086, inf
  %vm1127 = vcmp.eq.s32.totalorder %v1087, inf
  %vm1128 = vmand %vm1126, %vm1127
  %v1129 = vsel %vm1128, %v1125, %v1123
  %v1130 = vand.u32 2147483647, %v1129
  %v1131 = vand.u32 %v732, 2147483648
  %v1132 = vor.u32 %v1130, %v1131
  %v1133 = vand.u32 2147483647, %v701
  %v1134 = vand.u32 2147483647, %v733
  %v1135 = vmin.f32 %v1133, %v1134
  %v1136 = vmax.f32 %v1133, %v1134
  %v1137 = vrcp.pop %v1136
  %v1138 = vmul.f32 %v1135, %v1137
  %v1139 = vmul.f32 %v1138, %v1138
  %v1140 = vmul.f32 0.002785687, %v1139
  %v1141 = vadd.f32 %v1140, -0.015866
  %v1142 = vmul.f32 %v1141, %v1139
  %v1143 = vadd.f32 %v1142, 0.04247222
  %v1144 = vmul.f32 %v1143, %v1139
  %v1145 = vadd.f32 %v1144, -0.074975304
  %v1146 = vmul.f32 %v1145, %v1139
  %v1147 = vadd.f32 %v1146, 0.1064488
  %v1148 = vmul.f32 %v1147, %v1139
  %v1149 = vadd.f32 %v1148, -0.14207031
  %v1150 = vmul.f32 %v1149, %v1139
  %v1151 = vadd.f32 %v1150, 0.19993454
  %v1152 = vmul.f32 %v1151, %v1139
  %v1153 = vadd.f32 %v1152, -0.33333147
  %v1154 = vmul.f32 %v1153, %v1139
  %v1155 = vmul.f32 %v1154, %v1138
  %v1156 = vadd.f32 %v1155, %v1138
  %vm1157 = vcmp.gt.f32.partialorder %v1134, %v1133
  %v1158 = vsub.f32 1.5707964, %v1156
  %v1159 = vsel %vm1157, %v1158, %v1156
  %vm1160 = vcmp.lt.f32.partialorder %v701, 0.0
  %v1161 = vsub.f32 3.1415927, %v1159
  %v1162 = vsel %vm1160, %v1161, %v1159
  %vm1163 = vcmp.lt.s32.totalorder %v701, 0
  %v1164 = vsel %vm1163, 3.1415927, 0.0
  %vm1165 = vcmp.eq.f32.partialorder %v733, 0.0
  %v1166 = vsel %vm1165, %v1164, %v1162
  %vm1167 = vcmp.ne.f32.partialorder %v701, %v701
  %vm1168 = vcmp.ne.f32.partialorder %v733, %v733
  %vm1169 = vmor %vm1167, %vm1168
  %v1170 = vsel %vm1169, nan, %v1166
  %vm1171 = vcmp.lt.f32.partialorder %v701, 0.0
  %v1172 = vsel %vm1171, 2.3561945, 0.7853982
  %vm1173 = vcmp.eq.s32.totalorder %v1133, inf
  %vm1174 = vcmp.eq.s32.totalorder %v1134, inf
  %vm1175 = vmand %vm1173, %vm1174
  %v1176 = vsel %vm1175, %v1172, %v1170
  %v1177 = vand.u32 2147483647, %v1176
  %v1178 = vand.u32 %v733, 2147483648
  %v1179 = vor.u32 %v1177, %v1178
  %v1180 = vand.u32 2147483647, %v702
  %v1181 = vand.u32 2147483647, %v734
  %v1182 = vmin.f32 %v1180, %v1181
  %v1183 = vmax.f32 %v1180, %v1181
  %v1184 = vrcp.pop %v1183
  %v1185 = vmul.f32 %v1182, %v1184
  %v1186 = vmul.f32 %v1185, %v1185
  %v1187 = vmul.f32 0.002785687, %v1186
  %v1188 = vadd.f32 %v1187, -0.015866
  %v1189 = vmul.f32 %v1188, %v1186
  %v1190 = vadd.f32 %v1189, 0.04247222
  %v1191 = vmul.f32 %v1190, %v1186
  %v1192 = vadd.f32 %v1191, -0.074975304
  %v1193 = vmul.f32 %v1192, %v1186
  %v1194 = vadd.f32 %v1193, 0.1064488
  %v1195 = vmul.f32 %v1194, %v1186
  %v1196 = vadd.f32 %v1195, -0.14207031
  %v1197 = vmul.f32 %v1196, %v1186
  %v1198 = vadd.f32 %v1197, 0.19993454
  %v1199 = vmul.f32 %v1198, %v1186
  %v1200 = vadd.f32 %v1199, -0.33333147
  %v1201 = vmul.f32 %v1200, %v1186
  %v1202 = vmul.f32 %v1201, %v1185
  %v1203 = vadd.f32 %v1202, %v1185
  %vm1204 = vcmp.gt.f32.partialorder %v1181, %v1180
  %v1205 = vsub.f32 1.5707964, %v1203
  %v1206 = vsel %vm1204, %v1205, %v1203
  %vm1207 = vcmp.lt.f32.partialorder %v702, 0.0
  %v1208 = vsub.f32 3.1415927, %v1206
  %v1209 = vsel %vm1207, %v1208, %v1206
  %vm1210 = vcmp.lt.s32.totalorder %v702, 0
  %v1211 = vsel %vm1210, 3.1415927, 0.0
  %vm1212 = vcmp.eq.f32.partialorder %v734, 0.0
  %v1213 = vsel %vm1212, %v1211, %v1209
  %vm1214 = vcmp.ne.f32.partialorder %v702, %v702
  %vm1215 = vcmp.ne.f32.partialorder %v734, %v734
  %vm1216 = vmor %vm1214, %vm1215
  %v1217 = vsel %vm1216, nan, %v1213
  %vm1218 = vcmp.lt.f32.partialorder %v702, 0.0
  %v1219 = vsel %vm1218, 2.3561945, 0.7853982
  %vm1220 = vcmp.eq.s32.totalorder %v1180, inf
  %vm1221 = vcmp.eq.s32.totalorder %v1181, inf
  %vm1222 = vmand %vm1220, %vm1221
  %v1223 = vsel %vm1222, %v1219, %v1217
  %v1224 = vand.u32 2147483647, %v1223
  %v1225 = vand.u32 %v734, 2147483648
  %v1226 = vor.u32 %v1224, %v1225
  %v1227 = vand.u32 2147483647, %v703
  %v1228 = vand.u32 2147483647, %v735
  %v1229 = vmin.f32 %v1227, %v1228
  %v1230 = vmax.f32 %v1227, %v1228
  %v1231 = vrcp.pop %v1230
  %v1232 = vmul.f32 %v1229, %v1231
  %v1233 = vmul.f32 %v1232, %v1232
  %v1234 = vmul.f32 0.002785687, %v1233
  %v1235 = vadd.f32 %v1234, -0.015866
  %v1236 = vmul.f32 %v1235, %v1233
  %v1237 = vadd.f32 %v1236, 0.04247222
  %v1238 = vmul.f32 %v1237, %v1233
  %v1239 = vadd.f32 %v1238, -0.074975304
  %v1240 = vmul.f32 %v1239, %v1233
  %v1241 = vadd.f32 %v1240, 0.1064488
  %v1242 = vmul.f32 %v1241, %v1233
  %v1243 = vadd.f32 %v1242, -0.14207031
  %v1244 = vmul.f32 %v1243, %v1233
  %v1245 = vadd.f32 %v1244, 0.19993454
  %v1246 = vmul.f32 %v1245, %v1233
  %v1247 = vadd.f32 %v1246, -0.33333147
  %v1248 = vmul.f32 %v1247, %v1233
  %v1249 = vmul.f32 %v1248, %v1232
  %v1250 = vadd.f32 %v1249, %v1232
  %vm1251 = vcmp.gt.f32.partialorder %v1228, %v1227
  %v1252 = vsub.f32 1.5707964, %v1250
  %v1253 = vsel %vm1251, %v1252, %v1250
  %vm1254 = vcmp.lt.f32.partialorder %v703, 0.0
  %v1255 = vsub.f32 3.1415927, %v1253
  %v1256 = vsel %vm1254, %v1255, %v1253
  %vm1257 = vcmp.lt.s32.totalorder %v703, 0
  %v1258 = vsel %vm1257, 3.1415927, 0.0
  %vm1259 = vcmp.eq.f32.partialorder %v735, 0.0
  %v1260 = vsel %vm1259, %v1258, %v1256
  %vm1261 = vcmp.ne.f32.partialorder %v703, %v703
  %vm1262 = vcmp.ne.f32.partialorder %v735, %v735
  %vm1263 = vmor %vm1261, %vm1262
  %v1264 = vsel %vm1263, nan, %v1260
  %vm1265 = vcmp.lt.f32.partialorder %v703, 0.0
  %v1266 = vsel %vm1265, 2.3561945, 0.7853982
  %vm1267 = vcmp.eq.s32.totalorder %v1227, inf
  %vm1268 = vcmp.eq.s32.totalorder %v1228, inf
  %vm1269 = vmand %vm1267, %vm1268
  %v1270 = vsel %vm1269, %v1266, %v1264
  %v1271 = vand.u32 2147483647, %v1270
  %v1272 = vand.u32 %v735, 2147483648
  %v1273 = vor.u32 %v1271, %v1272
  %v1274 = vand.u32 2147483647, %v704
  %v1275 = vand.u32 2147483647, %v736
  %v1276 = vmin.f32 %v1274, %v1275
  %v1277 = vmax.f32 %v1274, %v1275
  %v1278 = vrcp.pop %v1277
  %v1279 = vmul.f32 %v1276, %v1278
  %v1280 = vmul.f32 %v1279, %v1279
  %v1281 = vmul.f32 0.002785687, %v1280
  %v1282 = vadd.f32 %v1281, -0.015866
  %v1283 = vmul.f32 %v1282, %v1280
  %v1284 = vadd.f32 %v1283, 0.04247222
  %v1285 = vmul.f32 %v1284, %v1280
  %v1286 = vadd.f32 %v1285, -0.074975304
  %v1287 = vmul.f32 %v1286, %v1280
  %v1288 = vadd.f32 %v1287, 0.1064488
  %v1289 = vmul.f32 %v1288, %v1280
  %v1290 = vadd.f32 %v1289, -0.14207031
  %v1291 = vmul.f32 %v1290, %v1280
  %v1292 = vadd.f32 %v1291, 0.19993454
  %v1293 = vmul.f32 %v1292, %v1280
  %v1294 = vadd.f32 %v1293, -0.33333147
  %v1295 = vmul.f32 %v1294, %v1280
  %v1296 = vmul.f32 %v1295, %v1279
  %v1297 = vadd.f32 %v1296, %v1279
  %vm1298 = vcmp.gt.f32.partialorder %v1275, %v1274
  %v1299 = vsub.f32 1.5707964, %v1297
  %v1300 = vsel %vm1298, %v1299, %v1297
  %vm1301 = vcmp.lt.f32.partialorder %v704, 0.0
  %v1302 = vsub.f32 3.1415927, %v1300
  %v1303 = vsel %vm1301, %v1302, %v1300
  %vm1304 = vcmp.lt.s32.totalorder %v704, 0
  %v1305 = vsel %vm1304, 3.1415927, 0.0
  %vm1306 = vcmp.eq.f32.partialorder %v736, 0.0
  %v1307 = vsel %vm1306, %v1305, %v1303
  %vm1308 = vcmp.ne.f32.partialorder %v704, %v704
  %vm1309 = vcmp.ne.f32.partialorder %v736, %v736
  %vm1310 = vmor %vm1308, %vm1309
  %v1311 = vsel %vm1310, nan, %v1307
  %vm1312 = vcmp.lt.f32.partialorder %v704, 0.0
  %v1313 = vsel %vm1312, 2.3561945, 0.7853982
  %vm1314 = vcmp.eq.s32.totalorder %v1274, inf
  %vm1315 = vcmp.eq.s32.totalorder %v1275, inf
  %vm1316 = vmand %vm1314, %vm1315
  %v1317 = vsel %vm1316, %v1313, %v1311
  %v1318 = vand.u32 2147483647, %v1317
  %v1319 = vand.u32 %v736, 2147483648
  %v1320 = vor.u32 %v1318, %v1319
  %v1321 = vand.u32 2147483647, %v705
  %v1322 = vand.u32 2147483647, %v737
  %v1323 = vmin.f32 %v1321, %v1322
  %v1324 = vmax.f32 %v1321, %v1322
  %v1325 = vrcp.pop %v1324
  %v1326 = vmul.f32 %v1323, %v1325
  %v1327 = vmul.f32 %v1326, %v1326
  %v1328 = vmul.f32 0.002785687, %v1327
  %v1329 = vadd.f32 %v1328, -0.015866
  %v1330 = vmul.f32 %v1329, %v1327
  %v1331 = vadd.f32 %v1330, 0.04247222
  %v1332 = vmul.f32 %v1331, %v1327
  %v1333 = vadd.f32 %v1332, -0.074975304
  %v1334 = vmul.f32 %v1333, %v1327
  %v1335 = vadd.f32 %v1334, 0.1064488
  %v1336 = vmul.f32 %v1335, %v1327
  %v1337 = vadd.f32 %v1336, -0.14207031
  %v1338 = vmul.f32 %v1337, %v1327
  %v1339 = vadd.f32 %v1338, 0.19993454
  %v1340 = vmul.f32 %v1339, %v1327
  %v1341 = vadd.f32 %v1340, -0.33333147
  %v1342 = vmul.f32 %v1341, %v1327
  %v1343 = vmul.f32 %v1342, %v1326
  %v1344 = vadd.f32 %v1343, %v1326
  %vm1345 = vcmp.gt.f32.partialorder %v1322, %v1321
  %v1346 = vsub.f32 1.5707964, %v1344
  %v1347 = vsel %vm1345, %v1346, %v1344
  %vm1348 = vcmp.lt.f32.partialorder %v705, 0.0
  %v1349 = vsub.f32 3.1415927, %v1347
  %v1350 = vsel %vm1348, %v1349, %v1347
  %vm1351 = vcmp.lt.s32.totalorder %v705, 0
  %v1352 = vsel %vm1351, 3.1415927, 0.0
  %vm1353 = vcmp.eq.f32.partialorder %v737, 0.0
  %v1354 = vsel %vm1353, %v1352, %v1350
  %vm1355 = vcmp.ne.f32.partialorder %v705, %v705
  %vm1356 = vcmp.ne.f32.partialorder %v737, %v737
  %vm1357 = vmor %vm1355, %vm1356
  %v1358 = vsel %vm1357, nan, %v1354
  %vm1359 = vcmp.lt.f32.partialorder %v705, 0.0
  %v1360 = vsel %vm1359, 2.3561945, 0.7853982
  %vm1361 = vcmp.eq.s32.totalorder %v1321, inf
  %vm1362 = vcmp.eq.s32.totalorder %v1322, inf
  %vm1363 = vmand %vm1361, %vm1362
  %v1364 = vsel %vm1363, %v1360, %v1358
  %v1365 = vand.u32 2147483647, %v1364
  %v1366 = vand.u32 %v737, 2147483648
  %v1367 = vor.u32 %v1365, %v1366
  %v1368 = vand.u32 2147483647, %v706
  %v1369 = vand.u32 2147483647, %v738
  %v1370 = vmin.f32 %v1368, %v1369
  %v1371 = vmax.f32 %v1368, %v1369
  %v1372 = vrcp.pop %v1371
  %v1373 = vmul.f32 %v1370, %v1372
  %v1374 = vmul.f32 %v1373, %v1373
  %v1375 = vmul.f32 0.002785687, %v1374
  %v1376 = vadd.f32 %v1375, -0.015866
  %v1377 = vmul.f32 %v1376, %v1374
  %v1378 = vadd.f32 %v1377, 0.04247222
  %v1379 = vmul.f32 %v1378, %v1374
  %v1380 = vadd.f32 %v1379, -0.074975304
  %v1381 = vmul.f32 %v1380, %v1374
  %v1382 = vadd.f32 %v1381, 0.1064488
  %v1383 = vmul.f32 %v1382, %v1374
  %v1384 = vadd.f32 %v1383, -0.14207031
  %v1385 = vmul.f32 %v1384, %v1374
  %v1386 = vadd.f32 %v1385, 0.19993454
  %v1387 = vmul.f32 %v1386, %v1374
  %v1388 = vadd.f32 %v1387, -0.33333147
  %v1389 = vmul.f32 %v1388, %v1374
  %v1390 = vmul.f32 %v1389, %v1373
  %v1391 = vadd.f32 %v1390, %v1373
  %vm1392 = vcmp.gt.f32.partialorder %v1369, %v1368
  %v1393 = vsub.f32 1.5707964, %v1391
  %v1394 = vsel %vm1392, %v1393, %v1391
  %vm1395 = vcmp.lt.f32.partialorder %v706, 0.0
  %v1396 = vsub.f32 3.1415927, %v1394
  %v1397 = vsel %vm1395, %v1396, %v1394
  %vm1398 = vcmp.lt.s32.totalorder %v706, 0
  %v1399 = vsel %vm1398, 3.1415927, 0.0
  %vm1400 = vcmp.eq.f32.partialorder %v738, 0.0
  %v1401 = vsel %vm1400, %v1399, %v1397
  %vm1402 = vcmp.ne.f32.partialorder %v706, %v706
  %vm1403 = vcmp.ne.f32.partialorder %v738, %v738
  %vm1404 = vmor %vm1402, %vm1403
  %v1405 = vsel %vm1404, nan, %v1401
  %vm1406 = vcmp.lt.f32.partialorder %v706, 0.0
  %v1407 = vsel %vm1406, 2.3561945, 0.7853982
  %vm1408 = vcmp.eq.s32.totalorder %v1368, inf
  %vm1409 = vcmp.eq.s32.totalorder %v1369, inf
  %vm1410 = vmand %vm1408, %vm1409
  %v1411 = vsel %vm1410, %v1407, %v1405
  %v1412 = vand.u32 2147483647, %v1411
  %v1413 = vand.u32 %v738, 2147483648
  %v1414 = vor.u32 %v1412, %v1413
  %v1415 = vand.u32 2147483647, %v707
  %v1416 = vand.u32 2147483647, %v739
  %v1417 = vmin.f32 %v1415, %v1416
  %v1418 = vmax.f32 %v1415, %v1416
  %v1419 = vrcp.pop %v1418
  %v1420 = vmul.f32 %v1417, %v1419
  %v1421 = vmul.f32 %v1420, %v1420
  %v1422 = vmul.f32 0.002785687, %v1421
  %v1423 = vadd.f32 %v1422, -0.015866
  %v1424 = vmul.f32 %v1423, %v1421
  %v1425 = vadd.f32 %v1424, 0.04247222
  %v1426 = vmul.f32 %v1425, %v1421
  %v1427 = vadd.f32 %v1426, -0.074975304
  %v1428 = vmul.f32 %v1427, %v1421
  %v1429 = vadd.f32 %v1428, 0.1064488
  %v1430 = vmul.f32 %v1429, %v1421
  %v1431 = vadd.f32 %v1430, -0.14207031
  %v1432 = vmul.f32 %v1431, %v1421
  %v1433 = vadd.f32 %v1432, 0.19993454
  %v1434 = vmul.f32 %v1433, %v1421
  %v1435 = vadd.f32 %v1434, -0.33333147
  %v1436 = vmul.f32 %v1435, %v1421
  %v1437 = vmul.f32 %v1436, %v1420
  %v1438 = vadd.f32 %v1437, %v1420
  %vm1439 = vcmp.gt.f32.partialorder %v1416, %v1415
  %v1440 = vsub.f32 1.5707964, %v1438
  %v1441 = vsel %vm1439, %v1440, %v1438
  %vm1442 = vcmp.lt.f32.partialorder %v707, 0.0
  %v1443 = vsub.f32 3.1415927, %v1441
  %v1444 = vsel %vm1442, %v1443, %v1441
  %vm1445 = vcmp.lt.s32.totalorder %v707, 0
  %v1446 = vsel %vm1445, 3.1415927, 0.0
  %vm1447 = vcmp.eq.f32.partialorder %v739, 0.0
  %v1448 = vsel %vm1447, %v1446, %v1444
  %vm1449 = vcmp.ne.f32.partialorder %v707, %v707
  %vm1450 = vcmp.ne.f32.partialorder %v739, %v739
  %vm1451 = vmor %vm1449, %vm1450
  %v1452 = vsel %vm1451, nan, %v1448
  %vm1453 = vcmp.lt.f32.partialorder %v707, 0.0
  %v1454 = vsel %vm1453, 2.3561945, 0.7853982
  %vm1455 = vcmp.eq.s32.totalorder %v1415, inf
  %vm1456 = vcmp.eq.s32.totalorder %v1416, inf
  %vm1457 = vmand %vm1455, %vm1456
  %v1458 = vsel %vm1457, %v1454, %v1452
  %v1459 = vand.u32 2147483647, %v1458
  %v1460 = vand.u32 %v739, 2147483648
  %v1461 = vor.u32 %v1459, %v1460
  %v1462 = vand.u32 2147483647, %v708
  %v1463 = vand.u32 2147483647, %v740
  %v1464 = vmin.f32 %v1462, %v1463
  %v1465 = vmax.f32 %v1462, %v1463
  %v1466 = vrcp.pop %v1465
  %v1467 = vmul.f32 %v1464, %v1466
  %v1468 = vmul.f32 %v1467, %v1467
  %v1469 = vmul.f32 0.002785687, %v1468
  %v1470 = vadd.f32 %v1469, -0.015866
  %v1471 = vmul.f32 %v1470, %v1468
  %v1472 = vadd.f32 %v1471, 0.04247222
  %v1473 = vmul.f32 %v1472, %v1468
  %v1474 = vadd.f32 %v1473, -0.074975304
  %v1475 = vmul.f32 %v1474, %v1468
  %v1476 = vadd.f32 %v1475, 0.1064488
  %v1477 = vmul.f32 %v1476, %v1468
  %v1478 = vadd.f32 %v1477, -0.14207031
  %v1479 = vmul.f32 %v1478, %v1468
  %v1480 = vadd.f32 %v1479, 0.19993454
  %v1481 = vmul.f32 %v1480, %v1468
  %v1482 = vadd.f32 %v1481, -0.33333147
  %v1483 = vmul.f32 %v1482, %v1468
  %v1484 = vmul.f32 %v1483, %v1467
  %v1485 = vadd.f32 %v1484, %v1467
  %vm1486 = vcmp.gt.f32.partialorder %v1463, %v1462
  %v1487 = vsub.f32 1.5707964, %v1485
  %v1488 = vsel %vm1486, %v1487, %v1485
  %vm1489 = vcmp.lt.f32.partialorder %v708, 0.0
  %v1490 = vsub.f32 3.1415927, %v1488
  %v1491 = vsel %vm1489, %v1490, %v1488
  %vm1492 = vcmp.lt.s32.totalorder %v708, 0
  %v1493 = vsel %vm1492, 3.1415927, 0.0
  %vm1494 = vcmp.eq.f32.partialorder %v740, 0.0
  %v1495 = vsel %vm1494, %v1493, %v1491
  %vm1496 = vcmp.ne.f32.partialorder %v708, %v708
  %vm1497 = vcmp.ne.f32.partialorder %v740, %v740
  %vm1498 = vmor %vm1496, %vm1497
  %v1499 = vsel %vm1498, nan, %v1495
  %vm1500 = vcmp.lt.f32.partialorder %v708, 0.0
  %v1501 = vsel %vm1500, 2.3561945, 0.7853982
  %vm1502 = vcmp.eq.s32.totalorder %v1462, inf
  %vm1503 = vcmp.eq.s32.totalorder %v1463, inf
  %vm1504 = vmand %vm1502, %vm1503
  %v1505 = vsel %vm1504, %v1501, %v1499
  %v1506 = vand.u32 2147483647, %v1505
  %v1507 = vand.u32 %v740, 2147483648
  %v1508 = vor.u32 %v1506, %v1507
  %v1509 = vand.u32 2147483647, %v709
  %v1510 = vand.u32 2147483647, %v741
  %v1511 = vmin.f32 %v1509, %v1510
  %v1512 = vmax.f32 %v1509, %v1510
  %v1513 = vrcp.pop %v1512
  %v1514 = vmul.f32 %v1511, %v1513
  %v1515 = vmul.f32 %v1514, %v1514
  %v1516 = vmul.f32 0.002785687, %v1515
  %v1517 = vadd.f32 %v1516, -0.015866
  %v1518 = vmul.f32 %v1517, %v1515
  %v1519 = vadd.f32 %v1518, 0.04247222
  %v1520 = vmul.f32 %v1519, %v1515
  %v1521 = vadd.f32 %v1520, -0.074975304
  %v1522 = vmul.f32 %v1521, %v1515
  %v1523 = vadd.f32 %v1522, 0.1064488
  %v1524 = vmul.f32 %v1523, %v1515
  %v1525 = vadd.f32 %v1524, -0.14207031
  %v1526 = vmul.f32 %v1525, %v1515
  %v1527 = vadd.f32 %v1526, 0.19993454
  %v1528 = vmul.f32 %v1527, %v1515
  %v1529 = vadd.f32 %v1528, -0.33333147
  %v1530 = vmul.f32 %v1529, %v1515
  %v1531 = vmul.f32 %v1530, %v1514
  %v1532 = vadd.f32 %v1531, %v1514
  %vm1533 = vcmp.gt.f32.partialorder %v1510, %v1509
  %v1534 = vsub.f32 1.5707964, %v1532
  %v1535 = vsel %vm1533, %v1534, %v1532
  %vm1536 = vcmp.lt.f32.partialorder %v709, 0.0
  %v1537 = vsub.f32 3.1415927, %v1535
  %v1538 = vsel %vm1536, %v1537, %v1535
  %vm1539 = vcmp.lt.s32.totalorder %v709, 0
  %v1540 = vsel %vm1539, 3.1415927, 0.0
  %vm1541 = vcmp.eq.f32.partialorder %v741, 0.0
  %v1542 = vsel %vm1541, %v1540, %v1538
  %vm1543 = vcmp.ne.f32.partialorder %v709, %v709
  %vm1544 = vcmp.ne.f32.partialorder %v741, %v741
  %vm1545 = vmor %vm1543, %vm1544
  %v1546 = vsel %vm1545, nan, %v1542
  %vm1547 = vcmp.lt.f32.partialorder %v709, 0.0
  %v1548 = vsel %vm1547, 2.3561945, 0.7853982
  %vm1549 = vcmp.eq.s32.totalorder %v1509, inf
  %vm1550 = vcmp.eq.s32.totalorder %v1510, inf
  %vm1551 = vmand %vm1549, %vm1550
  %v1552 = vsel %vm1551, %v1548, %v1546
  %v1553 = vand.u32 2147483647, %v1552
  %v1554 = vand.u32 %v741, 2147483648
  %v1555 = vor.u32 %v1553, %v1554
  %v1556 = vand.u32 2147483647, %v710
  %v1557 = vand.u32 2147483647, %v742
  %v1558 = vmin.f32 %v1556, %v1557
  %v1559 = vmax.f32 %v1556, %v1557
  %v1560 = vrcp.pop %v1559
  %v1561 = vmul.f32 %v1558, %v1560
  %v1562 = vmul.f32 %v1561, %v1561
  %v1563 = vmul.f32 0.002785687, %v1562
  %v1564 = vadd.f32 %v1563, -0.015866
  %v1565 = vmul.f32 %v1564, %v1562
  %v1566 = vadd.f32 %v1565, 0.04247222
  %v1567 = vmul.f32 %v1566, %v1562
  %v1568 = vadd.f32 %v1567, -0.074975304
  %v1569 = vmul.f32 %v1568, %v1562
  %v1570 = vadd.f32 %v1569, 0.1064488
  %v1571 = vmul.f32 %v1570, %v1562
  %v1572 = vadd.f32 %v1571, -0.14207031
  %v1573 = vmul.f32 %v1572, %v1562
  %v1574 = vadd.f32 %v1573, 0.19993454
  %v1575 = vmul.f32 %v1574, %v1562
  %v1576 = vadd.f32 %v1575, -0.33333147
  %v1577 = vmul.f32 %v1576, %v1562
  %v1578 = vmul.f32 %v1577, %v1561
  %v1579 = vadd.f32 %v1578, %v1561
  %vm1580 = vcmp.gt.f32.partialorder %v1557, %v1556
  %v1581 = vsub.f32 1.5707964, %v1579
  %v1582 = vsel %vm1580, %v1581, %v1579
  %vm1583 = vcmp.lt.f32.partialorder %v710, 0.0
  %v1584 = vsub.f32 3.1415927, %v1582
  %v1585 = vsel %vm1583, %v1584, %v1582
  %vm1586 = vcmp.lt.s32.totalorder %v710, 0
  %v1587 = vsel %vm1586, 3.1415927, 0.0
  %vm1588 = vcmp.eq.f32.partialorder %v742, 0.0
  %v1589 = vsel %vm1588, %v1587, %v1585
  %vm1590 = vcmp.ne.f32.partialorder %v710, %v710
  %vm1591 = vcmp.ne.f32.partialorder %v742, %v742
  %vm1592 = vmor %vm1590, %vm1591
  %v1593 = vsel %vm1592, nan, %v1589
  %vm1594 = vcmp.lt.f32.partialorder %v710, 0.0
  %v1595 = vsel %vm1594, 2.3561945, 0.7853982
  %vm1596 = vcmp.eq.s32.totalorder %v1556, inf
  %vm1597 = vcmp.eq.s32.totalorder %v1557, inf
  %vm1598 = vmand %vm1596, %vm1597
  %v1599 = vsel %vm1598, %v1595, %v1593
  %v1600 = vand.u32 2147483647, %v1599
  %v1601 = vand.u32 %v742, 2147483648
  %v1602 = vor.u32 %v1600, %v1601
  %v1603 = vand.u32 2147483647, %v711
  %v1604 = vand.u32 2147483647, %v743
  %v1605 = vmin.f32 %v1603, %v1604
  %v1606 = vmax.f32 %v1603, %v1604
  %v1607 = vrcp.pop %v1606
  %v1608 = vmul.f32 %v1605, %v1607
  %v1609 = vmul.f32 %v1608, %v1608
  %v1610 = vmul.f32 0.002785687, %v1609
  %v1611 = vadd.f32 %v1610, -0.015866
  %v1612 = vmul.f32 %v1611, %v1609
  %v1613 = vadd.f32 %v1612, 0.04247222
  %v1614 = vmul.f32 %v1613, %v1609
  %v1615 = vadd.f32 %v1614, -0.074975304
  %v1616 = vmul.f32 %v1615, %v1609
  %v1617 = vadd.f32 %v1616, 0.1064488
  %v1618 = vmul.f32 %v1617, %v1609
  %v1619 = vadd.f32 %v1618, -0.14207031
  %v1620 = vmul.f32 %v1619, %v1609
  %v1621 = vadd.f32 %v1620, 0.19993454
  %v1622 = vmul.f32 %v1621, %v1609
  %v1623 = vadd.f32 %v1622, -0.33333147
  %v1624 = vmul.f32 %v1623, %v1609
  %v1625 = vmul.f32 %v1624, %v1608
  %v1626 = vadd.f32 %v1625, %v1608
  %vm1627 = vcmp.gt.f32.partialorder %v1604, %v1603
  %v1628 = vsub.f32 1.5707964, %v1626
  %v1629 = vsel %vm1627, %v1628, %v1626
  %vm1630 = vcmp.lt.f32.partialorder %v711, 0.0
  %v1631 = vsub.f32 3.1415927, %v1629
  %v1632 = vsel %vm1630, %v1631, %v1629
  %vm1633 = vcmp.lt.s32.totalorder %v711, 0
  %v1634 = vsel %vm1633, 3.1415927, 0.0
  %vm1635 = vcmp.eq.f32.partialorder %v743, 0.0
  %v1636 = vsel %vm1635, %v1634, %v1632
  %vm1637 = vcmp.ne.f32.partialorder %v711, %v711
  %vm1638 = vcmp.ne.f32.partialorder %v743, %v743
  %vm1639 = vmor %vm1637, %vm1638
  %v1640 = vsel %vm1639, nan, %v1636
  %vm1641 = vcmp.lt.f32.partialorder %v711, 0.0
  %v1642 = vsel %vm1641, 2.3561945, 0.7853982
  %vm1643 = vcmp.eq.s32.totalorder %v1603, inf
  %vm1644 = vcmp.eq.s32.totalorder %v1604, inf
  %vm1645 = vmand %vm1643, %vm1644
  %v1646 = vsel %vm1645, %v1642, %v1640
  %v1647 = vand.u32 2147483647, %v1646
  %v1648 = vand.u32 %v743, 2147483648
  %v1649 = vor.u32 %v1647, %v1648
  %v1650 = vand.u32 2147483647, %v712
  %v1651 = vand.u32 2147483647, %v744
  %v1652 = vmin.f32 %v1650, %v1651
  %v1653 = vmax.f32 %v1650, %v1651
  %v1654 = vrcp.pop %v1653
  %v1655 = vmul.f32 %v1652, %v1654
  %v1656 = vmul.f32 %v1655, %v1655
  %v1657 = vmul.f32 0.002785687, %v1656
  %v1658 = vadd.f32 %v1657, -0.015866
  %v1659 = vmul.f32 %v1658, %v1656
  %v1660 = vadd.f32 %v1659, 0.04247222
  %v1661 = vmul.f32 %v1660, %v1656
  %v1662 = vadd.f32 %v1661, -0.074975304
  %v1663 = vmul.f32 %v1662, %v1656
  %v1664 = vadd.f32 %v1663, 0.1064488
  %v1665 = vmul.f32 %v1664, %v1656
  %v1666 = vadd.f32 %v1665, -0.14207031
  %v1667 = vmul.f32 %v1666, %v1656
  %v1668 = vadd.f32 %v1667, 0.19993454
  %v1669 = vmul.f32 %v1668, %v1656
  %v1670 = vadd.f32 %v1669, -0.33333147
  %v1671 = vmul.f32 %v1670, %v1656
  %v1672 = vmul.f32 %v1671, %v1655
  %v1673 = vadd.f32 %v1672, %v1655
  %vm1674 = vcmp.gt.f32.partialorder %v1651, %v1650
  %v1675 = vsub.f32 1.5707964, %v1673
  %v1676 = vsel %vm1674, %v1675, %v1673
  %vm1677 = vcmp.lt.f32.partialorder %v712, 0.0
  %v1678 = vsub.f32 3.1415927, %v1676
  %v1679 = vsel %vm1677, %v1678, %v1676
  %vm1680 = vcmp.lt.s32.totalorder %v712, 0
  %v1681 = vsel %vm1680, 3.1415927, 0.0
  %vm1682 = vcmp.eq.f32.partialorder %v744, 0.0
  %v1683 = vsel %vm1682, %v1681, %v1679
  %vm1684 = vcmp.ne.f32.partialorder %v712, %v712
  %vm1685 = vcmp.ne.f32.partialorder %v744, %v744
  %vm1686 = vmor %vm1684, %vm1685
  %v1687 = vsel %vm1686, nan, %v1683
  %vm1688 = vcmp.lt.f32.partialorder %v712, 0.0
  %v1689 = vsel %vm1688, 2.3561945, 0.7853982
  %vm1690 = vcmp.eq.s32.totalorder %v1650, inf
  %vm1691 = vcmp.eq.s32.totalorder %v1651, inf
  %vm1692 = vmand %vm1690, %vm1691
  %v1693 = vsel %vm1692, %v1689, %v1687
  %v1694 = vand.u32 2147483647, %v1693
  %v1695 = vand.u32 %v744, 2147483648
  %v1696 = vor.u32 %v1694, %v1695
  %v1697 = vand.u32 2147483647, %v713
  %v1698 = vand.u32 2147483647, %v745
  %v1699 = vmin.f32 %v1697, %v1698
  %v1700 = vmax.f32 %v1697, %v1698
  %v1701 = vrcp.pop %v1700
  %v1702 = vmul.f32 %v1699, %v1701
  %v1703 = vmul.f32 %v1702, %v1702
  %v1704 = vmul.f32 0.002785687, %v1703
  %v1705 = vadd.f32 %v1704, -0.015866
  %v1706 = vmul.f32 %v1705, %v1703
  %v1707 = vadd.f32 %v1706, 0.04247222
  %v1708 = vmul.f32 %v1707, %v1703
  %v1709 = vadd.f32 %v1708, -0.074975304
  %v1710 = vmul.f32 %v1709, %v1703
  %v1711 = vadd.f32 %v1710, 0.1064488
  %v1712 = vmul.f32 %v1711, %v1703
  %v1713 = vadd.f32 %v1712, -0.14207031
  %v1714 = vmul.f32 %v1713, %v1703
  %v1715 = vadd.f32 %v1714, 0.19993454
  %v1716 = vmul.f32 %v1715, %v1703
  %v1717 = vadd.f32 %v1716, -0.33333147
  %v1718 = vmul.f32 %v1717, %v1703
  %v1719 = vmul.f32 %v1718, %v1702
  %v1720 = vadd.f32 %v1719, %v1702
  %vm1721 = vcmp.gt.f32.partialorder %v1698, %v1697
  %v1722 = vsub.f32 1.5707964, %v1720
  %v1723 = vsel %vm1721, %v1722, %v1720
  %vm1724 = vcmp.lt.f32.partialorder %v713, 0.0
  %v1725 = vsub.f32 3.1415927, %v1723
  %v1726 = vsel %vm1724, %v1725, %v1723
  %vm1727 = vcmp.lt.s32.totalorder %v713, 0
  %v1728 = vsel %vm1727, 3.1415927, 0.0
  %vm1729 = vcmp.eq.f32.partialorder %v745, 0.0
  %v1730 = vsel %vm1729, %v1728, %v1726
  %vm1731 = vcmp.ne.f32.partialorder %v713, %v713
  %vm1732 = vcmp.ne.f32.partialorder %v745, %v745
  %vm1733 = vmor %vm1731, %vm1732
  %v1734 = vsel %vm1733, nan, %v1730
  %vm1735 = vcmp.lt.f32.partialorder %v713, 0.0
  %v1736 = vsel %vm1735, 2.3561945, 0.7853982
  %vm1737 = vcmp.eq.s32.totalorder %v1697, inf
  %vm1738 = vcmp.eq.s32.totalorder %v1698, inf
  %vm1739 = vmand %vm1737, %vm1738
  %v1740 = vsel %vm1739, %v1736, %v1734
  %v1741 = vand.u32 2147483647, %v1740
  %v1742 = vand.u32 %v745, 2147483648
  %v1743 = vor.u32 %v1741, %v1742
  %v1744 = vand.u32 2147483647, %v714
  %v1745 = vand.u32 2147483647, %v746
  %v1746 = vmin.f32 %v1744, %v1745
  %v1747 = vmax.f32 %v1744, %v1745
  %v1748 = vrcp.pop %v1747
  %v1749 = vmul.f32 %v1746, %v1748
  %v1750 = vmul.f32 %v1749, %v1749
  %v1751 = vmul.f32 0.002785687, %v1750
  %v1752 = vadd.f32 %v1751, -0.015866
  %v1753 = vmul.f32 %v1752, %v1750
  %v1754 = vadd.f32 %v1753, 0.04247222
  %v1755 = vmul.f32 %v1754, %v1750
  %v1756 = vadd.f32 %v1755, -0.074975304
  %v1757 = vmul.f32 %v1756, %v1750
  %v1758 = vadd.f32 %v1757, 0.1064488
  %v1759 = vmul.f32 %v1758, %v1750
  %v1760 = vadd.f32 %v1759, -0.14207031
  %v1761 = vmul.f32 %v1760, %v1750
  %v1762 = vadd.f32 %v1761, 0.19993454
  %v1763 = vmul.f32 %v1762, %v1750
  %v1764 = vadd.f32 %v1763, -0.33333147
  %v1765 = vmul.f32 %v1764, %v1750
  %v1766 = vmul.f32 %v1765, %v1749
  %v1767 = vadd.f32 %v1766, %v1749
  %vm1768 = vcmp.gt.f32.partialorder %v1745, %v1744
  %v1769 = vsub.f32 1.5707964, %v1767
  %v1770 = vsel %vm1768, %v1769, %v1767
  %vm1771 = vcmp.lt.f32.partialorder %v714, 0.0
  %v1772 = vsub.f32 3.1415927, %v1770
  %v1773 = vsel %vm1771, %v1772, %v1770
  %vm1774 = vcmp.lt.s32.totalorder %v714, 0
  %v1775 = vsel %vm1774, 3.1415927, 0.0
  %vm1776 = vcmp.eq.f32.partialorder %v746, 0.0
  %v1777 = vsel %vm1776, %v1775, %v1773
  %vm1778 = vcmp.ne.f32.partialorder %v714, %v714
  %vm1779 = vcmp.ne.f32.partialorder %v746, %v746
  %vm1780 = vmor %vm1778, %vm1779
  %v1781 = vsel %vm1780, nan, %v1777
  %vm1782 = vcmp.lt.f32.partialorder %v714, 0.0
  %v1783 = vsel %vm1782, 2.3561945, 0.7853982
  %vm1784 = vcmp.eq.s32.totalorder %v1744, inf
  %vm1785 = vcmp.eq.s32.totalorder %v1745, inf
  %vm1786 = vmand %vm1784, %vm1785
  %v1787 = vsel %vm1786, %v1783, %v1781
  %v1788 = vand.u32 2147483647, %v1787
  %v1789 = vand.u32 %v746, 2147483648
  %v1790 = vor.u32 %v1788, %v1789
  %v1791 = vand.u32 2147483647, %v715
  %v1792 = vand.u32 2147483647, %v747
  %v1793 = vmin.f32 %v1791, %v1792
  %v1794 = vmax.f32 %v1791, %v1792
  %v1795 = vrcp.pop %v1794
  %v1796 = vmul.f32 %v1793, %v1795
  %v1797 = vmul.f32 %v1796, %v1796
  %v1798 = vmul.f32 0.002785687, %v1797
  %v1799 = vadd.f32 %v1798, -0.015866
  %v1800 = vmul.f32 %v1799, %v1797
  %v1801 = vadd.f32 %v1800, 0.04247222
  %v1802 = vmul.f32 %v1801, %v1797
  %v1803 = vadd.f32 %v1802, -0.074975304
  %v1804 = vmul.f32 %v1803, %v1797
  %v1805 = vadd.f32 %v1804, 0.1064488
  %v1806 = vmul.f32 %v1805, %v1797
  %v1807 = vadd.f32 %v1806, -0.14207031
  %v1808 = vmul.f32 %v1807, %v1797
  %v1809 = vadd.f32 %v1808, 0.19993454
  %v1810 = vmul.f32 %v1809, %v1797
  %v1811 = vadd.f32 %v1810, -0.33333147
  %v1812 = vmul.f32 %v1811, %v1797
  %v1813 = vmul.f32 %v1812, %v1796
  %v1814 = vadd.f32 %v1813, %v1796
  %vm1815 = vcmp.gt.f32.partialorder %v1792, %v1791
  %v1816 = vsub.f32 1.5707964, %v1814
  %v1817 = vsel %vm1815, %v1816, %v1814
  %vm1818 = vcmp.lt.f32.partialorder %v715, 0.0
  %v1819 = vsub.f32 3.1415927, %v1817
  %v1820 = vsel %vm1818, %v1819, %v1817
  %vm1821 = vcmp.lt.s32.totalorder %v715, 0
  %v1822 = vsel %vm1821, 3.1415927, 0.0
  %vm1823 = vcmp.eq.f32.partialorder %v747, 0.0
  %v1824 = vsel %vm1823, %v1822, %v1820
  %vm1825 = vcmp.ne.f32.partialorder %v715, %v715
  %vm1826 = vcmp.ne.f32.partialorder %v747, %v747
  %vm1827 = vmor %vm1825, %vm1826
  %v1828 = vsel %vm1827, nan, %v1824
  %vm1829 = vcmp.lt.f32.partialorder %v715, 0.0
  %v1830 = vsel %vm1829, 2.3561945, 0.7853982
  %vm1831 = vcmp.eq.s32.totalorder %v1791, inf
  %vm1832 = vcmp.eq.s32.totalorder %v1792, inf
  %vm1833 = vmand %vm1831, %vm1832
  %v1834 = vsel %vm1833, %v1830, %v1828
  %v1835 = vand.u32 2147483647, %v1834
  %v1836 = vand.u32 %v747, 2147483648
  %v1837 = vor.u32 %v1835, %v1836
  %v1838 = vand.u32 2147483647, %v716
  %v1839 = vand.u32 2147483647, %v748
  %v1840 = vmin.f32 %v1838, %v1839
  %v1841 = vmax.f32 %v1838, %v1839
  %v1842 = vrcp.pop %v1841
  %v1843 = vmul.f32 %v1840, %v1842
  %v1844 = vmul.f32 %v1843, %v1843
  %v1845 = vmul.f32 0.002785687, %v1844
  %v1846 = vadd.f32 %v1845, -0.015866
  %v1847 = vmul.f32 %v1846, %v1844
  %v1848 = vadd.f32 %v1847, 0.04247222
  %v1849 = vmul.f32 %v1848, %v1844
  %v1850 = vadd.f32 %v1849, -0.074975304
  %v1851 = vmul.f32 %v1850, %v1844
  %v1852 = vadd.f32 %v1851, 0.1064488
  %v1853 = vmul.f32 %v1852, %v1844
  %v1854 = vadd.f32 %v1853, -0.14207031
  %v1855 = vmul.f32 %v1854, %v1844
  %v1856 = vadd.f32 %v1855, 0.19993454
  %v1857 = vmul.f32 %v1856, %v1844
  %v1858 = vadd.f32 %v1857, -0.33333147
  %v1859 = vmul.f32 %v1858, %v1844
  %v1860 = vmul.f32 %v1859, %v1843
  %v1861 = vadd.f32 %v1860, %v1843
  %vm1862 = vcmp.gt.f32.partialorder %v1839, %v1838
  %v1863 = vsub.f32 1.5707964, %v1861
  %v1864 = vsel %vm1862, %v1863, %v1861
  %vm1865 = vcmp.lt.f32.partialorder %v716, 0.0
  %v1866 = vsub.f32 3.1415927, %v1864
  %v1867 = vsel %vm1865, %v1866, %v1864
  %vm1868 = vcmp.lt.s32.totalorder %v716, 0
  %v1869 = vsel %vm1868, 3.1415927, 0.0
  %vm1870 = vcmp.eq.f32.partialorder %v748, 0.0
  %v1871 = vsel %vm1870, %v1869, %v1867
  %vm1872 = vcmp.ne.f32.partialorder %v716, %v716
  %vm1873 = vcmp.ne.f32.partialorder %v748, %v748
  %vm1874 = vmor %vm1872, %vm1873
  %v1875 = vsel %vm1874, nan, %v1871
  %vm1876 = vcmp.lt.f32.partialorder %v716, 0.0
  %v1877 = vsel %vm1876, 2.3561945, 0.7853982
  %vm1878 = vcmp.eq.s32.totalorder %v1838, inf
  %vm1879 = vcmp.eq.s32.totalorder %v1839, inf
  %vm1880 = vmand %vm1878, %vm1879
  %v1881 = vsel %vm1880, %v1877, %v1875
  %v1882 = vand.u32 2147483647, %v1881
  %v1883 = vand.u32 %v748, 2147483648
  %v1884 = vor.u32 %v1882, %v1883
  %v1885 = vand.u32 2147483647, %v717
  %v1886 = vand.u32 2147483647, %v749
  %v1887 = vmin.f32 %v1885, %v1886
  %v1888 = vmax.f32 %v1885, %v1886
  %v1889 = vrcp.pop %v1888
  %v1890 = vmul.f32 %v1887, %v1889
  %v1891 = vmul.f32 %v1890, %v1890
  %v1892 = vmul.f32 0.002785687, %v1891
  %v1893 = vadd.f32 %v1892, -0.015866
  %v1894 = vmul.f32 %v1893, %v1891
  %v1895 = vadd.f32 %v1894, 0.04247222
  %v1896 = vmul.f32 %v1895, %v1891
  %v1897 = vadd.f32 %v1896, -0.074975304
  %v1898 = vmul.f32 %v1897, %v1891
  %v1899 = vadd.f32 %v1898, 0.1064488
  %v1900 = vmul.f32 %v1899, %v1891
  %v1901 = vadd.f32 %v1900, -0.14207031
  %v1902 = vmul.f32 %v1901, %v1891
  %v1903 = vadd.f32 %v1902, 0.19993454
  %v1904 = vmul.f32 %v1903, %v1891
  %v1905 = vadd.f32 %v1904, -0.33333147
  %v1906 = vmul.f32 %v1905, %v1891
  %v1907 = vmul.f32 %v1906, %v1890
  %v1908 = vadd.f32 %v1907, %v1890
  %vm1909 = vcmp.gt.f32.partialorder %v1886, %v1885
  %v1910 = vsub.f32 1.5707964, %v1908
  %v1911 = vsel %vm1909, %v1910, %v1908
  %vm1912 = vcmp.lt.f32.partialorder %v717, 0.0
  %v1913 = vsub.f32 3.1415927, %v1911
  %v1914 = vsel %vm1912, %v1913, %v1911
  %vm1915 = vcmp.lt.s32.totalorder %v717, 0
  %v1916 = vsel %vm1915, 3.1415927, 0.0
  %vm1917 = vcmp.eq.f32.partialorder %v749, 0.0
  %v1918 = vsel %vm1917, %v1916, %v1914
  %vm1919 = vcmp.ne.f32.partialorder %v717, %v717
  %vm1920 = vcmp.ne.f32.partialorder %v749, %v749
  %vm1921 = vmor %vm1919, %vm1920
  %v1922 = vsel %vm1921, nan, %v1918
  %vm1923 = vcmp.lt.f32.partialorder %v717, 0.0
  %v1924 = vsel %vm1923, 2.3561945, 0.7853982
  %vm1925 = vcmp.eq.s32.totalorder %v1885, inf
  %vm1926 = vcmp.eq.s32.totalorder %v1886, inf
  %vm1927 = vmand %vm1925, %vm1926
  %v1928 = vsel %vm1927, %v1924, %v1922
  %v1929 = vand.u32 2147483647, %v1928
  %v1930 = vand.u32 %v749, 2147483648
  %v1931 = vor.u32 %v1929, %v1930
  %v1932 = vand.u32 2147483647, %v718
  %v1933 = vand.u32 2147483647, %v750
  %v1934 = vmin.f32 %v1932, %v1933
  %v1935 = vmax.f32 %v1932, %v1933
  %v1936 = vrcp.pop %v1935
  %v1937 = vmul.f32 %v1934, %v1936
  %v1938 = vmul.f32 %v1937, %v1937
  %v1939 = vmul.f32 0.002785687, %v1938
  %v1940 = vadd.f32 %v1939, -0.015866
  %v1941 = vmul.f32 %v1940, %v1938
  %v1942 = vadd.f32 %v1941, 0.04247222
  %v1943 = vmul.f32 %v1942, %v1938
  %v1944 = vadd.f32 %v1943, -0.074975304
  %v1945 = vmul.f32 %v1944, %v1938
  %v1946 = vadd.f32 %v1945, 0.1064488
  %v1947 = vmul.f32 %v1946, %v1938
  %v1948 = vadd.f32 %v1947, -0.14207031
  %v1949 = vmul.f32 %v1948, %v1938
  %v1950 = vadd.f32 %v1949, 0.19993454
  %v1951 = vmul.f32 %v1950, %v1938
  %v1952 = vadd.f32 %v1951, -0.33333147
  %v1953 = vmul.f32 %v1952, %v1938
  %v1954 = vmul.f32 %v1953, %v1937
  %v1955 = vadd.f32 %v1954, %v1937
  %vm1956 = vcmp.gt.f32.partialorder %v1933, %v1932
  %v1957 = vsub.f32 1.5707964, %v1955
  %v1958 = vsel %vm1956, %v1957, %v1955
  %vm1959 = vcmp.lt.f32.partialorder %v718, 0.0
  %v1960 = vsub.f32 3.1415927, %v1958
  %v1961 = vsel %vm1959, %v1960, %v1958
  %vm1962 = vcmp.lt.s32.totalorder %v718, 0
  %v1963 = vsel %vm1962, 3.1415927, 0.0
  %vm1964 = vcmp.eq.f32.partialorder %v750, 0.0
  %v1965 = vsel %vm1964, %v1963, %v1961
  %vm1966 = vcmp.ne.f32.partialorder %v718, %v718
  %vm1967 = vcmp.ne.f32.partialorder %v750, %v750
  %vm1968 = vmor %vm1966, %vm1967
  %v1969 = vsel %vm1968, nan, %v1965
  %vm1970 = vcmp.lt.f32.partialorder %v718, 0.0
  %v1971 = vsel %vm1970, 2.3561945, 0.7853982
  %vm1972 = vcmp.eq.s32.totalorder %v1932, inf
  %vm1973 = vcmp.eq.s32.totalorder %v1933, inf
  %vm1974 = vmand %vm1972, %vm1973
  %v1975 = vsel %vm1974, %v1971, %v1969
  %v1976 = vand.u32 2147483647, %v1975
  %v1977 = vand.u32 %v750, 2147483648
  %v1978 = vor.u32 %v1976, %v1977
  %v1979 = vand.u32 2147483647, %v719
  %v1980 = vand.u32 2147483647, %v751
  %v1981 = vmin.f32 %v1979, %v1980
  %v1982 = vmax.f32 %v1979, %v1980
  %v1983 = vrcp.pop %v1982
  %v1984 = vmul.f32 %v1981, %v1983
  %v1985 = vmul.f32 %v1984, %v1984
  %v1986 = vmul.f32 0.002785687, %v1985
  %v1987 = vadd.f32 %v1986, -0.015866
  %v1988 = vmul.f32 %v1987, %v1985
  %v1989 = vadd.f32 %v1988, 0.04247222
  %v1990 = vmul.f32 %v1989, %v1985
  %v1991 = vadd.f32 %v1990, -0.074975304
  %v1992 = vmul.f32 %v1991, %v1985
  %v1993 = vadd.f32 %v1992, 0.1064488
  %v1994 = vmul.f32 %v1993, %v1985
  %v1995 = vadd.f32 %v1994, -0.14207031
  %v1996 = vmul.f32 %v1995, %v1985
  %v1997 = vadd.f32 %v1996, 0.19993454
  %v1998 = vmul.f32 %v1997, %v1985
  %v1999 = vadd.f32 %v1998, -0.33333147
  %v2000 = vmul.f32 %v1999, %v1985
  %v2001 = vmul.f32 %v2000, %v1984
  %v2002 = vadd.f32 %v2001, %v1984
  %vm2003 = vcmp.gt.f32.partialorder %v1980, %v1979
  %v2004 = vsub.f32 1.5707964, %v2002
  %v2005 = vsel %vm2003, %v2004, %v2002
  %vm2006 = vcmp.lt.f32.partialorder %v719, 0.0
  %v2007 = vsub.f32 3.1415927, %v2005
  %v2008 = vsel %vm2006, %v2007, %v2005
  %vm2009 = vcmp.lt.s32.totalorder %v719, 0
  %v2010 = vsel %vm2009, 3.1415927, 0.0
  %vm2011 = vcmp.eq.f32.partialorder %v751, 0.0
  %v2012 = vsel %vm2011, %v2010, %v2008
  %vm2013 = vcmp.ne.f32.partialorder %v719, %v719
  %vm2014 = vcmp.ne.f32.partialorder %v751, %v751
  %vm2015 = vmor %vm2013, %vm2014
  %v2016 = vsel %vm2015, nan, %v2012
  %vm2017 = vcmp.lt.f32.partialorder %v719, 0.0
  %v2018 = vsel %vm2017, 2.3561945, 0.7853982
  %vm2019 = vcmp.eq.s32.totalorder %v1979, inf
  %vm2020 = vcmp.eq.s32.totalorder %v1980, inf
  %vm2021 = vmand %vm2019, %vm2020
  %v2022 = vsel %vm2021, %v2018, %v2016
  %v2023 = vand.u32 2147483647, %v2022
  %v2024 = vand.u32 %v751, 2147483648
  %v2025 = vor.u32 %v2023, %v2024
  %v2026 = vand.u32 2147483647, %v720
  %v2027 = vand.u32 2147483647, %v752
  %v2028 = vmin.f32 %v2026, %v2027
  %v2029 = vmax.f32 %v2026, %v2027
  %v2030 = vrcp.pop %v2029
  %v2031 = vmul.f32 %v2028, %v2030
  %v2032 = vmul.f32 %v2031, %v2031
  %v2033 = vmul.f32 0.002785687, %v2032
  %v2034 = vadd.f32 %v2033, -0.015866
  %v2035 = vmul.f32 %v2034, %v2032
  %v2036 = vadd.f32 %v2035, 0.04247222
  %v2037 = vmul.f32 %v2036, %v2032
  %v2038 = vadd.f32 %v2037, -0.074975304
  %v2039 = vmul.f32 %v2038, %v2032
  %v2040 = vadd.f32 %v2039, 0.1064488
  %v2041 = vmul.f32 %v2040, %v2032
  %v2042 = vadd.f32 %v2041, -0.14207031
  %v2043 = vmul.f32 %v2042, %v2032
  %v2044 = vadd.f32 %v2043, 0.19993454
  %v2045 = vmul.f32 %v2044, %v2032
  %v2046 = vadd.f32 %v2045, -0.33333147
  %v2047 = vmul.f32 %v2046, %v2032
  %v2048 = vmul.f32 %v2047, %v2031
  %v2049 = vadd.f32 %v2048, %v2031
  %vm2050 = vcmp.gt.f32.partialorder %v2027, %v2026
  %v2051 = vsub.f32 1.5707964, %v2049
  %v2052 = vsel %vm2050, %v2051, %v2049
  %vm2053 = vcmp.lt.f32.partialorder %v720, 0.0
  %v2054 = vsub.f32 3.1415927, %v2052
  %v2055 = vsel %vm2053, %v2054, %v2052
  %vm2056 = vcmp.lt.s32.totalorder %v720, 0
  %v2057 = vsel %vm2056, 3.1415927, 0.0
  %vm2058 = vcmp.eq.f32.partialorder %v752, 0.0
  %v2059 = vsel %vm2058, %v2057, %v2055
  %vm2060 = vcmp.ne.f32.partialorder %v720, %v720
  %vm2061 = vcmp.ne.f32.partialorder %v752, %v752
  %vm2062 = vmor %vm2060, %vm2061
  %v2063 = vsel %vm2062, nan, %v2059
  %vm2064 = vcmp.lt.f32.partialorder %v720, 0.0
  %v2065 = vsel %vm2064, 2.3561945, 0.7853982
  %vm2066 = vcmp.eq.s32.totalorder %v2026, inf
  %vm2067 = vcmp.eq.s32.totalorder %v2027, inf
  %vm2068 = vmand %vm2066, %vm2067
  %v2069 = vsel %vm2068, %v2065, %v2063
  %v2070 = vand.u32 2147483647, %v2069
  %v2071 = vand.u32 %v752, 2147483648
  %v2072 = vor.u32 %v2070, %v2071
  %v2073 = vand.u32 2147483647, %v721
  %v2074 = vand.u32 2147483647, %v753
  %v2075 = vmin.f32 %v2073, %v2074
  %v2076 = vmax.f32 %v2073, %v2074
  %v2077 = vrcp.pop %v2076
  %v2078 = vmul.f32 %v2075, %v2077
  %v2079 = vmul.f32 %v2078, %v2078
  %v2080 = vmul.f32 0.002785687, %v2079
  %v2081 = vadd.f32 %v2080, -0.015866
  %v2082 = vmul.f32 %v2081, %v2079
  %v2083 = vadd.f32 %v2082, 0.04247222
  %v2084 = vmul.f32 %v2083, %v2079
  %v2085 = vadd.f32 %v2084, -0.074975304
  %v2086 = vmul.f32 %v2085, %v2079
  %v2087 = vadd.f32 %v2086, 0.1064488
  %v2088 = vmul.f32 %v2087, %v2079
  %v2089 = vadd.f32 %v2088, -0.14207031
  %v2090 = vmul.f32 %v2089, %v2079
  %v2091 = vadd.f32 %v2090, 0.19993454
  %v2092 = vmul.f32 %v2091, %v2079
  %v2093 = vadd.f32 %v2092, -0.33333147
  %v2094 = vmul.f32 %v2093, %v2079
  %v2095 = vmul.f32 %v2094, %v2078
  %v2096 = vadd.f32 %v2095, %v2078
  %vm2097 = vcmp.gt.f32.partialorder %v2074, %v2073
  %v2098 = vsub.f32 1.5707964, %v2096
  %v2099 = vsel %vm2097, %v2098, %v2096
  %vm2100 = vcmp.lt.f32.partialorder %v721, 0.0
  %v2101 = vsub.f32 3.1415927, %v2099
  %v2102 = vsel %vm2100, %v2101, %v2099
  %vm2103 = vcmp.lt.s32.totalorder %v721, 0
  %v2104 = vsel %vm2103, 3.1415927, 0.0
  %vm2105 = vcmp.eq.f32.partialorder %v753, 0.0
  %v2106 = vsel %vm2105, %v2104, %v2102
  %vm2107 = vcmp.ne.f32.partialorder %v721, %v721
  %vm2108 = vcmp.ne.f32.partialorder %v753, %v753
  %vm2109 = vmor %vm2107, %vm2108
  %v2110 = vsel %vm2109, nan, %v2106
  %vm2111 = vcmp.lt.f32.partialorder %v721, 0.0
  %v2112 = vsel %vm2111, 2.3561945, 0.7853982
  %vm2113 = vcmp.eq.s32.totalorder %v2073, inf
  %vm2114 = vcmp.eq.s32.totalorder %v2074, inf
  %vm2115 = vmand %vm2113, %vm2114
  %v2116 = vsel %vm2115, %v2112, %v2110
  %v2117 = vand.u32 2147483647, %v2116
  %v2118 = vand.u32 %v753, 2147483648
  %v2119 = vor.u32 %v2117, %v2118
  %v2120 = vand.u32 2147483647, %v722
  %v2121 = vand.u32 2147483647, %v754
  %v2122 = vmin.f32 %v2120, %v2121
  %v2123 = vmax.f32 %v2120, %v2121
  %v2124 = vrcp.pop %v2123
  %v2125 = vmul.f32 %v2122, %v2124
  %v2126 = vmul.f32 %v2125, %v2125
  %v2127 = vmul.f32 0.002785687, %v2126
  %v2128 = vadd.f32 %v2127, -0.015866
  %v2129 = vmul.f32 %v2128, %v2126
  %v2130 = vadd.f32 %v2129, 0.04247222
  %v2131 = vmul.f32 %v2130, %v2126
  %v2132 = vadd.f32 %v2131, -0.074975304
  %v2133 = vmul.f32 %v2132, %v2126
  %v2134 = vadd.f32 %v2133, 0.1064488
  %v2135 = vmul.f32 %v2134, %v2126
  %v2136 = vadd.f32 %v2135, -0.14207031
  %v2137 = vmul.f32 %v2136, %v2126
  %v2138 = vadd.f32 %v2137, 0.19993454
  %v2139 = vmul.f32 %v2138, %v2126
  %v2140 = vadd.f32 %v2139, -0.33333147
  %v2141 = vmul.f32 %v2140, %v2126
  %v2142 = vmul.f32 %v2141, %v2125
  %v2143 = vadd.f32 %v2142, %v2125
  %vm2144 = vcmp.gt.f32.partialorder %v2121, %v2120
  %v2145 = vsub.f32 1.5707964, %v2143
  %v2146 = vsel %vm2144, %v2145, %v2143
  %vm2147 = vcmp.lt.f32.partialorder %v722, 0.0
  %v2148 = vsub.f32 3.1415927, %v2146
  %v2149 = vsel %vm2147, %v2148, %v2146
  %vm2150 = vcmp.lt.s32.totalorder %v722, 0
  %v2151 = vsel %vm2150, 3.1415927, 0.0
  %vm2152 = vcmp.eq.f32.partialorder %v754, 0.0
  %v2153 = vsel %vm2152, %v2151, %v2149
  %vm2154 = vcmp.ne.f32.partialorder %v722, %v722
  %vm2155 = vcmp.ne.f32.partialorder %v754, %v754
  %vm2156 = vmor %vm2154, %vm2155
  %v2157 = vsel %vm2156, nan, %v2153
  %vm2158 = vcmp.lt.f32.partialorder %v722, 0.0
  %v2159 = vsel %vm2158, 2.3561945, 0.7853982
  %vm2160 = vcmp.eq.s32.totalorder %v2120, inf
  %vm2161 = vcmp.eq.s32.totalorder %v2121, inf
  %vm2162 = vmand %vm2160, %vm2161
  %v2163 = vsel %vm2162, %v2159, %v2157
  %v2164 = vand.u32 2147483647, %v2163
  %v2165 = vand.u32 %v754, 2147483648
  %v2166 = vor.u32 %v2164, %v2165
  %v2167 = vand.u32 2147483647, %v723
  %v2168 = vand.u32 2147483647, %v755
  %v2169 = vmin.f32 %v2167, %v2168
  %v2170 = vmax.f32 %v2167, %v2168
  %v2171 = vrcp.pop %v2170
  %v2172 = vmul.f32 %v2169, %v2171
  %v2173 = vmul.f32 %v2172, %v2172
  %v2174 = vmul.f32 0.002785687, %v2173
  %v2175 = vadd.f32 %v2174, -0.015866
  %v2176 = vmul.f32 %v2175, %v2173
  %v2177 = vadd.f32 %v2176, 0.04247222
  %v2178 = vmul.f32 %v2177, %v2173
  %v2179 = vadd.f32 %v2178, -0.074975304
  %v2180 = vmul.f32 %v2179, %v2173
  %v2181 = vadd.f32 %v2180, 0.1064488
  %v2182 = vmul.f32 %v2181, %v2173
  %v2183 = vadd.f32 %v2182, -0.14207031
  %v2184 = vmul.f32 %v2183, %v2173
  %v2185 = vadd.f32 %v2184, 0.19993454
  %v2186 = vmul.f32 %v2185, %v2173
  %v2187 = vadd.f32 %v2186, -0.33333147
  %v2188 = vmul.f32 %v2187, %v2173
  %v2189 = vmul.f32 %v2188, %v2172
  %v2190 = vadd.f32 %v2189, %v2172
  %vm2191 = vcmp.gt.f32.partialorder %v2168, %v2167
  %v2192 = vsub.f32 1.5707964, %v2190
  %v2193 = vsel %vm2191, %v2192, %v2190
  %vm2194 = vcmp.lt.f32.partialorder %v723, 0.0
  %v2195 = vsub.f32 3.1415927, %v2193
  %v2196 = vsel %vm2194, %v2195, %v2193
  %vm2197 = vcmp.lt.s32.totalorder %v723, 0
  %v2198 = vsel %vm2197, 3.1415927, 0.0
  %vm2199 = vcmp.eq.f32.partialorder %v755, 0.0
  %v2200 = vsel %vm2199, %v2198, %v2196
  %vm2201 = vcmp.ne.f32.partialorder %v723, %v723
  %vm2202 = vcmp.ne.f32.partialorder %v755, %v755
  %vm2203 = vmor %vm2201, %vm2202
  %v2204 = vsel %vm2203, nan, %v2200
  %vm2205 = vcmp.lt.f32.partialorder %v723, 0.0
  %v2206 = vsel %vm2205, 2.3561945, 0.7853982
  %vm2207 = vcmp.eq.s32.totalorder %v2167, inf
  %vm2208 = vcmp.eq.s32.totalorder %v2168, inf
  %vm2209 = vmand %vm2207, %vm2208
  %v2210 = vsel %vm2209, %v2206, %v2204
  %v2211 = vand.u32 2147483647, %v2210
  %v2212 = vand.u32 %v755, 2147483648
  %v2213 = vor.u32 %v2211, %v2212
  %v2214 = vand.u32 2147483647, %v724
  %v2215 = vand.u32 2147483647, %v756
  %v2216 = vmin.f32 %v2214, %v2215
  %v2217 = vmax.f32 %v2214, %v2215
  %v2218 = vrcp.pop %v2217
  %v2219 = vmul.f32 %v2216, %v2218
  %v2220 = vmul.f32 %v2219, %v2219
  %v2221 = vmul.f32 0.002785687, %v2220
  %v2222 = vadd.f32 %v2221, -0.015866
  %v2223 = vmul.f32 %v2222, %v2220
  %v2224 = vadd.f32 %v2223, 0.04247222
  %v2225 = vmul.f32 %v2224, %v2220
  %v2226 = vadd.f32 %v2225, -0.074975304
  %v2227 = vmul.f32 %v2226, %v2220
  %v2228 = vadd.f32 %v2227, 0.1064488
  %v2229 = vmul.f32 %v2228, %v2220
  %v2230 = vadd.f32 %v2229, -0.14207031
  %v2231 = vmul.f32 %v2230, %v2220
  %v2232 = vadd.f32 %v2231, 0.19993454
  %v2233 = vmul.f32 %v2232, %v2220
  %v2234 = vadd.f32 %v2233, -0.33333147
  %v2235 = vmul.f32 %v2234, %v2220
  %v2236 = vmul.f32 %v2235, %v2219
  %v2237 = vadd.f32 %v2236, %v2219
  %vm2238 = vcmp.gt.f32.partialorder %v2215, %v2214
  %v2239 = vsub.f32 1.5707964, %v2237
  %v2240 = vsel %vm2238, %v2239, %v2237
  %vm2241 = vcmp.lt.f32.partialorder %v724, 0.0
  %v2242 = vsub.f32 3.1415927, %v2240
  %v2243 = vsel %vm2241, %v2242, %v2240
  %vm2244 = vcmp.lt.s32.totalorder %v724, 0
  %v2245 = vsel %vm2244, 3.1415927, 0.0
  %vm2246 = vcmp.eq.f32.partialorder %v756, 0.0
  %v2247 = vsel %vm2246, %v2245, %v2243
  %vm2248 = vcmp.ne.f32.partialorder %v724, %v724
  %vm2249 = vcmp.ne.f32.partialorder %v756, %v756
  %vm2250 = vmor %vm2248, %vm2249
  %v2251 = vsel %vm2250, nan, %v2247
  %vm2252 = vcmp.lt.f32.partialorder %v724, 0.0
  %v2253 = vsel %vm2252, 2.3561945, 0.7853982
  %vm2254 = vcmp.eq.s32.totalorder %v2214, inf
  %vm2255 = vcmp.eq.s32.totalorder %v2215, inf
  %vm2256 = vmand %vm2254, %vm2255
  %v2257 = vsel %vm2256, %v2253, %v2251
  %v2258 = vand.u32 2147483647, %v2257
  %v2259 = vand.u32 %v756, 2147483648
  %v2260 = vor.u32 %v2258, %v2259
  %v2261 = vlaneseq
  %v2262 = vshrl.u32 %v2261, 7
  %v2263 = vsub.s32 2, %v2262
  %v2264 = vrot.slane %v426, %v2263
  %v2265 = vsub.f32 %v803, %v2264
  %v2266 = vsub.f32 %v850, %v2264
  %v2267 = vsub.f32 %v897, %v2264
  %v2268 = vsub.f32 %v944, %v2264
  %v2269 = vsub.f32 %v991, %v2264
  %v2270 = vsub.f32 %v1038, %v2264
  %v2271 = vsub.f32 %v1085, %v2264
  %v2272 = vsub.f32 %v1132, %v2264
  %v2273 = vsub.f32 %v1179, %v2264
  %v2274 = vsub.f32 %v1226, %v2264
  %v2275 = vsub.f32 %v1273, %v2264
  %v2276 = vsub.f32 %v1320, %v2264
  %v2277 = vsub.f32 %v1367, %v2264
  %v2278 = vsub.f32 %v1414, %v2264
  %v2279 = vsub.f32 %v1461, %v2264
  %v2280 = vsub.f32 %v1508, %v2264
  %v2281 = vsub.f32 %v1555, %v2264
  %v2282 = vsub.f32 %v1602, %v2264
  %v2283 = vsub.f32 %v1649, %v2264
  %v2284 = vsub.f32 %v1696, %v2264
  %v2285 = vsub.f32 %v1743, %v2264
  %v2286 = vsub.f32 %v1790, %v2264
  %v2287 = vsub.f32 %v1837, %v2264
  %v2288 = vsub.f32 %v1884, %v2264
  %v2289 = vsub.f32 %v1931, %v2264
  %v2290 = vsub.f32 %v1978, %v2264
  %v2291 = vsub.f32 %v2025, %v2264
  %v2292 = vsub.f32 %v2072, %v2264
  %v2293 = vsub.f32 %v2119, %v2264
  %v2294 = vsub.f32 %v2166, %v2264
  %v2295 = vsub.f32 %v2213, %v2264
  %v2296 = vsub.f32 %v2260, %v2264
  %v2297 = vmul.f32 %v2265, 0.15915494
  %v2298 = vmul.f32 %v2266, 0.15915494
  %v2299 = vmul.f32 %v2267, 0.15915494
  %v2300 = vmul.f32 %v2268, 0.15915494
  %v2301 = vmul.f32 %v2269, 0.15915494
  %v2302 = vmul.f32 %v2270, 0.15915494
  %v2303 = vmul.f32 %v2271, 0.15915494
  %v2304 = vmul.f32 %v2272, 0.15915494
  %v2305 = vmul.f32 %v2273, 0.15915494
  %v2306 = vmul.f32 %v2274, 0.15915494
  %v2307 = vmul.f32 %v2275, 0.15915494
  %v2308 = vmul.f32 %v2276, 0.15915494
  %v2309 = vmul.f32 %v2277, 0.15915494
  %v2310 = vmul.f32 %v2278, 0.15915494
  %v2311 = vmul.f32 %v2279, 0.15915494
  %v2312 = vmul.f32 %v2280, 0.15915494
  %v2313 = vmul.f32 %v2281, 0.15915494
  %v2314 = vmul.f32 %v2282, 0.15915494
  %v2315 = vmul.f32 %v2283, 0.15915494
  %v2316 = vmul.f32 %v2284, 0.15915494
  %v2317 = vmul.f32 %v2285, 0.15915494
  %v2318 = vmul.f32 %v2286, 0.15915494
  %v2319 = vmul.f32 %v2287, 0.15915494
  %v2320 = vmul.f32 %v2288, 0.15915494
  %v2321 = vmul.f32 %v2289, 0.15915494
  %v2322 = vmul.f32 %v2290, 0.15915494
  %v2323 = vmul.f32 %v2291, 0.15915494
  %v2324 = vmul.f32 %v2292, 0.15915494
  %v2325 = vmul.f32 %v2293, 0.15915494
  %v2326 = vmul.f32 %v2294, 0.15915494
  %v2327 = vmul.f32 %v2295, 0.15915494
  %v2328 = vmul.f32 %v2296, 0.15915494
  %vm2329 = vcmp.ge.f32.partialorder %v2297, 0.0
  %vm2330 = vcmp.ge.f32.partialorder %v2298, 0.0
  %vm2331 = vcmp.ge.f32.partialorder %v2299, 0.0
  %vm2332 = vcmp.ge.f32.partialorder %v2300, 0.0
  %vm2333 = vcmp.ge.f32.partialorder %v2301, 0.0
  %vm2334 = vcmp.ge.f32.partialorder %v2302, 0.0
  %vm2335 = vcmp.ge.f32.partialorder %v2303, 0.0
  %vm2336 = vcmp.ge.f32.partialorder %v2304, 0.0
  %vm2337 = vcmp.ge.f32.partialorder %v2305, 0.0
  %vm2338 = vcmp.ge.f32.partialorder %v2306, 0.0
  %vm2339 = vcmp.ge.f32.partialorder %v2307, 0.0
  %vm2340 = vcmp.ge.f32.partialorder %v2308, 0.0
  %vm2341 = vcmp.ge.f32.partialorder %v2309, 0.0
  %vm2342 = vcmp.ge.f32.partialorder %v2310, 0.0
  %vm2343 = vcmp.ge.f32.partialorder %v2311, 0.0
  %vm2344 = vcmp.ge.f32.partialorder %v2312, 0.0
  %vm2345 = vcmp.ge.f32.partialorder %v2313, 0.0
  %vm2346 = vcmp.ge.f32.partialorder %v2314, 0.0
  %vm2347 = vcmp.ge.f32.partialorder %v2315, 0.0
  %vm2348 = vcmp.ge.f32.partialorder %v2316, 0.0
  %vm2349 = vcmp.ge.f32.partialorder %v2317, 0.0
  %vm2350 = vcmp.ge.f32.partialorder %v2318, 0.0
  %vm2351 = vcmp.ge.f32.partialorder %v2319, 0.0
  %vm2352 = vcmp.ge.f32.partialorder %v2320, 0.0
  %vm2353 = vcmp.ge.f32.partialorder %v2321, 0.0
  %vm2354 = vcmp.ge.f32.partialorder %v2322, 0.0
  %vm2355 = vcmp.ge.f32.partialorder %v2323, 0.0
  %vm2356 = vcmp.ge.f32.partialorder %v2324, 0.0
  %vm2357 = vcmp.ge.f32.partialorder %v2325, 0.0
  %vm2358 = vcmp.ge.f32.partialorder %v2326, 0.0
  %vm2359 = vcmp.ge.f32.partialorder %v2327, 0.0
  %vm2360 = vcmp.ge.f32.partialorder %v2328, 0.0
  %v2361 = vfloor.f32 %v2297
  %v2362 = vfloor.f32 %v2298
  %v2363 = vfloor.f32 %v2299
  %v2364 = vfloor.f32 %v2300
  %v2365 = vfloor.f32 %v2301
  %v2366 = vfloor.f32 %v2302
  %v2367 = vfloor.f32 %v2303
  %v2368 = vfloor.f32 %v2304
  %v2369 = vfloor.f32 %v2305
  %v2370 = vfloor.f32 %v2306
  %v2371 = vfloor.f32 %v2307
  %v2372 = vfloor.f32 %v2308
  %v2373 = vfloor.f32 %v2309
  %v2374 = vfloor.f32 %v2310
  %v2375 = vfloor.f32 %v2311
  %v2376 = vfloor.f32 %v2312
  %v2377 = vfloor.f32 %v2313
  %v2378 = vfloor.f32 %v2314
  %v2379 = vfloor.f32 %v2315
  %v2380 = vfloor.f32 %v2316
  %v2381 = vfloor.f32 %v2317
  %v2382 = vfloor.f32 %v2318
  %v2383 = vfloor.f32 %v2319
  %v2384 = vfloor.f32 %v2320
  %v2385 = vfloor.f32 %v2321
  %v2386 = vfloor.f32 %v2322
  %v2387 = vfloor.f32 %v2323
  %v2388 = vfloor.f32 %v2324
  %v2389 = vfloor.f32 %v2325
  %v2390 = vfloor.f32 %v2326
  %v2391 = vfloor.f32 %v2327
  %v2392 = vfloor.f32 %v2328
  %v2393 = vceil.f32 %v2297
  %v2394 = vceil.f32 %v2298
  %v2395 = vceil.f32 %v2299
  %v2396 = vceil.f32 %v2300
  %v2397 = vceil.f32 %v2301
  %v2398 = vceil.f32 %v2302
  %v2399 = vceil.f32 %v2303
  %v2400 = vceil.f32 %v2304
  %v2401 = vceil.f32 %v2305
  %v2402 = vceil.f32 %v2306
  %v2403 = vceil.f32 %v2307
  %v2404 = vceil.f32 %v2308
  %v2405 = vceil.f32 %v2309
  %v2406 = vceil.f32 %v2310
  %v2407 = vceil.f32 %v2311
  %v2408 = vceil.f32 %v2312
  %v2409 = vceil.f32 %v2313
  %v2410 = vceil.f32 %v2314
  %v2411 = vceil.f32 %v2315
  %v2412 = vceil.f32 %v2316
  %v2413 = vceil.f32 %v2317
  %v2414 = vceil.f32 %v2318
  %v2415 = vceil.f32 %v2319
  %v2416 = vceil.f32 %v2320
  %v2417 = vceil.f32 %v2321
  %v2418 = vceil.f32 %v2322
  %v2419 = vceil.f32 %v2323
  %v2420 = vceil.f32 %v2324
  %v2421 = vceil.f32 %v2325
  %v2422 = vceil.f32 %v2326
  %v2423 = vceil.f32 %v2327
  %v2424 = vceil.f32 %v2328
  %v2425 = vsel %vm2329, %v2361, %v2393
  %v2426 = vsel %vm2330, %v2362, %v2394
  %v2427 = vsel %vm2331, %v2363, %v2395
  %v2428 = vsel %vm2332, %v2364, %v2396
  %v2429 = vsel %vm2333, %v2365, %v2397
  %v2430 = vsel %vm2334, %v2366, %v2398
  %v2431 = vsel %vm2335, %v2367, %v2399
  %v2432 = vsel %vm2336, %v2368, %v2400
  %v2433 = vsel %vm2337, %v2369, %v2401
  %v2434 = vsel %vm2338, %v2370, %v2402
  %v2435 = vsel %vm2339, %v2371, %v2403
  %v2436 = vsel %vm2340, %v2372, %v2404
  %v2437 = vsel %vm2341, %v2373, %v2405
  %v2438 = vsel %vm2342, %v2374, %v2406
  %v2439 = vsel %vm2343, %v2375, %v2407
  %v2440 = vsel %vm2344, %v2376, %v2408
  %v2441 = vsel %vm2345, %v2377, %v2409
  %v2442 = vsel %vm2346, %v2378, %v2410
  %v2443 = vsel %vm2347, %v2379, %v2411
  %v2444 = vsel %vm2348, %v2380, %v2412
  %v2445 = vsel %vm2349, %v2381, %v2413
  %v2446 = vsel %vm2350, %v2382, %v2414
  %v2447 = vsel %vm2351, %v2383, %v2415
  %v2448 = vsel %vm2352, %v2384, %v2416
  %v2449 = vsel %vm2353, %v2385, %v2417
  %v2450 = vsel %vm2354, %v2386, %v2418
  %v2451 = vsel %vm2355, %v2387, %v2419
  %v2452 = vsel %vm2356, %v2388, %v2420
  %v2453 = vsel %vm2357, %v2389, %v2421
  %v2454 = vsel %vm2358, %v2390, %v2422
  %v2455 = vsel %vm2359, %v2391, %v2423
  %v2456 = vsel %vm2360, %v2392, %v2424
  %v2457 = vmul.f32 %v2425, 6.2831855
  %v2458 = vmul.f32 %v2426, 6.2831855
  %v2459 = vmul.f32 %v2427, 6.2831855
  %v2460 = vmul.f32 %v2428, 6.2831855
  %v2461 = vmul.f32 %v2429, 6.2831855
  %v2462 = vmul.f32 %v2430, 6.2831855
  %v2463 = vmul.f32 %v2431, 6.2831855
  %v2464 = vmul.f32 %v2432, 6.2831855
  %v2465 = vmul.f32 %v2433, 6.2831855
  %v2466 = vmul.f32 %v2434, 6.2831855
  %v2467 = vmul.f32 %v2435, 6.2831855
  %v2468 = vmul.f32 %v2436, 6.2831855
  %v2469 = vmul.f32 %v2437, 6.2831855
  %v2470 = vmul.f32 %v2438, 6.2831855
  %v2471 = vmul.f32 %v2439, 6.2831855
  %v2472 = vmul.f32 %v2440, 6.2831855
  %v2473 = vmul.f32 %v2441, 6.2831855
  %v2474 = vmul.f32 %v2442, 6.2831855
  %v2475 = vmul.f32 %v2443, 6.2831855
  %v2476 = vmul.f32 %v2444, 6.2831855
  %v2477 = vmul.f32 %v2445, 6.2831855
  %v2478 = vmul.f32 %v2446, 6.2831855
  %v2479 = vmul.f32 %v2447, 6.2831855
  %v2480 = vmul.f32 %v2448, 6.2831855
  %v2481 = vmul.f32 %v2449, 6.2831855
  %v2482 = vmul.f32 %v2450, 6.2831855
  %v2483 = vmul.f32 %v2451, 6.2831855
  %v2484 = vmul.f32 %v2452, 6.2831855
  %v2485 = vmul.f32 %v2453, 6.2831855
  %v2486 = vmul.f32 %v2454, 6.2831855
  %v2487 = vmul.f32 %v2455, 6.2831855
  %v2488 = vmul.f32 %v2456, 6.2831855
  %v2489 = vsub.f32 %v2265, %v2457
  %v2490 = vsub.f32 %v2266, %v2458
  %v2491 = vsub.f32 %v2267, %v2459
  %v2492 = vsub.f32 %v2268, %v2460
  %v2493 = vsub.f32 %v2269, %v2461
  %v2494 = vsub.f32 %v2270, %v2462
  %v2495 = vsub.f32 %v2271, %v2463
  %v2496 = vsub.f32 %v2272, %v2464
  %v2497 = vsub.f32 %v2273, %v2465
  %v2498 = vsub.f32 %v2274, %v2466
  %v2499 = vsub.f32 %v2275, %v2467
  %v2500 = vsub.f32 %v2276, %v2468
  %v2501 = vsub.f32 %v2277, %v2469
  %v2502 = vsub.f32 %v2278, %v2470
  %v2503 = vsub.f32 %v2279, %v2471
  %v2504 = vsub.f32 %v2280, %v2472
  %v2505 = vsub.f32 %v2281, %v2473
  %v2506 = vsub.f32 %v2282, %v2474
  %v2507 = vsub.f32 %v2283, %v2475
  %v2508 = vsub.f32 %v2284, %v2476
  %v2509 = vsub.f32 %v2285, %v2477
  %v2510 = vsub.f32 %v2286, %v2478
  %v2511 = vsub.f32 %v2287, %v2479
  %v2512 = vsub.f32 %v2288, %v2480
  %v2513 = vsub.f32 %v2289, %v2481
  %v2514 = vsub.f32 %v2290, %v2482
  %v2515 = vsub.f32 %v2291, %v2483
  %v2516 = vsub.f32 %v2292, %v2484
  %v2517 = vsub.f32 %v2293, %v2485
  %v2518 = vsub.f32 %v2294, %v2486
  %v2519 = vsub.f32 %v2295, %v2487
  %v2520 = vsub.f32 %v2296, %v2488
  %v2521 = vlaneseq
  %v2522 = vshrl.u32 %v2521, 7
  %v2523 = vsub.s32 0, %v2522
  %v2524 = vrot.slane %v425, %v2523
  %v2525 = vmul.f32 %v2524, %v2489
  %v2526 = vmul.f32 %v2524, %v2490
  %v2527 = vmul.f32 %v2524, %v2491
  %v2528 = vmul.f32 %v2524, %v2492
  %v2529 = vmul.f32 %v2524, %v2493
  %v2530 = vmul.f32 %v2524, %v2494
  %v2531 = vmul.f32 %v2524, %v2495
  %v2532 = vmul.f32 %v2524, %v2496
  %v2533 = vmul.f32 %v2524, %v2497
  %v2534 = vmul.f32 %v2524, %v2498
  %v2535 = vmul.f32 %v2524, %v2499
  %v2536 = vmul.f32 %v2524, %v2500
  %v2537 = vmul.f32 %v2524, %v2501
  %v2538 = vmul.f32 %v2524, %v2502
  %v2539 = vmul.f32 %v2524, %v2503
  %v2540 = vmul.f32 %v2524, %v2504
  %v2541 = vmul.f32 %v2524, %v2505
  %v2542 = vmul.f32 %v2524, %v2506
  %v2543 = vmul.f32 %v2524, %v2507
  %v2544 = vmul.f32 %v2524, %v2508
  %v2545 = vmul.f32 %v2524, %v2509
  %v2546 = vmul.f32 %v2524, %v2510
  %v2547 = vmul.f32 %v2524, %v2511
  %v2548 = vmul.f32 %v2524, %v2512
  %v2549 = vmul.f32 %v2524, %v2513
  %v2550 = vmul.f32 %v2524, %v2514
  %v2551 = vmul.f32 %v2524, %v2515
  %v2552 = vmul.f32 %v2524, %v2516
  %v2553 = vmul.f32 %v2524, %v2517
  %v2554 = vmul.f32 %v2524, %v2518
  %v2555 = vmul.f32 %v2524, %v2519
  %v2556 = vmul.f32 %v2524, %v2520
  %v2557 = vmul.f32 %v2489, %v2489
  %v2558 = vmul.f32 %v2490, %v2490
  %v2559 = vmul.f32 %v2491, %v2491
  %v2560 = vmul.f32 %v2492, %v2492
  %v2561 = vmul.f32 %v2493, %v2493
  %v2562 = vmul.f32 %v2494, %v2494
  %v2563 = vmul.f32 %v2495, %v2495
  %v2564 = vmul.f32 %v2496, %v2496
  %v2565 = vmul.f32 %v2497, %v2497
  %v2566 = vmul.f32 %v2498, %v2498
  %v2567 = vmul.f32 %v2499, %v2499
  %v2568 = vmul.f32 %v2500, %v2500
  %v2569 = vmul.f32 %v2501, %v2501
  %v2570 = vmul.f32 %v2502, %v2502
  %v2571 = vmul.f32 %v2503, %v2503
  %v2572 = vmul.f32 %v2504, %v2504
  %v2573 = vmul.f32 %v2505, %v2505
  %v2574 = vmul.f32 %v2506, %v2506
  %v2575 = vmul.f32 %v2507, %v2507
  %v2576 = vmul.f32 %v2508, %v2508
  %v2577 = vmul.f32 %v2509, %v2509
  %v2578 = vmul.f32 %v2510, %v2510
  %v2579 = vmul.f32 %v2511, %v2511
  %v2580 = vmul.f32 %v2512, %v2512
  %v2581 = vmul.f32 %v2513, %v2513
  %v2582 = vmul.f32 %v2514, %v2514
  %v2583 = vmul.f32 %v2515, %v2515
  %v2584 = vmul.f32 %v2516, %v2516
  %v2585 = vmul.f32 %v2517, %v2517
  %v2586 = vmul.f32 %v2518, %v2518
  %v2587 = vmul.f32 %v2519, %v2519
  %v2588 = vmul.f32 %v2520, %v2520
  %v2589 = vlaneseq
  %v2590 = vshrl.u32 %v2589, 7
  %v2591 = vsub.s32 5, %v2590
  %v2592 = vrot.slane %v430, %v2591
  %v2593 = vmul.f32 %v2557, %v2592
  %v2594 = vmul.f32 %v2558, %v2592
  %v2595 = vmul.f32 %v2559, %v2592
  %v2596 = vmul.f32 %v2560, %v2592
  %v2597 = vmul.f32 %v2561, %v2592
  %v2598 = vmul.f32 %v2562, %v2592
  %v2599 = vmul.f32 %v2563, %v2592
  %v2600 = vmul.f32 %v2564, %v2592
  %v2601 = vmul.f32 %v2565, %v2592
  %v2602 = vmul.f32 %v2566, %v2592
  %v2603 = vmul.f32 %v2567, %v2592
  %v2604 = vmul.f32 %v2568, %v2592
  %v2605 = vmul.f32 %v2569, %v2592
  %v2606 = vmul.f32 %v2570, %v2592
  %v2607 = vmul.f32 %v2571, %v2592
  %v2608 = vmul.f32 %v2572, %v2592
  %v2609 = vmul.f32 %v2573, %v2592
  %v2610 = vmul.f32 %v2574, %v2592
  %v2611 = vmul.f32 %v2575, %v2592
  %v2612 = vmul.f32 %v2576, %v2592
  %v2613 = vmul.f32 %v2577, %v2592
  %v2614 = vmul.f32 %v2578, %v2592
  %v2615 = vmul.f32 %v2579, %v2592
  %v2616 = vmul.f32 %v2580, %v2592
  %v2617 = vmul.f32 %v2581, %v2592
  %v2618 = vmul.f32 %v2582, %v2592
  %v2619 = vmul.f32 %v2583, %v2592
  %v2620 = vmul.f32 %v2584, %v2592
  %v2621 = vmul.f32 %v2585, %v2592
  %v2622 = vmul.f32 %v2586, %v2592
  %v2623 = vmul.f32 %v2587, %v2592
  %v2624 = vmul.f32 %v2588, %v2592
  %v2625 = vmul.f32 %v2593, 1.442695
  %v2626 = vpow.pop %v2625
  %v2627 = vmul.f32 %v2594, 1.442695
  %v2628 = vpow.pop %v2627
  %v2629 = vmul.f32 %v2595, 1.442695
  %v2630 = vpow.pop %v2629
  %v2631 = vmul.f32 %v2596, 1.442695
  %v2632 = vpow.pop %v2631
  %v2633 = vmul.f32 %v2597, 1.442695
  %v2634 = vpow.pop %v2633
  %v2635 = vmul.f32 %v2598, 1.442695
  %v2636 = vpow.pop %v2635
  %v2637 = vmul.f32 %v2599, 1.442695
  %v2638 = vpow.pop %v2637
  %v2639 = vmul.f32 %v2600, 1.442695
  %v2640 = vpow.pop %v2639
  %v2641 = vmul.f32 %v2601, 1.442695
  %v2642 = vpow.pop %v2641
  %v2643 = vmul.f32 %v2602, 1.442695
  %v2644 = vpow.pop %v2643
  %v2645 = vmul.f32 %v2603, 1.442695
  %v2646 = vpow.pop %v2645
  %v2647 = vmul.f32 %v2604, 1.442695
  %v2648 = vpow.pop %v2647
  %v2649 = vmul.f32 %v2605, 1.442695
  %v2650 = vpow.pop %v2649
  %v2651 = vmul.f32 %v2606, 1.442695
  %v2652 = vpow.pop %v2651
  %v2653 = vmul.f32 %v2607, 1.442695
  %v2654 = vpow.pop %v2653
  %v2655 = vmul.f32 %v2608, 1.442695
  %v2656 = vpow.pop %v2655
  %v2657 = vmul.f32 %v2609, 1.442695
  %v2658 = vpow.pop %v2657
  %v2659 = vmul.f32 %v2610, 1.442695
  %v2660 = vpow.pop %v2659
  %v2661 = vmul.f32 %v2611, 1.442695
  %v2662 = vpow.pop %v2661
  %v2663 = vmul.f32 %v2612, 1.442695
  %v2664 = vpow.pop %v2663
  %v2665 = vmul.f32 %v2613, 1.442695
  %v2666 = vpow.pop %v2665
  %v2667 = vmul.f32 %v2614, 1.442695
  %v2668 = vpow.pop %v2667
  %v2669 = vmul.f32 %v2615, 1.442695
  %v2670 = vpow.pop %v2669
  %v2671 = vmul.f32 %v2616, 1.442695
  %v2672 = vpow.pop %v2671
  %v2673 = vmul.f32 %v2617, 1.442695
  %v2674 = vpow.pop %v2673
  %v2675 = vmul.f32 %v2618, 1.442695
  %v2676 = vpow.pop %v2675
  %v2677 = vmul.f32 %v2619, 1.442695
  %v2678 = vpow.pop %v2677
  %v2679 = vmul.f32 %v2620, 1.442695
  %v2680 = vpow.pop %v2679
  %v2681 = vmul.f32 %v2621, 1.442695
  %v2682 = vpow.pop %v2681
  %v2683 = vmul.f32 %v2622, 1.442695
  %v2684 = vpow.pop %v2683
  %v2685 = vmul.f32 %v2623, 1.442695
  %v2686 = vpow.pop %v2685
  %v2687 = vmul.f32 %v2624, 1.442695
  %v2688 = vpow.pop %v2687
  %v2689 = vmul.f32 %v2525, %v2626
  %v2690 = vmul.f32 %v2526, %v2628
  %v2691 = vmul.f32 %v2527, %v2630
  %v2692 = vmul.f32 %v2528, %v2632
  %v2693 = vmul.f32 %v2529, %v2634
  %v2694 = vmul.f32 %v2530, %v2636
  %v2695 = vmul.f32 %v2531, %v2638
  %v2696 = vmul.f32 %v2532, %v2640
  %v2697 = vmul.f32 %v2533, %v2642
  %v2698 = vmul.f32 %v2534, %v2644
  %v2699 = vmul.f32 %v2535, %v2646
  %v2700 = vmul.f32 %v2536, %v2648
  %v2701 = vmul.f32 %v2537, %v2650
  %v2702 = vmul.f32 %v2538, %v2652
  %v2703 = vmul.f32 %v2539, %v2654
  %v2704 = vmul.f32 %v2540, %v2656
  %v2705 = vmul.f32 %v2541, %v2658
  %v2706 = vmul.f32 %v2542, %v2660
  %v2707 = vmul.f32 %v2543, %v2662
  %v2708 = vmul.f32 %v2544, %v2664
  %v2709 = vmul.f32 %v2545, %v2666
  %v2710 = vmul.f32 %v2546, %v2668
  %v2711 = vmul.f32 %v2547, %v2670
  %v2712 = vmul.f32 %v2548, %v2672
  %v2713 = vmul.f32 %v2549, %v2674
  %v2714 = vmul.f32 %v2550, %v2676
  %v2715 = vmul.f32 %v2551, %v2678
  %v2716 = vmul.f32 %v2552, %v2680
  %v2717 = vmul.f32 %v2553, %v2682
  %v2718 = vmul.f32 %v2554, %v2684
  %v2719 = vmul.f32 %v2555, %v2686
  %v2720 = vmul.f32 %v2556, %v2688
  %v2721 = vadd.f32 %v2689, 0.0
  %v2722 = vadd.f32 %v2690, 0.0
  %v2723 = vadd.f32 %v2691, 0.0
  %v2724 = vadd.f32 %v2692, 0.0
  %v2725 = vadd.f32 %v2693, 0.0
  %v2726 = vadd.f32 %v2694, 0.0
  %v2727 = vadd.f32 %v2695, 0.0
  %v2728 = vadd.f32 %v2696, 0.0
  %v2729 = vadd.f32 %v2697, 0.0
  %v2730 = vadd.f32 %v2698, 0.0
  %v2731 = vadd.f32 %v2699, 0.0
  %v2732 = vadd.f32 %v2700, 0.0
  %v2733 = vadd.f32 %v2701, 0.0
  %v2734 = vadd.f32 %v2702, 0.0
  %v2735 = vadd.f32 %v2703, 0.0
  %v2736 = vadd.f32 %v2704, 0.0
  %v2737 = vadd.f32 %v2705, 0.0
  %v2738 = vadd.f32 %v2706, 0.0
  %v2739 = vadd.f32 %v2707, 0.0
  %v2740 = vadd.f32 %v2708, 0.0
  %v2741 = vadd.f32 %v2709, 0.0
  %v2742 = vadd.f32 %v2710, 0.0
  %v2743 = vadd.f32 %v2711, 0.0
  %v2744 = vadd.f32 %v2712, 0.0
  %v2745 = vadd.f32 %v2713, 0.0
  %v2746 = vadd.f32 %v2714, 0.0
  %v2747 = vadd.f32 %v2715, 0.0
  %v2748 = vadd.f32 %v2716, 0.0
  %v2749 = vadd.f32 %v2717, 0.0
  %v2750 = vadd.f32 %v2718, 0.0
  %v2751 = vadd.f32 %v2719, 0.0
  %v2752 = vadd.f32 %v2720, 0.0
  %v2753 = vlaneseq
  %v2754 = vshrl.u32 %v2753, 7
  %v2755 = vsub.s32 3, %v2754
  %v2756 = vrot.slane %v426, %v2755
  %v2757 = vsub.f32 %v803, %v2756
  %v2758 = vsub.f32 %v850, %v2756
  %v2759 = vsub.f32 %v897, %v2756
  %v2760 = vsub.f32 %v944, %v2756
  %v2761 = vsub.f32 %v991, %v2756
  %v2762 = vsub.f32 %v1038, %v2756
  %v2763 = vsub.f32 %v1085, %v2756
  %v2764 = vsub.f32 %v1132, %v2756
  %v2765 = vsub.f32 %v1179, %v2756
  %v2766 = vsub.f32 %v1226, %v2756
  %v2767 = vsub.f32 %v1273, %v2756
  %v2768 = vsub.f32 %v1320, %v2756
  %v2769 = vsub.f32 %v1367, %v2756
  %v2770 = vsub.f32 %v1414, %v2756
  %v2771 = vsub.f32 %v1461, %v2756
  %v2772 = vsub.f32 %v1508, %v2756
  %v2773 = vsub.f32 %v1555, %v2756
  %v2774 = vsub.f32 %v1602, %v2756
  %v2775 = vsub.f32 %v1649, %v2756
  %v2776 = vsub.f32 %v1696, %v2756
  %v2777 = vsub.f32 %v1743, %v2756
  %v2778 = vsub.f32 %v1790, %v2756
  %v2779 = vsub.f32 %v1837, %v2756
  %v2780 = vsub.f32 %v1884, %v2756
  %v2781 = vsub.f32 %v1931, %v2756
  %v2782 = vsub.f32 %v1978, %v2756
  %v2783 = vsub.f32 %v2025, %v2756
  %v2784 = vsub.f32 %v2072, %v2756
  %v2785 = vsub.f32 %v2119, %v2756
  %v2786 = vsub.f32 %v2166, %v2756
  %v2787 = vsub.f32 %v2213, %v2756
  %v2788 = vsub.f32 %v2260, %v2756
  %v2789 = vmul.f32 %v2757, 0.15915494
  %v2790 = vmul.f32 %v2758, 0.15915494
  %v2791 = vmul.f32 %v2759, 0.15915494
  %v2792 = vmul.f32 %v2760, 0.15915494
  %v2793 = vmul.f32 %v2761, 0.15915494
  %v2794 = vmul.f32 %v2762, 0.15915494
  %v2795 = vmul.f32 %v2763, 0.15915494
  %v2796 = vmul.f32 %v2764, 0.15915494
  %v2797 = vmul.f32 %v2765, 0.15915494
  %v2798 = vmul.f32 %v2766, 0.15915494
  %v2799 = vmul.f32 %v2767, 0.15915494
  %v2800 = vmul.f32 %v2768, 0.15915494
  %v2801 = vmul.f32 %v2769, 0.15915494
  %v2802 = vmul.f32 %v2770, 0.15915494
  %v2803 = vmul.f32 %v2771, 0.15915494
  %v2804 = vmul.f32 %v2772, 0.15915494
  %v2805 = vmul.f32 %v2773, 0.15915494
  %v2806 = vmul.f32 %v2774, 0.15915494
  %v2807 = vmul.f32 %v2775, 0.15915494
  %v2808 = vmul.f32 %v2776, 0.15915494
  %v2809 = vmul.f32 %v2777, 0.15915494
  %v2810 = vmul.f32 %v2778, 0.15915494
  %v2811 = vmul.f32 %v2779, 0.15915494
  %v2812 = vmul.f32 %v2780, 0.15915494
  %v2813 = vmul.f32 %v2781, 0.15915494
  %v2814 = vmul.f32 %v2782, 0.15915494
  %v2815 = vmul.f32 %v2783, 0.15915494
  %v2816 = vmul.f32 %v2784, 0.15915494
  %v2817 = vmul.f32 %v2785, 0.15915494
  %v2818 = vmul.f32 %v2786, 0.15915494
  %v2819 = vmul.f32 %v2787, 0.15915494
  %v2820 = vmul.f32 %v2788, 0.15915494
  %vm2821 = vcmp.ge.f32.partialorder %v2789, 0.0
  %vm2822 = vcmp.ge.f32.partialorder %v2790, 0.0
  %vm2823 = vcmp.ge.f32.partialorder %v2791, 0.0
  %vm2824 = vcmp.ge.f32.partialorder %v2792, 0.0
  %vm2825 = vcmp.ge.f32.partialorder %v2793, 0.0
  %vm2826 = vcmp.ge.f32.partialorder %v2794, 0.0
  %vm2827 = vcmp.ge.f32.partialorder %v2795, 0.0
  %vm2828 = vcmp.ge.f32.partialorder %v2796, 0.0
  %vm2829 = vcmp.ge.f32.partialorder %v2797, 0.0
  %vm2830 = vcmp.ge.f32.partialorder %v2798, 0.0
  %vm2831 = vcmp.ge.f32.partialorder %v2799, 0.0
  %vm2832 = vcmp.ge.f32.partialorder %v2800, 0.0
  %vm2833 = vcmp.ge.f32.partialorder %v2801, 0.0
  %vm2834 = vcmp.ge.f32.partialorder %v2802, 0.0
  %vm2835 = vcmp.ge.f32.partialorder %v2803, 0.0
  %vm2836 = vcmp.ge.f32.partialorder %v2804, 0.0
  %vm2837 = vcmp.ge.f32.partialorder %v2805, 0.0
  %vm2838 = vcmp.ge.f32.partialorder %v2806, 0.0
  %vm2839 = vcmp.ge.f32.partialorder %v2807, 0.0
  %vm2840 = vcmp.ge.f32.partialorder %v2808, 0.0
  %vm2841 = vcmp.ge.f32.partialorder %v2809, 0.0
  %vm2842 = vcmp.ge.f32.partialorder %v2810, 0.0
  %vm2843 = vcmp.ge.f32.partialorder %v2811, 0.0
  %vm2844 = vcmp.ge.f32.partialorder %v2812, 0.0
  %vm2845 = vcmp.ge.f32.partialorder %v2813, 0.0
  %vm2846 = vcmp.ge.f32.partialorder %v2814, 0.0
  %vm2847 = vcmp.ge.f32.partialorder %v2815, 0.0
  %vm2848 = vcmp.ge.f32.partialorder %v2816, 0.0
  %vm2849 = vcmp.ge.f32.partialorder %v2817, 0.0
  %vm2850 = vcmp.ge.f32.partialorder %v2818, 0.0
  %vm2851 = vcmp.ge.f32.partialorder %v2819, 0.0
  %vm2852 = vcmp.ge.f32.partialorder %v2820, 0.0
  %v2853 = vfloor.f32 %v2789
  %v2854 = vfloor.f32 %v2790
  %v2855 = vfloor.f32 %v2791
  %v2856 = vfloor.f32 %v2792
  %v2857 = vfloor.f32 %v2793
  %v2858 = vfloor.f32 %v2794
  %v2859 = vfloor.f32 %v2795
  %v2860 = vfloor.f32 %v2796
  %v2861 = vfloor.f32 %v2797
  %v2862 = vfloor.f32 %v2798
  %v2863 = vfloor.f32 %v2799
  %v2864 = vfloor.f32 %v2800
  %v2865 = vfloor.f32 %v2801
  %v2866 = vfloor.f32 %v2802
  %v2867 = vfloor.f32 %v2803
  %v2868 = vfloor.f32 %v2804
  %v2869 = vfloor.f32 %v2805
  %v2870 = vfloor.f32 %v2806
  %v2871 = vfloor.f32 %v2807
  %v2872 = vfloor.f32 %v2808
  %v2873 = vfloor.f32 %v2809
  %v2874 = vfloor.f32 %v2810
  %v2875 = vfloor.f32 %v2811
  %v2876 = vfloor.f32 %v2812
  %v2877 = vfloor.f32 %v2813
  %v2878 = vfloor.f32 %v2814
  %v2879 = vfloor.f32 %v2815
  %v2880 = vfloor.f32 %v2816
  %v2881 = vfloor.f32 %v2817
  %v2882 = vfloor.f32 %v2818
  %v2883 = vfloor.f32 %v2819
  %v2884 = vfloor.f32 %v2820
  %v2885 = vceil.f32 %v2789
  %v2886 = vceil.f32 %v2790
  %v2887 = vceil.f32 %v2791
  %v2888 = vceil.f32 %v2792
  %v2889 = vceil.f32 %v2793
  %v2890 = vceil.f32 %v2794
  %v2891 = vceil.f32 %v2795
  %v2892 = vceil.f32 %v2796
  %v2893 = vceil.f32 %v2797
  %v2894 = vceil.f32 %v2798
  %v2895 = vceil.f32 %v2799
  %v2896 = vceil.f32 %v2800
  %v2897 = vceil.f32 %v2801
  %v2898 = vceil.f32 %v2802
  %v2899 = vceil.f32 %v2803
  %v2900 = vceil.f32 %v2804
  %v2901 = vceil.f32 %v2805
  %v2902 = vceil.f32 %v2806
  %v2903 = vceil.f32 %v2807
  %v2904 = vceil.f32 %v2808
  %v2905 = vceil.f32 %v2809
  %v2906 = vceil.f32 %v2810
  %v2907 = vceil.f32 %v2811
  %v2908 = vceil.f32 %v2812
  %v2909 = vceil.f32 %v2813
  %v2910 = vceil.f32 %v2814
  %v2911 = vceil.f32 %v2815
  %v2912 = vceil.f32 %v2816
  %v2913 = vceil.f32 %v2817
  %v2914 = vceil.f32 %v2818
  %v2915 = vceil.f32 %v2819
  %v2916 = vceil.f32 %v2820
  %v2917 = vsel %vm2821, %v2853, %v2885
  %v2918 = vsel %vm2822, %v2854, %v2886
  %v2919 = vsel %vm2823, %v2855, %v2887
  %v2920 = vsel %vm2824, %v2856, %v2888
  %v2921 = vsel %vm2825, %v2857, %v2889
  %v2922 = vsel %vm2826, %v2858, %v2890
  %v2923 = vsel %vm2827, %v2859, %v2891
  %v2924 = vsel %vm2828, %v2860, %v2892
  %v2925 = vsel %vm2829, %v2861, %v2893
  %v2926 = vsel %vm2830, %v2862, %v2894
  %v2927 = vsel %vm2831, %v2863, %v2895
  %v2928 = vsel %vm2832, %v2864, %v2896
  %v2929 = vsel %vm2833, %v2865, %v2897
  %v2930 = vsel %vm2834, %v2866, %v2898
  %v2931 = vsel %vm2835, %v2867, %v2899
  %v2932 = vsel %vm2836, %v2868, %v2900
  %v2933 = vsel %vm2837, %v2869, %v2901
  %v2934 = vsel %vm2838, %v2870, %v2902
  %v2935 = vsel %vm2839, %v2871, %v2903
  %v2936 = vsel %vm2840, %v2872, %v2904
  %v2937 = vsel %vm2841, %v2873, %v2905
  %v2938 = vsel %vm2842, %v2874, %v2906
  %v2939 = vsel %vm2843, %v2875, %v2907
  %v2940 = vsel %vm2844, %v2876, %v2908
  %v2941 = vsel %vm2845, %v2877, %v2909
  %v2942 = vsel %vm2846, %v2878, %v2910
  %v2943 = vsel %vm2847, %v2879, %v2911
  %v2944 = vsel %vm2848, %v2880, %v2912
  %v2945 = vsel %vm2849, %v2881, %v2913
  %v2946 = vsel %vm2850, %v2882, %v2914
  %v2947 = vsel %vm2851, %v2883, %v2915
  %v2948 = vsel %vm2852, %v2884, %v2916
  %v2949 = vmul.f32 %v2917, 6.2831855
  %v2950 = vmul.f32 %v2918, 6.2831855
  %v2951 = vmul.f32 %v2919, 6.2831855
  %v2952 = vmul.f32 %v2920, 6.2831855
  %v2953 = vmul.f32 %v2921, 6.2831855
  %v2954 = vmul.f32 %v2922, 6.2831855
  %v2955 = vmul.f32 %v2923, 6.2831855
  %v2956 = vmul.f32 %v2924, 6.2831855
  %v2957 = vmul.f32 %v2925, 6.2831855
  %v2958 = vmul.f32 %v2926, 6.2831855
  %v2959 = vmul.f32 %v2927, 6.2831855
  %v2960 = vmul.f32 %v2928, 6.2831855
  %v2961 = vmul.f32 %v2929, 6.2831855
  %v2962 = vmul.f32 %v2930, 6.2831855
  %v2963 = vmul.f32 %v2931, 6.2831855
  %v2964 = vmul.f32 %v2932, 6.2831855
  %v2965 = vmul.f32 %v2933, 6.2831855
  %v2966 = vmul.f32 %v2934, 6.2831855
  %v2967 = vmul.f32 %v2935, 6.2831855
  %v2968 = vmul.f32 %v2936, 6.2831855
  %v2969 = vmul.f32 %v2937, 6.2831855
  %v2970 = vmul.f32 %v2938, 6.2831855
  %v2971 = vmul.f32 %v2939, 6.2831855
  %v2972 = vmul.f32 %v2940, 6.2831855
  %v2973 = vmul.f32 %v2941, 6.2831855
  %v2974 = vmul.f32 %v2942, 6.2831855
  %v2975 = vmul.f32 %v2943, 6.2831855
  %v2976 = vmul.f32 %v2944, 6.2831855
  %v2977 = vmul.f32 %v2945, 6.2831855
  %v2978 = vmul.f32 %v2946, 6.2831855
  %v2979 = vmul.f32 %v2947, 6.2831855
  %v2980 = vmul.f32 %v2948, 6.2831855
  %v2981 = vsub.f32 %v2757, %v2949
  %v2982 = vsub.f32 %v2758, %v2950
  %v2983 = vsub.f32 %v2759, %v2951
  %v2984 = vsub.f32 %v2760, %v2952
  %v2985 = vsub.f32 %v2761, %v2953
  %v2986 = vsub.f32 %v2762, %v2954
  %v2987 = vsub.f32 %v2763, %v2955
  %v2988 = vsub.f32 %v2764, %v2956
  %v2989 = vsub.f32 %v2765, %v2957
  %v2990 = vsub.f32 %v2766, %v2958
  %v2991 = vsub.f32 %v2767, %v2959
  %v2992 = vsub.f32 %v2768, %v2960
  %v2993 = vsub.f32 %v2769, %v2961
  %v2994 = vsub.f32 %v2770, %v2962
  %v2995 = vsub.f32 %v2771, %v2963
  %v2996 = vsub.f32 %v2772, %v2964
  %v2997 = vsub.f32 %v2773, %v2965
  %v2998 = vsub.f32 %v2774, %v2966
  %v2999 = vsub.f32 %v2775, %v2967
  %v3000 = vsub.f32 %v2776, %v2968
  %v3001 = vsub.f32 %v2777, %v2969
  %v3002 = vsub.f32 %v2778, %v2970
  %v3003 = vsub.f32 %v2779, %v2971
  %v3004 = vsub.f32 %v2780, %v2972
  %v3005 = vsub.f32 %v2781, %v2973
  %v3006 = vsub.f32 %v2782, %v2974
  %v3007 = vsub.f32 %v2783, %v2975
  %v3008 = vsub.f32 %v2784, %v2976
  %v3009 = vsub.f32 %v2785, %v2977
  %v3010 = vsub.f32 %v2786, %v2978
  %v3011 = vsub.f32 %v2787, %v2979
  %v3012 = vsub.f32 %v2788, %v2980
  %v3013 = vlaneseq
  %v3014 = vshrl.u32 %v3013, 7
  %v3015 = vsub.s32 1, %v3014
  %v3016 = vrot.slane %v425, %v3015
  %v3017 = vmul.f32 %v3016, %v2981
  %v3018 = vmul.f32 %v3016, %v2982
  %v3019 = vmul.f32 %v3016, %v2983
  %v3020 = vmul.f32 %v3016, %v2984
  %v3021 = vmul.f32 %v3016, %v2985
  %v3022 = vmul.f32 %v3016, %v2986
  %v3023 = vmul.f32 %v3016, %v2987
  %v3024 = vmul.f32 %v3016, %v2988
  %v3025 = vmul.f32 %v3016, %v2989
  %v3026 = vmul.f32 %v3016, %v2990
  %v3027 = vmul.f32 %v3016, %v2991
  %v3028 = vmul.f32 %v3016, %v2992
  %v3029 = vmul.f32 %v3016, %v2993
  %v3030 = vmul.f32 %v3016, %v2994
  %v3031 = vmul.f32 %v3016, %v2995
  %v3032 = vmul.f32 %v3016, %v2996
  %v3033 = vmul.f32 %v3016, %v2997
  %v3034 = vmul.f32 %v3016, %v2998
  %v3035 = vmul.f32 %v3016, %v2999
  %v3036 = vmul.f32 %v3016, %v3000
  %v3037 = vmul.f32 %v3016, %v3001
  %v3038 = vmul.f32 %v3016, %v3002
  %v3039 = vmul.f32 %v3016, %v3003
  %v3040 = vmul.f32 %v3016, %v3004
  %v3041 = vmul.f32 %v3016, %v3005
  %v3042 = vmul.f32 %v3016, %v3006
  %v3043 = vmul.f32 %v3016, %v3007
  %v3044 = vmul.f32 %v3016, %v3008
  %v3045 = vmul.f32 %v3016, %v3009
  %v3046 = vmul.f32 %v3016, %v3010
  %v3047 = vmul.f32 %v3016, %v3011
  %v3048 = vmul.f32 %v3016, %v3012
  %v3049 = vmul.f32 %v2981, %v2981
  %v3050 = vmul.f32 %v2982, %v2982
  %v3051 = vmul.f32 %v2983, %v2983
  %v3052 = vmul.f32 %v2984, %v2984
  %v3053 = vmul.f32 %v2985, %v2985
  %v3054 = vmul.f32 %v2986, %v2986
  %v3055 = vmul.f32 %v2987, %v2987
  %v3056 = vmul.f32 %v2988, %v2988
  %v3057 = vmul.f32 %v2989, %v2989
  %v3058 = vmul.f32 %v2990, %v2990
  %v3059 = vmul.f32 %v2991, %v2991
  %v3060 = vmul.f32 %v2992, %v2992
  %v3061 = vmul.f32 %v2993, %v2993
  %v3062 = vmul.f32 %v2994, %v2994
  %v3063 = vmul.f32 %v2995, %v2995
  %v3064 = vmul.f32 %v2996, %v2996
  %v3065 = vmul.f32 %v2997, %v2997
  %v3066 = vmul.f32 %v2998, %v2998
  %v3067 = vmul.f32 %v2999, %v2999
  %v3068 = vmul.f32 %v3000, %v3000
  %v3069 = vmul.f32 %v3001, %v3001
  %v3070 = vmul.f32 %v3002, %v3002
  %v3071 = vmul.f32 %v3003, %v3003
  %v3072 = vmul.f32 %v3004, %v3004
  %v3073 = vmul.f32 %v3005, %v3005
  %v3074 = vmul.f32 %v3006, %v3006
  %v3075 = vmul.f32 %v3007, %v3007
  %v3076 = vmul.f32 %v3008, %v3008
  %v3077 = vmul.f32 %v3009, %v3009
  %v3078 = vmul.f32 %v3010, %v3010
  %v3079 = vmul.f32 %v3011, %v3011
  %v3080 = vmul.f32 %v3012, %v3012
  %v3081 = vlaneseq
  %v3082 = vshrl.u32 %v3081, 7
  %v3083 = vsub.s32 6, %v3082
  %v3084 = vrot.slane %v430, %v3083
  %v3085 = vmul.f32 %v3049, %v3084
  %v3086 = vmul.f32 %v3050, %v3084
  %v3087 = vmul.f32 %v3051, %v3084
  %v3088 = vmul.f32 %v3052, %v3084
  %v3089 = vmul.f32 %v3053, %v3084
  %v3090 = vmul.f32 %v3054, %v3084
  %v3091 = vmul.f32 %v3055, %v3084
  %v3092 = vmul.f32 %v3056, %v3084
  %v3093 = vmul.f32 %v3057, %v3084
  %v3094 = vmul.f32 %v3058, %v3084
  %v3095 = vmul.f32 %v3059, %v3084
  %v3096 = vmul.f32 %v3060, %v3084
  %v3097 = vmul.f32 %v3061, %v3084
  %v3098 = vmul.f32 %v3062, %v3084
  %v3099 = vmul.f32 %v3063, %v3084
  %v3100 = vmul.f32 %v3064, %v3084
  %v3101 = vmul.f32 %v3065, %v3084
  %v3102 = vmul.f32 %v3066, %v3084
  %v3103 = vmul.f32 %v3067, %v3084
  %v3104 = vmul.f32 %v3068, %v3084
  %v3105 = vmul.f32 %v3069, %v3084
  %v3106 = vmul.f32 %v3070, %v3084
  %v3107 = vmul.f32 %v3071, %v3084
  %v3108 = vmul.f32 %v3072, %v3084
  %v3109 = vmul.f32 %v3073, %v3084
  %v3110 = vmul.f32 %v3074, %v3084
  %v3111 = vmul.f32 %v3075, %v3084
  %v3112 = vmul.f32 %v3076, %v3084
  %v3113 = vmul.f32 %v3077, %v3084
  %v3114 = vmul.f32 %v3078, %v3084
  %v3115 = vmul.f32 %v3079, %v3084
  %v3116 = vmul.f32 %v3080, %v3084
  %v3117 = vmul.f32 %v3085, 1.442695
  %v3118 = vpow.pop %v3117
  %v3119 = vmul.f32 %v3086, 1.442695
  %v3120 = vpow.pop %v3119
  %v3121 = vmul.f32 %v3087, 1.442695
  %v3122 = vpow.pop %v3121
  %v3123 = vmul.f32 %v3088, 1.442695
  %v3124 = vpow.pop %v3123
  %v3125 = vmul.f32 %v3089, 1.442695
  %v3126 = vpow.pop %v3125
  %v3127 = vmul.f32 %v3090, 1.442695
  %v3128 = vpow.pop %v3127
  %v3129 = vmul.f32 %v3091, 1.442695
  %v3130 = vpow.pop %v3129
  %v3131 = vmul.f32 %v3092, 1.442695
  %v3132 = vpow.pop %v3131
  %v3133 = vmul.f32 %v3093, 1.442695
  %v3134 = vpow.pop %v3133
  %v3135 = vmul.f32 %v3094, 1.442695
  %v3136 = vpow.pop %v3135
  %v3137 = vmul.f32 %v3095, 1.442695
  %v3138 = vpow.pop %v3137
  %v3139 = vmul.f32 %v3096, 1.442695
  %v3140 = vpow.pop %v3139
  %v3141 = vmul.f32 %v3097, 1.442695
  %v3142 = vpow.pop %v3141
  %v3143 = vmul.f32 %v3098, 1.442695
  %v3144 = vpow.pop %v3143
  %v3145 = vmul.f32 %v3099, 1.442695
  %v3146 = vpow.pop %v3145
  %v3147 = vmul.f32 %v3100, 1.442695
  %v3148 = vpow.pop %v3147
  %v3149 = vmul.f32 %v3101, 1.442695
  %v3150 = vpow.pop %v3149
  %v3151 = vmul.f32 %v3102, 1.442695
  %v3152 = vpow.pop %v3151
  %v3153 = vmul.f32 %v3103, 1.442695
  %v3154 = vpow.pop %v3153
  %v3155 = vmul.f32 %v3104, 1.442695
  %v3156 = vpow.pop %v3155
  %v3157 = vmul.f32 %v3105, 1.442695
  %v3158 = vpow.pop %v3157
  %v3159 = vmul.f32 %v3106, 1.442695
  %v3160 = vpow.pop %v3159
  %v3161 = vmul.f32 %v3107, 1.442695
  %v3162 = vpow.pop %v3161
  %v3163 = vmul.f32 %v3108, 1.442695
  %v3164 = vpow.pop %v3163
  %v3165 = vmul.f32 %v3109, 1.442695
  %v3166 = vpow.pop %v3165
  %v3167 = vmul.f32 %v3110, 1.442695
  %v3168 = vpow.pop %v3167
  %v3169 = vmul.f32 %v3111, 1.442695
  %v3170 = vpow.pop %v3169
  %v3171 = vmul.f32 %v3112, 1.442695
  %v3172 = vpow.pop %v3171
  %v3173 = vmul.f32 %v3113, 1.442695
  %v3174 = vpow.pop %v3173
  %v3175 = vmul.f32 %v3114, 1.442695
  %v3176 = vpow.pop %v3175
  %v3177 = vmul.f32 %v3115, 1.442695
  %v3178 = vpow.pop %v3177
  %v3179 = vmul.f32 %v3116, 1.442695
  %v3180 = vpow.pop %v3179
  %v3181 = vmul.f32 %v3017, %v3118
  %v3182 = vmul.f32 %v3018, %v3120
  %v3183 = vmul.f32 %v3019, %v3122
  %v3184 = vmul.f32 %v3020, %v3124
  %v3185 = vmul.f32 %v3021, %v3126
  %v3186 = vmul.f32 %v3022, %v3128
  %v3187 = vmul.f32 %v3023, %v3130
  %v3188 = vmul.f32 %v3024, %v3132
  %v3189 = vmul.f32 %v3025, %v3134
  %v3190 = vmul.f32 %v3026, %v3136
  %v3191 = vmul.f32 %v3027, %v3138
  %v3192 = vmul.f32 %v3028, %v3140
  %v3193 = vmul.f32 %v3029, %v3142
  %v3194 = vmul.f32 %v3030, %v3144
  %v3195 = vmul.f32 %v3031, %v3146
  %v3196 = vmul.f32 %v3032, %v3148
  %v3197 = vmul.f32 %v3033, %v3150
  %v3198 = vmul.f32 %v3034, %v3152
  %v3199 = vmul.f32 %v3035, %v3154
  %v3200 = vmul.f32 %v3036, %v3156
  %v3201 = vmul.f32 %v3037, %v3158
  %v3202 = vmul.f32 %v3038, %v3160
  %v3203 = vmul.f32 %v3039, %v3162
  %v3204 = vmul.f32 %v3040, %v3164
  %v3205 = vmul.f32 %v3041, %v3166
  %v3206 = vmul.f32 %v3042, %v3168
  %v3207 = vmul.f32 %v3043, %v3170
  %v3208 = vmul.f32 %v3044, %v3172
  %v3209 = vmul.f32 %v3045, %v3174
  %v3210 = vmul.f32 %v3046, %v3176
  %v3211 = vmul.f32 %v3047, %v3178
  %v3212 = vmul.f32 %v3048, %v3180
  %v3213 = vadd.f32 %v2721, %v3181
  %v3214 = vadd.f32 %v2722, %v3182
  %v3215 = vadd.f32 %v2723, %v3183
  %v3216 = vadd.f32 %v2724, %v3184
  %v3217 = vadd.f32 %v2725, %v3185
  %v3218 = vadd.f32 %v2726, %v3186
  %v3219 = vadd.f32 %v2727, %v3187
  %v3220 = vadd.f32 %v2728, %v3188
  %v3221 = vadd.f32 %v2729, %v3189
  %v3222 = vadd.f32 %v2730, %v3190
  %v3223 = vadd.f32 %v2731, %v3191
  %v3224 = vadd.f32 %v2732, %v3192
  %v3225 = vadd.f32 %v2733, %v3193
  %v3226 = vadd.f32 %v2734, %v3194
  %v3227 = vadd.f32 %v2735, %v3195
  %v3228 = vadd.f32 %v2736, %v3196
  %v3229 = vadd.f32 %v2737, %v3197
  %v3230 = vadd.f32 %v2738, %v3198
  %v3231 = vadd.f32 %v2739, %v3199
  %v3232 = vadd.f32 %v2740, %v3200
  %v3233 = vadd.f32 %v2741, %v3201
  %v3234 = vadd.f32 %v2742, %v3202
  %v3235 = vadd.f32 %v2743, %v3203
  %v3236 = vadd.f32 %v2744, %v3204
  %v3237 = vadd.f32 %v2745, %v3205
  %v3238 = vadd.f32 %v2746, %v3206
  %v3239 = vadd.f32 %v2747, %v3207
  %v3240 = vadd.f32 %v2748, %v3208
  %v3241 = vadd.f32 %v2749, %v3209
  %v3242 = vadd.f32 %v2750, %v3210
  %v3243 = vadd.f32 %v2751, %v3211
  %v3244 = vadd.f32 %v2752, %v3212
  %v3245 = vlaneseq
  %v3246 = vshrl.u32 %v3245, 7
  %v3247 = vsub.s32 4, %v3246
  %v3248 = vrot.slane %v426, %v3247
  %v3249 = vsub.f32 %v803, %v3248
  %v3250 = vsub.f32 %v850, %v3248
  %v3251 = vsub.f32 %v897, %v3248
  %v3252 = vsub.f32 %v944, %v3248
  %v3253 = vsub.f32 %v991, %v3248
  %v3254 = vsub.f32 %v1038, %v3248
  %v3255 = vsub.f32 %v1085, %v3248
  %v3256 = vsub.f32 %v1132, %v3248
  %v3257 = vsub.f32 %v1179, %v3248
  %v3258 = vsub.f32 %v1226, %v3248
  %v3259 = vsub.f32 %v1273, %v3248
  %v3260 = vsub.f32 %v1320, %v3248
  %v3261 = vsub.f32 %v1367, %v3248
  %v3262 = vsub.f32 %v1414, %v3248
  %v3263 = vsub.f32 %v1461, %v3248
  %v3264 = vsub.f32 %v1508, %v3248
  %v3265 = vsub.f32 %v1555, %v3248
  %v3266 = vsub.f32 %v1602, %v3248
  %v3267 = vsub.f32 %v1649, %v3248
  %v3268 = vsub.f32 %v1696, %v3248
  %v3269 = vsub.f32 %v1743, %v3248
  %v3270 = vsub.f32 %v1790, %v3248
  %v3271 = vsub.f32 %v1837, %v3248
  %v3272 = vsub.f32 %v1884, %v3248
  %v3273 = vsub.f32 %v1931, %v3248
  %v3274 = vsub.f32 %v1978, %v3248
  %v3275 = vsub.f32 %v2025, %v3248
  %v3276 = vsub.f32 %v2072, %v3248
  %v3277 = vsub.f32 %v2119, %v3248
  %v3278 = vsub.f32 %v2166, %v3248
  %v3279 = vsub.f32 %v2213, %v3248
  %v3280 = vsub.f32 %v2260, %v3248
  %v3281 = vmul.f32 %v3249, 0.15915494
  %v3282 = vmul.f32 %v3250, 0.15915494
  %v3283 = vmul.f32 %v3251, 0.15915494
  %v3284 = vmul.f32 %v3252, 0.15915494
  %v3285 = vmul.f32 %v3253, 0.15915494
  %v3286 = vmul.f32 %v3254, 0.15915494
  %v3287 = vmul.f32 %v3255, 0.15915494
  %v3288 = vmul.f32 %v3256, 0.15915494
  %v3289 = vmul.f32 %v3257, 0.15915494
  %v3290 = vmul.f32 %v3258, 0.15915494
  %v3291 = vmul.f32 %v3259, 0.15915494
  %v3292 = vmul.f32 %v3260, 0.15915494
  %v3293 = vmul.f32 %v3261, 0.15915494
  %v3294 = vmul.f32 %v3262, 0.15915494
  %v3295 = vmul.f32 %v3263, 0.15915494
  %v3296 = vmul.f32 %v3264, 0.15915494
  %v3297 = vmul.f32 %v3265, 0.15915494
  %v3298 = vmul.f32 %v3266, 0.15915494
  %v3299 = vmul.f32 %v3267, 0.15915494
  %v3300 = vmul.f32 %v3268, 0.15915494
  %v3301 = vmul.f32 %v3269, 0.15915494
  %v3302 = vmul.f32 %v3270, 0.15915494
  %v3303 = vmul.f32 %v3271, 0.15915494
  %v3304 = vmul.f32 %v3272, 0.15915494
  %v3305 = vmul.f32 %v3273, 0.15915494
  %v3306 = vmul.f32 %v3274, 0.15915494
  %v3307 = vmul.f32 %v3275, 0.15915494
  %v3308 = vmul.f32 %v3276, 0.15915494
  %v3309 = vmul.f32 %v3277, 0.15915494
  %v3310 = vmul.f32 %v3278, 0.15915494
  %v3311 = vmul.f32 %v3279, 0.15915494
  %v3312 = vmul.f32 %v3280, 0.15915494
  %vm3313 = vcmp.ge.f32.partialorder %v3281, 0.0
  %vm3314 = vcmp.ge.f32.partialorder %v3282, 0.0
  %vm3315 = vcmp.ge.f32.partialorder %v3283, 0.0
  %vm3316 = vcmp.ge.f32.partialorder %v3284, 0.0
  %vm3317 = vcmp.ge.f32.partialorder %v3285, 0.0
  %vm3318 = vcmp.ge.f32.partialorder %v3286, 0.0
  %vm3319 = vcmp.ge.f32.partialorder %v3287, 0.0
  %vm3320 = vcmp.ge.f32.partialorder %v3288, 0.0
  %vm3321 = vcmp.ge.f32.partialorder %v3289, 0.0
  %vm3322 = vcmp.ge.f32.partialorder %v3290, 0.0
  %vm3323 = vcmp.ge.f32.partialorder %v3291, 0.0
  %vm3324 = vcmp.ge.f32.partialorder %v3292, 0.0
  %vm3325 = vcmp.ge.f32.partialorder %v3293, 0.0
  %vm3326 = vcmp.ge.f32.partialorder %v3294, 0.0
  %vm3327 = vcmp.ge.f32.partialorder %v3295, 0.0
  %vm3328 = vcmp.ge.f32.partialorder %v3296, 0.0
  %vm3329 = vcmp.ge.f32.partialorder %v3297, 0.0
  %vm3330 = vcmp.ge.f32.partialorder %v3298, 0.0
  %vm3331 = vcmp.ge.f32.partialorder %v3299, 0.0
  %vm3332 = vcmp.ge.f32.partialorder %v3300, 0.0
  %vm3333 = vcmp.ge.f32.partialorder %v3301, 0.0
  %vm3334 = vcmp.ge.f32.partialorder %v3302, 0.0
  %vm3335 = vcmp.ge.f32.partialorder %v3303, 0.0
  %vm3336 = vcmp.ge.f32.partialorder %v3304, 0.0
  %vm3337 = vcmp.ge.f32.partialorder %v3305, 0.0
  %vm3338 = vcmp.ge.f32.partialorder %v3306, 0.0
  %vm3339 = vcmp.ge.f32.partialorder %v3307, 0.0
  %vm3340 = vcmp.ge.f32.partialorder %v3308, 0.0
  %vm3341 = vcmp.ge.f32.partialorder %v3309, 0.0
  %vm3342 = vcmp.ge.f32.partialorder %v3310, 0.0
  %vm3343 = vcmp.ge.f32.partialorder %v3311, 0.0
  %vm3344 = vcmp.ge.f32.partialorder %v3312, 0.0
  %v3345 = vfloor.f32 %v3281
  %v3346 = vfloor.f32 %v3282
  %v3347 = vfloor.f32 %v3283
  %v3348 = vfloor.f32 %v3284
  %v3349 = vfloor.f32 %v3285
  %v3350 = vfloor.f32 %v3286
  %v3351 = vfloor.f32 %v3287
  %v3352 = vfloor.f32 %v3288
  %v3353 = vfloor.f32 %v3289
  %v3354 = vfloor.f32 %v3290
  %v3355 = vfloor.f32 %v3291
  %v3356 = vfloor.f32 %v3292
  %v3357 = vfloor.f32 %v3293
  %v3358 = vfloor.f32 %v3294
  %v3359 = vfloor.f32 %v3295
  %v3360 = vfloor.f32 %v3296
  %v3361 = vfloor.f32 %v3297
  %v3362 = vfloor.f32 %v3298
  %v3363 = vfloor.f32 %v3299
  %v3364 = vfloor.f32 %v3300
  %v3365 = vfloor.f32 %v3301
  %v3366 = vfloor.f32 %v3302
  %v3367 = vfloor.f32 %v3303
  %v3368 = vfloor.f32 %v3304
  %v3369 = vfloor.f32 %v3305
  %v3370 = vfloor.f32 %v3306
  %v3371 = vfloor.f32 %v3307
  %v3372 = vfloor.f32 %v3308
  %v3373 = vfloor.f32 %v3309
  %v3374 = vfloor.f32 %v3310
  %v3375 = vfloor.f32 %v3311
  %v3376 = vfloor.f32 %v3312
  %v3377 = vceil.f32 %v3281
  %v3378 = vceil.f32 %v3282
  %v3379 = vceil.f32 %v3283
  %v3380 = vceil.f32 %v3284
  %v3381 = vceil.f32 %v3285
  %v3382 = vceil.f32 %v3286
  %v3383 = vceil.f32 %v3287
  %v3384 = vceil.f32 %v3288
  %v3385 = vceil.f32 %v3289
  %v3386 = vceil.f32 %v3290
  %v3387 = vceil.f32 %v3291
  %v3388 = vceil.f32 %v3292
  %v3389 = vceil.f32 %v3293
  %v3390 = vceil.f32 %v3294
  %v3391 = vceil.f32 %v3295
  %v3392 = vceil.f32 %v3296
  %v3393 = vceil.f32 %v3297
  %v3394 = vceil.f32 %v3298
  %v3395 = vceil.f32 %v3299
  %v3396 = vceil.f32 %v3300
  %v3397 = vceil.f32 %v3301
  %v3398 = vceil.f32 %v3302
  %v3399 = vceil.f32 %v3303
  %v3400 = vceil.f32 %v3304
  %v3401 = vceil.f32 %v3305
  %v3402 = vceil.f32 %v3306
  %v3403 = vceil.f32 %v3307
  %v3404 = vceil.f32 %v3308
  %v3405 = vceil.f32 %v3309
  %v3406 = vceil.f32 %v3310
  %v3407 = vceil.f32 %v3311
  %v3408 = vceil.f32 %v3312
  %v3409 = vsel %vm3313, %v3345, %v3377
  %v3410 = vsel %vm3314, %v3346, %v3378
  %v3411 = vsel %vm3315, %v3347, %v3379
  %v3412 = vsel %vm3316, %v3348, %v3380
  %v3413 = vsel %vm3317, %v3349, %v3381
  %v3414 = vsel %vm3318, %v3350, %v3382
  %v3415 = vsel %vm3319, %v3351, %v3383
  %v3416 = vsel %vm3320, %v3352, %v3384
  %v3417 = vsel %vm3321, %v3353, %v3385
  %v3418 = vsel %vm3322, %v3354, %v3386
  %v3419 = vsel %vm3323, %v3355, %v3387
  %v3420 = vsel %vm3324, %v3356, %v3388
  %v3421 = vsel %vm3325, %v3357, %v3389
  %v3422 = vsel %vm3326, %v3358, %v3390
  %v3423 = vsel %vm3327, %v3359, %v3391
  %v3424 = vsel %vm3328, %v3360, %v3392
  %v3425 = vsel %vm3329, %v3361, %v3393
  %v3426 = vsel %vm3330, %v3362, %v3394
  %v3427 = vsel %vm3331, %v3363, %v3395
  %v3428 = vsel %vm3332, %v3364, %v3396
  %v3429 = vsel %vm3333, %v3365, %v3397
  %v3430 = vsel %vm3334, %v3366, %v3398
  %v3431 = vsel %vm3335, %v3367, %v3399
  %v3432 = vsel %vm3336, %v3368, %v3400
  %v3433 = vsel %vm3337, %v3369, %v3401
  %v3434 = vsel %vm3338, %v3370, %v3402
  %v3435 = vsel %vm3339, %v3371, %v3403
  %v3436 = vsel %vm3340, %v3372, %v3404
  %v3437 = vsel %vm3341, %v3373, %v3405
  %v3438 = vsel %vm3342, %v3374, %v3406
  %v3439 = vsel %vm3343, %v3375, %v3407
  %v3440 = vsel %vm3344, %v3376, %v3408
  %v3441 = vmul.f32 %v3409, 6.2831855
  %v3442 = vmul.f32 %v3410, 6.2831855
  %v3443 = vmul.f32 %v3411, 6.2831855
  %v3444 = vmul.f32 %v3412, 6.2831855
  %v3445 = vmul.f32 %v3413, 6.2831855
  %v3446 = vmul.f32 %v3414, 6.2831855
  %v3447 = vmul.f32 %v3415, 6.2831855
  %v3448 = vmul.f32 %v3416, 6.2831855
  %v3449 = vmul.f32 %v3417, 6.2831855
  %v3450 = vmul.f32 %v3418, 6.2831855
  %v3451 = vmul.f32 %v3419, 6.2831855
  %v3452 = vmul.f32 %v3420, 6.2831855
  %v3453 = vmul.f32 %v3421, 6.2831855
  %v3454 = vmul.f32 %v3422, 6.2831855
  %v3455 = vmul.f32 %v3423, 6.2831855
  %v3456 = vmul.f32 %v3424, 6.2831855
  %v3457 = vmul.f32 %v3425, 6.2831855
  %v3458 = vmul.f32 %v3426, 6.2831855
  %v3459 = vmul.f32 %v3427, 6.2831855
  %v3460 = vmul.f32 %v3428, 6.2831855
  %v3461 = vmul.f32 %v3429, 6.2831855
  %v3462 = vmul.f32 %v3430, 6.2831855
  %v3463 = vmul.f32 %v3431, 6.2831855
  %v3464 = vmul.f32 %v3432, 6.2831855
  %v3465 = vmul.f32 %v3433, 6.2831855
  %v3466 = vmul.f32 %v3434, 6.2831855
  %v3467 = vmul.f32 %v3435, 6.2831855
  %v3468 = vmul.f32 %v3436, 6.2831855
  %v3469 = vmul.f32 %v3437, 6.2831855
  %v3470 = vmul.f32 %v3438, 6.2831855
  %v3471 = vmul.f32 %v3439, 6.2831855
  %v3472 = vmul.f32 %v3440, 6.2831855
  %v3473 = vsub.f32 %v3249, %v3441
  %v3474 = vsub.f32 %v3250, %v3442
  %v3475 = vsub.f32 %v3251, %v3443
  %v3476 = vsub.f32 %v3252, %v3444
  %v3477 = vsub.f32 %v3253, %v3445
  %v3478 = vsub.f32 %v3254, %v3446
  %v3479 = vsub.f32 %v3255, %v3447
  %v3480 = vsub.f32 %v3256, %v3448
  %v3481 = vsub.f32 %v3257, %v3449
  %v3482 = vsub.f32 %v3258, %v3450
  %v3483 = vsub.f32 %v3259, %v3451
  %v3484 = vsub.f32 %v3260, %v3452
  %v3485 = vsub.f32 %v3261, %v3453
  %v3486 = vsub.f32 %v3262, %v3454
  %v3487 = vsub.f32 %v3263, %v3455
  %v3488 = vsub.f32 %v3264, %v3456
  %v3489 = vsub.f32 %v3265, %v3457
  %v3490 = vsub.f32 %v3266, %v3458
  %v3491 = vsub.f32 %v3267, %v3459
  %v3492 = vsub.f32 %v3268, %v3460
  %v3493 = vsub.f32 %v3269, %v3461
  %v3494 = vsub.f32 %v3270, %v3462
  %v3495 = vsub.f32 %v3271, %v3463
  %v3496 = vsub.f32 %v3272, %v3464
  %v3497 = vsub.f32 %v3273, %v3465
  %v3498 = vsub.f32 %v3274, %v3466
  %v3499 = vsub.f32 %v3275, %v3467
  %v3500 = vsub.f32 %v3276, %v3468
  %v3501 = vsub.f32 %v3277, %v3469
  %v3502 = vsub.f32 %v3278, %v3470
  %v3503 = vsub.f32 %v3279, %v3471
  %v3504 = vsub.f32 %v3280, %v3472
  %v3505 = vlaneseq
  %v3506 = vshrl.u32 %v3505, 7
  %v3507 = vsub.s32 2, %v3506
  %v3508 = vrot.slane %v425, %v3507
  %v3509 = vmul.f32 %v3508, %v3473
  %v3510 = vmul.f32 %v3508, %v3474
  %v3511 = vmul.f32 %v3508, %v3475
  %v3512 = vmul.f32 %v3508, %v3476
  %v3513 = vmul.f32 %v3508, %v3477
  %v3514 = vmul.f32 %v3508, %v3478
  %v3515 = vmul.f32 %v3508, %v3479
  %v3516 = vmul.f32 %v3508, %v3480
  %v3517 = vmul.f32 %v3508, %v3481
  %v3518 = vmul.f32 %v3508, %v3482
  %v3519 = vmul.f32 %v3508, %v3483
  %v3520 = vmul.f32 %v3508, %v3484
  %v3521 = vmul.f32 %v3508, %v3485
  %v3522 = vmul.f32 %v3508, %v3486
  %v3523 = vmul.f32 %v3508, %v3487
  %v3524 = vmul.f32 %v3508, %v3488
  %v3525 = vmul.f32 %v3508, %v3489
  %v3526 = vmul.f32 %v3508, %v3490
  %v3527 = vmul.f32 %v3508, %v3491
  %v3528 = vmul.f32 %v3508, %v3492
  %v3529 = vmul.f32 %v3508, %v3493
  %v3530 = vmul.f32 %v3508, %v3494
  %v3531 = vmul.f32 %v3508, %v3495
  %v3532 = vmul.f32 %v3508, %v3496
  %v3533 = vmul.f32 %v3508, %v3497
  %v3534 = vmul.f32 %v3508, %v3498
  %v3535 = vmul.f32 %v3508, %v3499
  %v3536 = vmul.f32 %v3508, %v3500
  %v3537 = vmul.f32 %v3508, %v3501
  %v3538 = vmul.f32 %v3508, %v3502
  %v3539 = vmul.f32 %v3508, %v3503
  %v3540 = vmul.f32 %v3508, %v3504
  %v3541 = vmul.f32 %v3473, %v3473
  %v3542 = vmul.f32 %v3474, %v3474
  %v3543 = vmul.f32 %v3475, %v3475
  %v3544 = vmul.f32 %v3476, %v3476
  %v3545 = vmul.f32 %v3477, %v3477
  %v3546 = vmul.f32 %v3478, %v3478
  %v3547 = vmul.f32 %v3479, %v3479
  %v3548 = vmul.f32 %v3480, %v3480
  %v3549 = vmul.f32 %v3481, %v3481
  %v3550 = vmul.f32 %v3482, %v3482
  %v3551 = vmul.f32 %v3483, %v3483
  %v3552 = vmul.f32 %v3484, %v3484
  %v3553 = vmul.f32 %v3485, %v3485
  %v3554 = vmul.f32 %v3486, %v3486
  %v3555 = vmul.f32 %v3487, %v3487
  %v3556 = vmul.f32 %v3488, %v3488
  %v3557 = vmul.f32 %v3489, %v3489
  %v3558 = vmul.f32 %v3490, %v3490
  %v3559 = vmul.f32 %v3491, %v3491
  %v3560 = vmul.f32 %v3492, %v3492
  %v3561 = vmul.f32 %v3493, %v3493
  %v3562 = vmul.f32 %v3494, %v3494
  %v3563 = vmul.f32 %v3495, %v3495
  %v3564 = vmul.f32 %v3496, %v3496
  %v3565 = vmul.f32 %v3497, %v3497
  %v3566 = vmul.f32 %v3498, %v3498
  %v3567 = vmul.f32 %v3499, %v3499
  %v3568 = vmul.f32 %v3500, %v3500
  %v3569 = vmul.f32 %v3501, %v3501
  %v3570 = vmul.f32 %v3502, %v3502
  %v3571 = vmul.f32 %v3503, %v3503
  %v3572 = vmul.f32 %v3504, %v3504
  %v3573 = vlaneseq
  %v3574 = vshrl.u32 %v3573, 7
  %v3575 = vsub.s32 7, %v3574
  %v3576 = vrot.slane %v430, %v3575
  %v3577 = vmul.f32 %v3541, %v3576
  %v3578 = vmul.f32 %v3542, %v3576
  %v3579 = vmul.f32 %v3543, %v3576
  %v3580 = vmul.f32 %v3544, %v3576
  %v3581 = vmul.f32 %v3545, %v3576
  %v3582 = vmul.f32 %v3546, %v3576
  %v3583 = vmul.f32 %v3547, %v3576
  %v3584 = vmul.f32 %v3548, %v3576
  %v3585 = vmul.f32 %v3549, %v3576
  %v3586 = vmul.f32 %v3550, %v3576
  %v3587 = vmul.f32 %v3551, %v3576
  %v3588 = vmul.f32 %v3552, %v3576
  %v3589 = vmul.f32 %v3553, %v3576
  %v3590 = vmul.f32 %v3554, %v3576
  %v3591 = vmul.f32 %v3555, %v3576
  %v3592 = vmul.f32 %v3556, %v3576
  %v3593 = vmul.f32 %v3557, %v3576
  %v3594 = vmul.f32 %v3558, %v3576
  %v3595 = vmul.f32 %v3559, %v3576
  %v3596 = vmul.f32 %v3560, %v3576
  %v3597 = vmul.f32 %v3561, %v3576
  %v3598 = vmul.f32 %v3562, %v3576
  %v3599 = vmul.f32 %v3563, %v3576
  %v3600 = vmul.f32 %v3564, %v3576
  %v3601 = vmul.f32 %v3565, %v3576
  %v3602 = vmul.f32 %v3566, %v3576
  %v3603 = vmul.f32 %v3567, %v3576
  %v3604 = vmul.f32 %v3568, %v3576
  %v3605 = vmul.f32 %v3569, %v3576
  %v3606 = vmul.f32 %v3570, %v3576
  %v3607 = vmul.f32 %v3571, %v3576
  %v3608 = vmul.f32 %v3572, %v3576
  %v3609 = vmul.f32 %v3577, 1.442695
  %v3610 = vpow.pop %v3609
  %v3611 = vmul.f32 %v3578, 1.442695
  %v3612 = vpow.pop %v3611
  %v3613 = vmul.f32 %v3579, 1.442695
  %v3614 = vpow.pop %v3613
  %v3615 = vmul.f32 %v3580, 1.442695
  %v3616 = vpow.pop %v3615
  %v3617 = vmul.f32 %v3581, 1.442695
  %v3618 = vpow.pop %v3617
  %v3619 = vmul.f32 %v3582, 1.442695
  %v3620 = vpow.pop %v3619
  %v3621 = vmul.f32 %v3583, 1.442695
  %v3622 = vpow.pop %v3621
  %v3623 = vmul.f32 %v3584, 1.442695
  %v3624 = vpow.pop %v3623
  %v3625 = vmul.f32 %v3585, 1.442695
  %v3626 = vpow.pop %v3625
  %v3627 = vmul.f32 %v3586, 1.442695
  %v3628 = vpow.pop %v3627
  %v3629 = vmul.f32 %v3587, 1.442695
  %v3630 = vpow.pop %v3629
  %v3631 = vmul.f32 %v3588, 1.442695
  %v3632 = vpow.pop %v3631
  %v3633 = vmul.f32 %v3589, 1.442695
  %v3634 = vpow.pop %v3633
  %v3635 = vmul.f32 %v3590, 1.442695
  %v3636 = vpow.pop %v3635
  %v3637 = vmul.f32 %v3591, 1.442695
  %v3638 = vpow.pop %v3637
  %v3639 = vmul.f32 %v3592, 1.442695
  %v3640 = vpow.pop %v3639
  %v3641 = vmul.f32 %v3593, 1.442695
  %v3642 = vpow.pop %v3641
  %v3643 = vmul.f32 %v3594, 1.442695
  %v3644 = vpow.pop %v3643
  %v3645 = vmul.f32 %v3595, 1.442695
  %v3646 = vpow.pop %v3645
  %v3647 = vmul.f32 %v3596, 1.442695
  %v3648 = vpow.pop %v3647
  %v3649 = vmul.f32 %v3597, 1.442695
  %v3650 = vpow.pop %v3649
  %v3651 = vmul.f32 %v3598, 1.442695
  %v3652 = vpow.pop %v3651
  %v3653 = vmul.f32 %v3599, 1.442695
  %v3654 = vpow.pop %v3653
  %v3655 = vmul.f32 %v3600, 1.442695
  %v3656 = vpow.pop %v3655
  %v3657 = vmul.f32 %v3601, 1.442695
  %v3658 = vpow.pop %v3657
  %v3659 = vmul.f32 %v3602, 1.442695
  %v3660 = vpow.pop %v3659
  %v3661 = vmul.f32 %v3603, 1.442695
  %v3662 = vpow.pop %v3661
  %v3663 = vmul.f32 %v3604, 1.442695
  %v3664 = vpow.pop %v3663
  %v3665 = vmul.f32 %v3605, 1.442695
  %v3666 = vpow.pop %v3665
  %v3667 = vmul.f32 %v3606, 1.442695
  %v3668 = vpow.pop %v3667
  %v3669 = vmul.f32 %v3607, 1.442695
  %v3670 = vpow.pop %v3669
  %v3671 = vmul.f32 %v3608, 1.442695
  %v3672 = vpow.pop %v3671
  %v3673 = vmul.f32 %v3509, %v3610
  %v3674 = vmul.f32 %v3510, %v3612
  %v3675 = vmul.f32 %v3511, %v3614
  %v3676 = vmul.f32 %v3512, %v3616
  %v3677 = vmul.f32 %v3513, %v3618
  %v3678 = vmul.f32 %v3514, %v3620
  %v3679 = vmul.f32 %v3515, %v3622
  %v3680 = vmul.f32 %v3516, %v3624
  %v3681 = vmul.f32 %v3517, %v3626
  %v3682 = vmul.f32 %v3518, %v3628
  %v3683 = vmul.f32 %v3519, %v3630
  %v3684 = vmul.f32 %v3520, %v3632
  %v3685 = vmul.f32 %v3521, %v3634
  %v3686 = vmul.f32 %v3522, %v3636
  %v3687 = vmul.f32 %v3523, %v3638
  %v3688 = vmul.f32 %v3524, %v3640
  %v3689 = vmul.f32 %v3525, %v3642
  %v3690 = vmul.f32 %v3526, %v3644
  %v3691 = vmul.f32 %v3527, %v3646
  %v3692 = vmul.f32 %v3528, %v3648
  %v3693 = vmul.f32 %v3529, %v3650
  %v3694 = vmul.f32 %v3530, %v3652
  %v3695 = vmul.f32 %v3531, %v3654
  %v3696 = vmul.f32 %v3532, %v3656
  %v3697 = vmul.f32 %v3533, %v3658
  %v3698 = vmul.f32 %v3534, %v3660
  %v3699 = vmul.f32 %v3535, %v3662
  %v3700 = vmul.f32 %v3536, %v3664
  %v3701 = vmul.f32 %v3537, %v3666
  %v3702 = vmul.f32 %v3538, %v3668
  %v3703 = vmul.f32 %v3539, %v3670
  %v3704 = vmul.f32 %v3540, %v3672
  %v3705 = vadd.f32 %v3213, %v3673
  %v3706 = vadd.f32 %v3214, %v3674
  %v3707 = vadd.f32 %v3215, %v3675
  %v3708 = vadd.f32 %v3216, %v3676
  %v3709 = vadd.f32 %v3217, %v3677
  %v3710 = vadd.f32 %v3218, %v3678
  %v3711 = vadd.f32 %v3219, %v3679
  %v3712 = vadd.f32 %v3220, %v3680
  %v3713 = vadd.f32 %v3221, %v3681
  %v3714 = vadd.f32 %v3222, %v3682
  %v3715 = vadd.f32 %v3223, %v3683
  %v3716 = vadd.f32 %v3224, %v3684
  %v3717 = vadd.f32 %v3225, %v3685
  %v3718 = vadd.f32 %v3226, %v3686
  %v3719 = vadd.f32 %v3227, %v3687
  %v3720 = vadd.f32 %v3228, %v3688
  %v3721 = vadd.f32 %v3229, %v3689
  %v3722 = vadd.f32 %v3230, %v3690
  %v3723 = vadd.f32 %v3231, %v3691
  %v3724 = vadd.f32 %v3232, %v3692
  %v3725 = vadd.f32 %v3233, %v3693
  %v3726 = vadd.f32 %v3234, %v3694
  %v3727 = vadd.f32 %v3235, %v3695
  %v3728 = vadd.f32 %v3236, %v3696
  %v3729 = vadd.f32 %v3237, %v3697
  %v3730 = vadd.f32 %v3238, %v3698
  %v3731 = vadd.f32 %v3239, %v3699
  %v3732 = vadd.f32 %v3240, %v3700
  %v3733 = vadd.f32 %v3241, %v3701
  %v3734 = vadd.f32 %v3242, %v3702
  %v3735 = vadd.f32 %v3243, %v3703
  %v3736 = vadd.f32 %v3244, %v3704
  %v3737 = vlaneseq
  %v3738 = vshrl.u32 %v3737, 7
  %v3739 = vsub.s32 5, %v3738
  %v3740 = vrot.slane %v426, %v3739
  %v3741 = vsub.f32 %v803, %v3740
  %v3742 = vsub.f32 %v850, %v3740
  %v3743 = vsub.f32 %v897, %v3740
  %v3744 = vsub.f32 %v944, %v3740
  %v3745 = vsub.f32 %v991, %v3740
  %v3746 = vsub.f32 %v1038, %v3740
  %v3747 = vsub.f32 %v1085, %v3740
  %v3748 = vsub.f32 %v1132, %v3740
  %v3749 = vsub.f32 %v1179, %v3740
  %v3750 = vsub.f32 %v1226, %v3740
  %v3751 = vsub.f32 %v1273, %v3740
  %v3752 = vsub.f32 %v1320, %v3740
  %v3753 = vsub.f32 %v1367, %v3740
  %v3754 = vsub.f32 %v1414, %v3740
  %v3755 = vsub.f32 %v1461, %v3740
  %v3756 = vsub.f32 %v1508, %v3740
  %v3757 = vsub.f32 %v1555, %v3740
  %v3758 = vsub.f32 %v1602, %v3740
  %v3759 = vsub.f32 %v1649, %v3740
  %v3760 = vsub.f32 %v1696, %v3740
  %v3761 = vsub.f32 %v1743, %v3740
  %v3762 = vsub.f32 %v1790, %v3740
  %v3763 = vsub.f32 %v1837, %v3740
  %v3764 = vsub.f32 %v1884, %v3740
  %v3765 = vsub.f32 %v1931, %v3740
  %v3766 = vsub.f32 %v1978, %v3740
  %v3767 = vsub.f32 %v2025, %v3740
  %v3768 = vsub.f32 %v2072, %v3740
  %v3769 = vsub.f32 %v2119, %v3740
  %v3770 = vsub.f32 %v2166, %v3740
  %v3771 = vsub.f32 %v2213, %v3740
  %v3772 = vsub.f32 %v2260, %v3740
  %v3773 = vmul.f32 %v3741, 0.15915494
  %v3774 = vmul.f32 %v3742, 0.15915494
  %v3775 = vmul.f32 %v3743, 0.15915494
  %v3776 = vmul.f32 %v3744, 0.15915494
  %v3777 = vmul.f32 %v3745, 0.15915494
  %v3778 = vmul.f32 %v3746, 0.15915494
  %v3779 = vmul.f32 %v3747, 0.15915494
  %v3780 = vmul.f32 %v3748, 0.15915494
  %v3781 = vmul.f32 %v3749, 0.15915494
  %v3782 = vmul.f32 %v3750, 0.15915494
  %v3783 = vmul.f32 %v3751, 0.15915494
  %v3784 = vmul.f32 %v3752, 0.15915494
  %v3785 = vmul.f32 %v3753, 0.15915494
  %v3786 = vmul.f32 %v3754, 0.15915494
  %v3787 = vmul.f32 %v3755, 0.15915494
  %v3788 = vmul.f32 %v3756, 0.15915494
  %v3789 = vmul.f32 %v3757, 0.15915494
  %v3790 = vmul.f32 %v3758, 0.15915494
  %v3791 = vmul.f32 %v3759, 0.15915494
  %v3792 = vmul.f32 %v3760, 0.15915494
  %v3793 = vmul.f32 %v3761, 0.15915494
  %v3794 = vmul.f32 %v3762, 0.15915494
  %v3795 = vmul.f32 %v3763, 0.15915494
  %v3796 = vmul.f32 %v3764, 0.15915494
  %v3797 = vmul.f32 %v3765, 0.15915494
  %v3798 = vmul.f32 %v3766, 0.15915494
  %v3799 = vmul.f32 %v3767, 0.15915494
  %v3800 = vmul.f32 %v3768, 0.15915494
  %v3801 = vmul.f32 %v3769, 0.15915494
  %v3802 = vmul.f32 %v3770, 0.15915494
  %v3803 = vmul.f32 %v3771, 0.15915494
  %v3804 = vmul.f32 %v3772, 0.15915494
  %vm3805 = vcmp.ge.f32.partialorder %v3773, 0.0
  %vm3806 = vcmp.ge.f32.partialorder %v3774, 0.0
  %vm3807 = vcmp.ge.f32.partialorder %v3775, 0.0
  %vm3808 = vcmp.ge.f32.partialorder %v3776, 0.0
  %vm3809 = vcmp.ge.f32.partialorder %v3777, 0.0
  %vm3810 = vcmp.ge.f32.partialorder %v3778, 0.0
  %vm3811 = vcmp.ge.f32.partialorder %v3779, 0.0
  %vm3812 = vcmp.ge.f32.partialorder %v3780, 0.0
  %vm3813 = vcmp.ge.f32.partialorder %v3781, 0.0
  %vm3814 = vcmp.ge.f32.partialorder %v3782, 0.0
  %vm3815 = vcmp.ge.f32.partialorder %v3783, 0.0
  %vm3816 = vcmp.ge.f32.partialorder %v3784, 0.0
  %vm3817 = vcmp.ge.f32.partialorder %v3785, 0.0
  %vm3818 = vcmp.ge.f32.partialorder %v3786, 0.0
  %vm3819 = vcmp.ge.f32.partialorder %v3787, 0.0
  %vm3820 = vcmp.ge.f32.partialorder %v3788, 0.0
  %vm3821 = vcmp.ge.f32.partialorder %v3789, 0.0
  %vm3822 = vcmp.ge.f32.partialorder %v3790, 0.0
  %vm3823 = vcmp.ge.f32.partialorder %v3791, 0.0
  %vm3824 = vcmp.ge.f32.partialorder %v3792, 0.0
  %vm3825 = vcmp.ge.f32.partialorder %v3793, 0.0
  %vm3826 = vcmp.ge.f32.partialorder %v3794, 0.0
  %vm3827 = vcmp.ge.f32.partialorder %v3795, 0.0
  %vm3828 = vcmp.ge.f32.partialorder %v3796, 0.0
  %vm3829 = vcmp.ge.f32.partialorder %v3797, 0.0
  %vm3830 = vcmp.ge.f32.partialorder %v3798, 0.0
  %vm3831 = vcmp.ge.f32.partialorder %v3799, 0.0
  %vm3832 = vcmp.ge.f32.partialorder %v3800, 0.0
  %vm3833 = vcmp.ge.f32.partialorder %v3801, 0.0
  %vm3834 = vcmp.ge.f32.partialorder %v3802, 0.0
  %vm3835 = vcmp.ge.f32.partialorder %v3803, 0.0
  %vm3836 = vcmp.ge.f32.partialorder %v3804, 0.0
  %v3837 = vfloor.f32 %v3773
  %v3838 = vfloor.f32 %v3774
  %v3839 = vfloor.f32 %v3775
  %v3840 = vfloor.f32 %v3776
  %v3841 = vfloor.f32 %v3777
  %v3842 = vfloor.f32 %v3778
  %v3843 = vfloor.f32 %v3779
  %v3844 = vfloor.f32 %v3780
  %v3845 = vfloor.f32 %v3781
  %v3846 = vfloor.f32 %v3782
  %v3847 = vfloor.f32 %v3783
  %v3848 = vfloor.f32 %v3784
  %v3849 = vfloor.f32 %v3785
  %v3850 = vfloor.f32 %v3786
  %v3851 = vfloor.f32 %v3787
  %v3852 = vfloor.f32 %v3788
  %v3853 = vfloor.f32 %v3789
  %v3854 = vfloor.f32 %v3790
  %v3855 = vfloor.f32 %v3791
  %v3856 = vfloor.f32 %v3792
  %v3857 = vfloor.f32 %v3793
  %v3858 = vfloor.f32 %v3794
  %v3859 = vfloor.f32 %v3795
  %v3860 = vfloor.f32 %v3796
  %v3861 = vfloor.f32 %v3797
  %v3862 = vfloor.f32 %v3798
  %v3863 = vfloor.f32 %v3799
  %v3864 = vfloor.f32 %v3800
  %v3865 = vfloor.f32 %v3801
  %v3866 = vfloor.f32 %v3802
  %v3867 = vfloor.f32 %v3803
  %v3868 = vfloor.f32 %v3804
  %v3869 = vceil.f32 %v3773
  %v3870 = vceil.f32 %v3774
  %v3871 = vceil.f32 %v3775
  %v3872 = vceil.f32 %v3776
  %v3873 = vceil.f32 %v3777
  %v3874 = vceil.f32 %v3778
  %v3875 = vceil.f32 %v3779
  %v3876 = vceil.f32 %v3780
  %v3877 = vceil.f32 %v3781
  %v3878 = vceil.f32 %v3782
  %v3879 = vceil.f32 %v3783
  %v3880 = vceil.f32 %v3784
  %v3881 = vceil.f32 %v3785
  %v3882 = vceil.f32 %v3786
  %v3883 = vceil.f32 %v3787
  %v3884 = vceil.f32 %v3788
  %v3885 = vceil.f32 %v3789
  %v3886 = vceil.f32 %v3790
  %v3887 = vceil.f32 %v3791
  %v3888 = vceil.f32 %v3792
  %v3889 = vceil.f32 %v3793
  %v3890 = vceil.f32 %v3794
  %v3891 = vceil.f32 %v3795
  %v3892 = vceil.f32 %v3796
  %v3893 = vceil.f32 %v3797
  %v3894 = vceil.f32 %v3798
  %v3895 = vceil.f32 %v3799
  %v3896 = vceil.f32 %v3800
  %v3897 = vceil.f32 %v3801
  %v3898 = vceil.f32 %v3802
  %v3899 = vceil.f32 %v3803
  %v3900 = vceil.f32 %v3804
  %v3901 = vsel %vm3805, %v3837, %v3869
  %v3902 = vsel %vm3806, %v3838, %v3870
  %v3903 = vsel %vm3807, %v3839, %v3871
  %v3904 = vsel %vm3808, %v3840, %v3872
  %v3905 = vsel %vm3809, %v3841, %v3873
  %v3906 = vsel %vm3810, %v3842, %v3874
  %v3907 = vsel %vm3811, %v3843, %v3875
  %v3908 = vsel %vm3812, %v3844, %v3876
  %v3909 = vsel %vm3813, %v3845, %v3877
  %v3910 = vsel %vm3814, %v3846, %v3878
  %v3911 = vsel %vm3815, %v3847, %v3879
  %v3912 = vsel %vm3816, %v3848, %v3880
  %v3913 = vsel %vm3817, %v3849, %v3881
  %v3914 = vsel %vm3818, %v3850, %v3882
  %v3915 = vsel %vm3819, %v3851, %v3883
  %v3916 = vsel %vm3820, %v3852, %v3884
  %v3917 = vsel %vm3821, %v3853, %v3885
  %v3918 = vsel %vm3822, %v3854, %v3886
  %v3919 = vsel %vm3823, %v3855, %v3887
  %v3920 = vsel %vm3824, %v3856, %v3888
  %v3921 = vsel %vm3825, %v3857, %v3889
  %v3922 = vsel %vm3826, %v3858, %v3890
  %v3923 = vsel %vm3827, %v3859, %v3891
  %v3924 = vsel %vm3828, %v3860, %v3892
  %v3925 = vsel %vm3829, %v3861, %v3893
  %v3926 = vsel %vm3830, %v3862, %v3894
  %v3927 = vsel %vm3831, %v3863, %v3895
  %v3928 = vsel %vm3832, %v3864, %v3896
  %v3929 = vsel %vm3833, %v3865, %v3897
  %v3930 = vsel %vm3834, %v3866, %v3898
  %v3931 = vsel %vm3835, %v3867, %v3899
  %v3932 = vsel %vm3836, %v3868, %v3900
  %v3933 = vmul.f32 %v3901, 6.2831855
  %v3934 = vmul.f32 %v3902, 6.2831855
  %v3935 = vmul.f32 %v3903, 6.2831855
  %v3936 = vmul.f32 %v3904, 6.2831855
  %v3937 = vmul.f32 %v3905, 6.2831855
  %v3938 = vmul.f32 %v3906, 6.2831855
  %v3939 = vmul.f32 %v3907, 6.2831855
  %v3940 = vmul.f32 %v3908, 6.2831855
  %v3941 = vmul.f32 %v3909, 6.2831855
  %v3942 = vmul.f32 %v3910, 6.2831855
  %v3943 = vmul.f32 %v3911, 6.2831855
  %v3944 = vmul.f32 %v3912, 6.2831855
  %v3945 = vmul.f32 %v3913, 6.2831855
  %v3946 = vmul.f32 %v3914, 6.2831855
  %v3947 = vmul.f32 %v3915, 6.2831855
  %v3948 = vmul.f32 %v3916, 6.2831855
  %v3949 = vmul.f32 %v3917, 6.2831855
  %v3950 = vmul.f32 %v3918, 6.2831855
  %v3951 = vmul.f32 %v3919, 6.2831855
  %v3952 = vmul.f32 %v3920, 6.2831855
  %v3953 = vmul.f32 %v3921, 6.2831855
  %v3954 = vmul.f32 %v3922, 6.2831855
  %v3955 = vmul.f32 %v3923, 6.2831855
  %v3956 = vmul.f32 %v3924, 6.2831855
  %v3957 = vmul.f32 %v3925, 6.2831855
  %v3958 = vmul.f32 %v3926, 6.2831855
  %v3959 = vmul.f32 %v3927, 6.2831855
  %v3960 = vmul.f32 %v3928, 6.2831855
  %v3961 = vmul.f32 %v3929, 6.2831855
  %v3962 = vmul.f32 %v3930, 6.2831855
  %v3963 = vmul.f32 %v3931, 6.2831855
  %v3964 = vmul.f32 %v3932, 6.2831855
  %v3965 = vsub.f32 %v3741, %v3933
  %v3966 = vsub.f32 %v3742, %v3934
  %v3967 = vsub.f32 %v3743, %v3935
  %v3968 = vsub.f32 %v3744, %v3936
  %v3969 = vsub.f32 %v3745, %v3937
  %v3970 = vsub.f32 %v3746, %v3938
  %v3971 = vsub.f32 %v3747, %v3939
  %v3972 = vsub.f32 %v3748, %v3940
  %v3973 = vsub.f32 %v3749, %v3941
  %v3974 = vsub.f32 %v3750, %v3942
  %v3975 = vsub.f32 %v3751, %v3943
  %v3976 = vsub.f32 %v3752, %v3944
  %v3977 = vsub.f32 %v3753, %v3945
  %v3978 = vsub.f32 %v3754, %v3946
  %v3979 = vsub.f32 %v3755, %v3947
  %v3980 = vsub.f32 %v3756, %v3948
  %v3981 = vsub.f32 %v3757, %v3949
  %v3982 = vsub.f32 %v3758, %v3950
  %v3983 = vsub.f32 %v3759, %v3951
  %v3984 = vsub.f32 %v3760, %v3952
  %v3985 = vsub.f32 %v3761, %v3953
  %v3986 = vsub.f32 %v3762, %v3954
  %v3987 = vsub.f32 %v3763, %v3955
  %v3988 = vsub.f32 %v3764, %v3956
  %v3989 = vsub.f32 %v3765, %v3957
  %v3990 = vsub.f32 %v3766, %v3958
  %v3991 = vsub.f32 %v3767, %v3959
  %v3992 = vsub.f32 %v3768, %v3960
  %v3993 = vsub.f32 %v3769, %v3961
  %v3994 = vsub.f32 %v3770, %v3962
  %v3995 = vsub.f32 %v3771, %v3963
  %v3996 = vsub.f32 %v3772, %v3964
  %v3997 = vlaneseq
  %v3998 = vshrl.u32 %v3997, 7
  %v3999 = vsub.s32 3, %v3998
  %v4000 = vrot.slane %v425, %v3999
  %v4001 = vmul.f32 %v4000, %v3965
  %v4002 = vmul.f32 %v4000, %v3966
  %v4003 = vmul.f32 %v4000, %v3967
  %v4004 = vmul.f32 %v4000, %v3968
  %v4005 = vmul.f32 %v4000, %v3969
  %v4006 = vmul.f32 %v4000, %v3970
  %v4007 = vmul.f32 %v4000, %v3971
  %v4008 = vmul.f32 %v4000, %v3972
  %v4009 = vmul.f32 %v4000, %v3973
  %v4010 = vmul.f32 %v4000, %v3974
  %v4011 = vmul.f32 %v4000, %v3975
  %v4012 = vmul.f32 %v4000, %v3976
  %v4013 = vmul.f32 %v4000, %v3977
  %v4014 = vmul.f32 %v4000, %v3978
  %v4015 = vmul.f32 %v4000, %v3979
  %v4016 = vmul.f32 %v4000, %v3980
  %v4017 = vmul.f32 %v4000, %v3981
  %v4018 = vmul.f32 %v4000, %v3982
  %v4019 = vmul.f32 %v4000, %v3983
  %v4020 = vmul.f32 %v4000, %v3984
  %v4021 = vmul.f32 %v4000, %v3985
  %v4022 = vmul.f32 %v4000, %v3986
  %v4023 = vmul.f32 %v4000, %v3987
  %v4024 = vmul.f32 %v4000, %v3988
  %v4025 = vmul.f32 %v4000, %v3989
  %v4026 = vmul.f32 %v4000, %v3990
  %v4027 = vmul.f32 %v4000, %v3991
  %v4028 = vmul.f32 %v4000, %v3992
  %v4029 = vmul.f32 %v4000, %v3993
  %v4030 = vmul.f32 %v4000, %v3994
  %v4031 = vmul.f32 %v4000, %v3995
  %v4032 = vmul.f32 %v4000, %v3996
  %v4033 = vmul.f32 %v3965, %v3965
  %v4034 = vmul.f32 %v3966, %v3966
  %v4035 = vmul.f32 %v3967, %v3967
  %v4036 = vmul.f32 %v3968, %v3968
  %v4037 = vmul.f32 %v3969, %v3969
  %v4038 = vmul.f32 %v3970, %v3970
  %v4039 = vmul.f32 %v3971, %v3971
  %v4040 = vmul.f32 %v3972, %v3972
  %v4041 = vmul.f32 %v3973, %v3973
  %v4042 = vmul.f32 %v3974, %v3974
  %v4043 = vmul.f32 %v3975, %v3975
  %v4044 = vmul.f32 %v3976, %v3976
  %v4045 = vmul.f32 %v3977, %v3977
  %v4046 = vmul.f32 %v3978, %v3978
  %v4047 = vmul.f32 %v3979, %v3979
  %v4048 = vmul.f32 %v3980, %v3980
  %v4049 = vmul.f32 %v3981, %v3981
  %v4050 = vmul.f32 %v3982, %v3982
  %v4051 = vmul.f32 %v3983, %v3983
  %v4052 = vmul.f32 %v3984, %v3984
  %v4053 = vmul.f32 %v3985, %v3985
  %v4054 = vmul.f32 %v3986, %v3986
  %v4055 = vmul.f32 %v3987, %v3987
  %v4056 = vmul.f32 %v3988, %v3988
  %v4057 = vmul.f32 %v3989, %v3989
  %v4058 = vmul.f32 %v3990, %v3990
  %v4059 = vmul.f32 %v3991, %v3991
  %v4060 = vmul.f32 %v3992, %v3992
  %v4061 = vmul.f32 %v3993, %v3993
  %v4062 = vmul.f32 %v3994, %v3994
  %v4063 = vmul.f32 %v3995, %v3995
  %v4064 = vmul.f32 %v3996, %v3996
  %v4065 = vlaneseq
  %v4066 = vshrl.u32 %v4065, 7
  %v4067 = vsub.s32 0, %v4066
  %v4068 = vrot.slane %v432, %v4067
  %v4069 = vmul.f32 %v4033, %v4068
  %v4070 = vmul.f32 %v4034, %v4068
  %v4071 = vmul.f32 %v4035, %v4068
  %v4072 = vmul.f32 %v4036, %v4068
  %v4073 = vmul.f32 %v4037, %v4068
  %v4074 = vmul.f32 %v4038, %v4068
  %v4075 = vmul.f32 %v4039, %v4068
  %v4076 = vmul.f32 %v4040, %v4068
  %v4077 = vmul.f32 %v4041, %v4068
  %v4078 = vmul.f32 %v4042, %v4068
  %v4079 = vmul.f32 %v4043, %v4068
  %v4080 = vmul.f32 %v4044, %v4068
  %v4081 = vmul.f32 %v4045, %v4068
  %v4082 = vmul.f32 %v4046, %v4068
  %v4083 = vmul.f32 %v4047, %v4068
  %v4084 = vmul.f32 %v4048, %v4068
  %v4085 = vmul.f32 %v4049, %v4068
  %v4086 = vmul.f32 %v4050, %v4068
  %v4087 = vmul.f32 %v4051, %v4068
  %v4088 = vmul.f32 %v4052, %v4068
  %v4089 = vmul.f32 %v4053, %v4068
  %v4090 = vmul.f32 %v4054, %v4068
  %v4091 = vmul.f32 %v4055, %v4068
  %v4092 = vmul.f32 %v4056, %v4068
  %v4093 = vmul.f32 %v4057, %v4068
  %v4094 = vmul.f32 %v4058, %v4068
  %v4095 = vmul.f32 %v4059, %v4068
  %v4096 = vmul.f32 %v4060, %v4068
  %v4097 = vmul.f32 %v4061, %v4068
  %v4098 = vmul.f32 %v4062, %v4068
  %v4099 = vmul.f32 %v4063, %v4068
  %v4100 = vmul.f32 %v4064, %v4068
  %v4101 = vmul.f32 %v4069, 1.442695
  %v4102 = vpow.pop %v4101
  %v4103 = vmul.f32 %v4070, 1.442695
  %v4104 = vpow.pop %v4103
  %v4105 = vmul.f32 %v4071, 1.442695
  %v4106 = vpow.pop %v4105
  %v4107 = vmul.f32 %v4072, 1.442695
  %v4108 = vpow.pop %v4107
  %v4109 = vmul.f32 %v4073, 1.442695
  %v4110 = vpow.pop %v4109
  %v4111 = vmul.f32 %v4074, 1.442695
  %v4112 = vpow.pop %v4111
  %v4113 = vmul.f32 %v4075, 1.442695
  %v4114 = vpow.pop %v4113
  %v4115 = vmul.f32 %v4076, 1.442695
  %v4116 = vpow.pop %v4115
  %v4117 = vmul.f32 %v4077, 1.442695
  %v4118 = vpow.pop %v4117
  %v4119 = vmul.f32 %v4078, 1.442695
  %v4120 = vpow.pop %v4119
  %v4121 = vmul.f32 %v4079, 1.442695
  %v4122 = vpow.pop %v4121
  %v4123 = vmul.f32 %v4080, 1.442695
  %v4124 = vpow.pop %v4123
  %v4125 = vmul.f32 %v4081, 1.442695
  %v4126 = vpow.pop %v4125
  %v4127 = vmul.f32 %v4082, 1.442695
  %v4128 = vpow.pop %v4127
  %v4129 = vmul.f32 %v4083, 1.442695
  %v4130 = vpow.pop %v4129
  %v4131 = vmul.f32 %v4084, 1.442695
  %v4132 = vpow.pop %v4131
  %v4133 = vmul.f32 %v4085, 1.442695
  %v4134 = vpow.pop %v4133
  %v4135 = vmul.f32 %v4086, 1.442695
  %v4136 = vpow.pop %v4135
  %v4137 = vmul.f32 %v4087, 1.442695
  %v4138 = vpow.pop %v4137
  %v4139 = vmul.f32 %v4088, 1.442695
  %v4140 = vpow.pop %v4139
  %v4141 = vmul.f32 %v4089, 1.442695
  %v4142 = vpow.pop %v4141
  %v4143 = vmul.f32 %v4090, 1.442695
  %v4144 = vpow.pop %v4143
  %v4145 = vmul.f32 %v4091, 1.442695
  %v4146 = vpow.pop %v4145
  %v4147 = vmul.f32 %v4092, 1.442695
  %v4148 = vpow.pop %v4147
  %v4149 = vmul.f32 %v4093, 1.442695
  %v4150 = vpow.pop %v4149
  %v4151 = vmul.f32 %v4094, 1.442695
  %v4152 = vpow.pop %v4151
  %v4153 = vmul.f32 %v4095, 1.442695
  %v4154 = vpow.pop %v4153
  %v4155 = vmul.f32 %v4096, 1.442695
  %v4156 = vpow.pop %v4155
  %v4157 = vmul.f32 %v4097, 1.442695
  %v4158 = vpow.pop %v4157
  %v4159 = vmul.f32 %v4098, 1.442695
  %v4160 = vpow.pop %v4159
  %v4161 = vmul.f32 %v4099, 1.442695
  %v4162 = vpow.pop %v4161
  %v4163 = vmul.f32 %v4100, 1.442695
  %v4164 = vpow.pop %v4163
  %v4165 = vmul.f32 %v4001, %v4102
  %v4166 = vmul.f32 %v4002, %v4104
  %v4167 = vmul.f32 %v4003, %v4106
  %v4168 = vmul.f32 %v4004, %v4108
  %v4169 = vmul.f32 %v4005, %v4110
  %v4170 = vmul.f32 %v4006, %v4112
  %v4171 = vmul.f32 %v4007, %v4114
  %v4172 = vmul.f32 %v4008, %v4116
  %v4173 = vmul.f32 %v4009, %v4118
  %v4174 = vmul.f32 %v4010, %v4120
  %v4175 = vmul.f32 %v4011, %v4122
  %v4176 = vmul.f32 %v4012, %v4124
  %v4177 = vmul.f32 %v4013, %v4126
  %v4178 = vmul.f32 %v4014, %v4128
  %v4179 = vmul.f32 %v4015, %v4130
  %v4180 = vmul.f32 %v4016, %v4132
  %v4181 = vmul.f32 %v4017, %v4134
  %v4182 = vmul.f32 %v4018, %v4136
  %v4183 = vmul.f32 %v4019, %v4138
  %v4184 = vmul.f32 %v4020, %v4140
  %v4185 = vmul.f32 %v4021, %v4142
  %v4186 = vmul.f32 %v4022, %v4144
  %v4187 = vmul.f32 %v4023, %v4146
  %v4188 = vmul.f32 %v4024, %v4148
  %v4189 = vmul.f32 %v4025, %v4150
  %v4190 = vmul.f32 %v4026, %v4152
  %v4191 = vmul.f32 %v4027, %v4154
  %v4192 = vmul.f32 %v4028, %v4156
  %v4193 = vmul.f32 %v4029, %v4158
  %v4194 = vmul.f32 %v4030, %v4160
  %v4195 = vmul.f32 %v4031, %v4162
  %v4196 = vmul.f32 %v4032, %v4164
  %v4197 = vadd.f32 %v3705, %v4165
  %v4198 = vadd.f32 %v3706, %v4166
  %v4199 = vadd.f32 %v3707, %v4167
  %v4200 = vadd.f32 %v3708, %v4168
  %v4201 = vadd.f32 %v3709, %v4169
  %v4202 = vadd.f32 %v3710, %v4170
  %v4203 = vadd.f32 %v3711, %v4171
  %v4204 = vadd.f32 %v3712, %v4172
  %v4205 = vadd.f32 %v3713, %v4173
  %v4206 = vadd.f32 %v3714, %v4174
  %v4207 = vadd.f32 %v3715, %v4175
  %v4208 = vadd.f32 %v3716, %v4176
  %v4209 = vadd.f32 %v3717, %v4177
  %v4210 = vadd.f32 %v3718, %v4178
  %v4211 = vadd.f32 %v3719, %v4179
  %v4212 = vadd.f32 %v3720, %v4180
  %v4213 = vadd.f32 %v3721, %v4181
  %v4214 = vadd.f32 %v3722, %v4182
  %v4215 = vadd.f32 %v3723, %v4183
  %v4216 = vadd.f32 %v3724, %v4184
  %v4217 = vadd.f32 %v3725, %v4185
  %v4218 = vadd.f32 %v3726, %v4186
  %v4219 = vadd.f32 %v3727, %v4187
  %v4220 = vadd.f32 %v3728, %v4188
  %v4221 = vadd.f32 %v3729, %v4189
  %v4222 = vadd.f32 %v3730, %v4190
  %v4223 = vadd.f32 %v3731, %v4191
  %v4224 = vadd.f32 %v3732, %v4192
  %v4225 = vadd.f32 %v3733, %v4193
  %v4226 = vadd.f32 %v3734, %v4194
  %v4227 = vadd.f32 %v3735, %v4195
  %v4228 = vadd.f32 %v3736, %v4196
  %v4229 = vlaneseq
  %v4230 = vshrl.u32 %v4229, 7
  %v4231 = vsub.s32 6, %v4230
  %v4232 = vrot.slane %v426, %v4231
  %v4233 = vsub.f32 %v803, %v4232
  %v4234 = vsub.f32 %v850, %v4232
  %v4235 = vsub.f32 %v897, %v4232
  %v4236 = vsub.f32 %v944, %v4232
  %v4237 = vsub.f32 %v991, %v4232
  %v4238 = vsub.f32 %v1038, %v4232
  %v4239 = vsub.f32 %v1085, %v4232
  %v4240 = vsub.f32 %v1132, %v4232
  %v4241 = vsub.f32 %v1179, %v4232
  %v4242 = vsub.f32 %v1226, %v4232
  %v4243 = vsub.f32 %v1273, %v4232
  %v4244 = vsub.f32 %v1320, %v4232
  %v4245 = vsub.f32 %v1367, %v4232
  %v4246 = vsub.f32 %v1414, %v4232
  %v4247 = vsub.f32 %v1461, %v4232
  %v4248 = vsub.f32 %v1508, %v4232
  %v4249 = vsub.f32 %v1555, %v4232
  %v4250 = vsub.f32 %v1602, %v4232
  %v4251 = vsub.f32 %v1649, %v4232
  %v4252 = vsub.f32 %v1696, %v4232
  %v4253 = vsub.f32 %v1743, %v4232
  %v4254 = vsub.f32 %v1790, %v4232
  %v4255 = vsub.f32 %v1837, %v4232
  %v4256 = vsub.f32 %v1884, %v4232
  %v4257 = vsub.f32 %v1931, %v4232
  %v4258 = vsub.f32 %v1978, %v4232
  %v4259 = vsub.f32 %v2025, %v4232
  %v4260 = vsub.f32 %v2072, %v4232
  %v4261 = vsub.f32 %v2119, %v4232
  %v4262 = vsub.f32 %v2166, %v4232
  %v4263 = vsub.f32 %v2213, %v4232
  %v4264 = vsub.f32 %v2260, %v4232
  %v4265 = vmul.f32 %v4233, 0.15915494
  %v4266 = vmul.f32 %v4234, 0.15915494
  %v4267 = vmul.f32 %v4235, 0.15915494
  %v4268 = vmul.f32 %v4236, 0.15915494
  %v4269 = vmul.f32 %v4237, 0.15915494
  %v4270 = vmul.f32 %v4238, 0.15915494
  %v4271 = vmul.f32 %v4239, 0.15915494
  %v4272 = vmul.f32 %v4240, 0.15915494
  %v4273 = vmul.f32 %v4241, 0.15915494
  %v4274 = vmul.f32 %v4242, 0.15915494
  %v4275 = vmul.f32 %v4243, 0.15915494
  %v4276 = vmul.f32 %v4244, 0.15915494
  %v4277 = vmul.f32 %v4245, 0.15915494
  %v4278 = vmul.f32 %v4246, 0.15915494
  %v4279 = vmul.f32 %v4247, 0.15915494
  %v4280 = vmul.f32 %v4248, 0.15915494
  %v4281 = vmul.f32 %v4249, 0.15915494
  %v4282 = vmul.f32 %v4250, 0.15915494
  %v4283 = vmul.f32 %v4251, 0.15915494
  %v4284 = vmul.f32 %v4252, 0.15915494
  %v4285 = vmul.f32 %v4253, 0.15915494
  %v4286 = vmul.f32 %v4254, 0.15915494
  %v4287 = vmul.f32 %v4255, 0.15915494
  %v4288 = vmul.f32 %v4256, 0.15915494
  %v4289 = vmul.f32 %v4257, 0.15915494
  %v4290 = vmul.f32 %v4258, 0.15915494
  %v4291 = vmul.f32 %v4259, 0.15915494
  %v4292 = vmul.f32 %v4260, 0.15915494
  %v4293 = vmul.f32 %v4261, 0.15915494
  %v4294 = vmul.f32 %v4262, 0.15915494
  %v4295 = vmul.f32 %v4263, 0.15915494
  %v4296 = vmul.f32 %v4264, 0.15915494
  %vm4297 = vcmp.ge.f32.partialorder %v4265, 0.0
  %vm4298 = vcmp.ge.f32.partialorder %v4266, 0.0
  %vm4299 = vcmp.ge.f32.partialorder %v4267, 0.0
  %vm4300 = vcmp.ge.f32.partialorder %v4268, 0.0
  %vm4301 = vcmp.ge.f32.partialorder %v4269, 0.0
  %vm4302 = vcmp.ge.f32.partialorder %v4270, 0.0
  %vm4303 = vcmp.ge.f32.partialorder %v4271, 0.0
  %vm4304 = vcmp.ge.f32.partialorder %v4272, 0.0
  %vm4305 = vcmp.ge.f32.partialorder %v4273, 0.0
  %vm4306 = vcmp.ge.f32.partialorder %v4274, 0.0
  %vm4307 = vcmp.ge.f32.partialorder %v4275, 0.0
  %vm4308 = vcmp.ge.f32.partialorder %v4276, 0.0
  %vm4309 = vcmp.ge.f32.partialorder %v4277, 0.0
  %vm4310 = vcmp.ge.f32.partialorder %v4278, 0.0
  %vm4311 = vcmp.ge.f32.partialorder %v4279, 0.0
  %vm4312 = vcmp.ge.f32.partialorder %v4280, 0.0
  %vm4313 = vcmp.ge.f32.partialorder %v4281, 0.0
  %vm4314 = vcmp.ge.f32.partialorder %v4282, 0.0
  %vm4315 = vcmp.ge.f32.partialorder %v4283, 0.0
  %vm4316 = vcmp.ge.f32.partialorder %v4284, 0.0
  %vm4317 = vcmp.ge.f32.partialorder %v4285, 0.0
  %vm4318 = vcmp.ge.f32.partialorder %v4286, 0.0
  %vm4319 = vcmp.ge.f32.partialorder %v4287, 0.0
  %vm4320 = vcmp.ge.f32.partialorder %v4288, 0.0
  %vm4321 = vcmp.ge.f32.partialorder %v4289, 0.0
  %vm4322 = vcmp.ge.f32.partialorder %v4290, 0.0
  %vm4323 = vcmp.ge.f32.partialorder %v4291, 0.0
  %vm4324 = vcmp.ge.f32.partialorder %v4292, 0.0
  %vm4325 = vcmp.ge.f32.partialorder %v4293, 0.0
  %vm4326 = vcmp.ge.f32.partialorder %v4294, 0.0
  %vm4327 = vcmp.ge.f32.partialorder %v4295, 0.0
  %vm4328 = vcmp.ge.f32.partialorder %v4296, 0.0
  %v4329 = vfloor.f32 %v4265
  %v4330 = vfloor.f32 %v4266
  %v4331 = vfloor.f32 %v4267
  %v4332 = vfloor.f32 %v4268
  %v4333 = vfloor.f32 %v4269
  %v4334 = vfloor.f32 %v4270
  %v4335 = vfloor.f32 %v4271
  %v4336 = vfloor.f32 %v4272
  %v4337 = vfloor.f32 %v4273
  %v4338 = vfloor.f32 %v4274
  %v4339 = vfloor.f32 %v4275
  %v4340 = vfloor.f32 %v4276
  %v4341 = vfloor.f32 %v4277
  %v4342 = vfloor.f32 %v4278
  %v4343 = vfloor.f32 %v4279
  %v4344 = vfloor.f32 %v4280
  %v4345 = vfloor.f32 %v4281
  %v4346 = vfloor.f32 %v4282
  %v4347 = vfloor.f32 %v4283
  %v4348 = vfloor.f32 %v4284
  %v4349 = vfloor.f32 %v4285
  %v4350 = vfloor.f32 %v4286
  %v4351 = vfloor.f32 %v4287
  %v4352 = vfloor.f32 %v4288
  %v4353 = vfloor.f32 %v4289
  %v4354 = vfloor.f32 %v4290
  %v4355 = vfloor.f32 %v4291
  %v4356 = vfloor.f32 %v4292
  %v4357 = vfloor.f32 %v4293
  %v4358 = vfloor.f32 %v4294
  %v4359 = vfloor.f32 %v4295
  %v4360 = vfloor.f32 %v4296
  %v4361 = vceil.f32 %v4265
  %v4362 = vceil.f32 %v4266
  %v4363 = vceil.f32 %v4267
  %v4364 = vceil.f32 %v4268
  %v4365 = vceil.f32 %v4269
  %v4366 = vceil.f32 %v4270
  %v4367 = vceil.f32 %v4271
  %v4368 = vceil.f32 %v4272
  %v4369 = vceil.f32 %v4273
  %v4370 = vceil.f32 %v4274
  %v4371 = vceil.f32 %v4275
  %v4372 = vceil.f32 %v4276
  %v4373 = vceil.f32 %v4277
  %v4374 = vceil.f32 %v4278
  %v4375 = vceil.f32 %v4279
  %v4376 = vceil.f32 %v4280
  %v4377 = vceil.f32 %v4281
  %v4378 = vceil.f32 %v4282
  %v4379 = vceil.f32 %v4283
  %v4380 = vceil.f32 %v4284
  %v4381 = vceil.f32 %v4285
  %v4382 = vceil.f32 %v4286
  %v4383 = vceil.f32 %v4287
  %v4384 = vceil.f32 %v4288
  %v4385 = vceil.f32 %v4289
  %v4386 = vceil.f32 %v4290
  %v4387 = vceil.f32 %v4291
  %v4388 = vceil.f32 %v4292
  %v4389 = vceil.f32 %v4293
  %v4390 = vceil.f32 %v4294
  %v4391 = vceil.f32 %v4295
  %v4392 = vceil.f32 %v4296
  %v4393 = vsel %vm4297, %v4329, %v4361
  %v4394 = vsel %vm4298, %v4330, %v4362
  %v4395 = vsel %vm4299, %v4331, %v4363
  %v4396 = vsel %vm4300, %v4332, %v4364
  %v4397 = vsel %vm4301, %v4333, %v4365
  %v4398 = vsel %vm4302, %v4334, %v4366
  %v4399 = vsel %vm4303, %v4335, %v4367
  %v4400 = vsel %vm4304, %v4336, %v4368
  %v4401 = vsel %vm4305, %v4337, %v4369
  %v4402 = vsel %vm4306, %v4338, %v4370
  %v4403 = vsel %vm4307, %v4339, %v4371
  %v4404 = vsel %vm4308, %v4340, %v4372
  %v4405 = vsel %vm4309, %v4341, %v4373
  %v4406 = vsel %vm4310, %v4342, %v4374
  %v4407 = vsel %vm4311, %v4343, %v4375
  %v4408 = vsel %vm4312, %v4344, %v4376
  %v4409 = vsel %vm4313, %v4345, %v4377
  %v4410 = vsel %vm4314, %v4346, %v4378
  %v4411 = vsel %vm4315, %v4347, %v4379
  %v4412 = vsel %vm4316, %v4348, %v4380
  %v4413 = vsel %vm4317, %v4349, %v4381
  %v4414 = vsel %vm4318, %v4350, %v4382
  %v4415 = vsel %vm4319, %v4351, %v4383
  %v4416 = vsel %vm4320, %v4352, %v4384
  %v4417 = vsel %vm4321, %v4353, %v4385
  %v4418 = vsel %vm4322, %v4354, %v4386
  %v4419 = vsel %vm4323, %v4355, %v4387
  %v4420 = vsel %vm4324, %v4356, %v4388
  %v4421 = vsel %vm4325, %v4357, %v4389
  %v4422 = vsel %vm4326, %v4358, %v4390
  %v4423 = vsel %vm4327, %v4359, %v4391
  %v4424 = vsel %vm4328, %v4360, %v4392
  %v4425 = vmul.f32 %v4393, 6.2831855
  %v4426 = vmul.f32 %v4394, 6.2831855
  %v4427 = vmul.f32 %v4395, 6.2831855
  %v4428 = vmul.f32 %v4396, 6.2831855
  %v4429 = vmul.f32 %v4397, 6.2831855
  %v4430 = vmul.f32 %v4398, 6.2831855
  %v4431 = vmul.f32 %v4399, 6.2831855
  %v4432 = vmul.f32 %v4400, 6.2831855
  %v4433 = vmul.f32 %v4401, 6.2831855
  %v4434 = vmul.f32 %v4402, 6.2831855
  %v4435 = vmul.f32 %v4403, 6.2831855
  %v4436 = vmul.f32 %v4404, 6.2831855
  %v4437 = vmul.f32 %v4405, 6.2831855
  %v4438 = vmul.f32 %v4406, 6.2831855
  %v4439 = vmul.f32 %v4407, 6.2831855
  %v4440 = vmul.f32 %v4408, 6.2831855
  %v4441 = vmul.f32 %v4409, 6.2831855
  %v4442 = vmul.f32 %v4410, 6.2831855
  %v4443 = vmul.f32 %v4411, 6.2831855
  %v4444 = vmul.f32 %v4412, 6.2831855
  %v4445 = vmul.f32 %v4413, 6.2831855
  %v4446 = vmul.f32 %v4414, 6.2831855
  %v4447 = vmul.f32 %v4415, 6.2831855
  %v4448 = vmul.f32 %v4416, 6.2831855
  %v4449 = vmul.f32 %v4417, 6.2831855
  %v4450 = vmul.f32 %v4418, 6.2831855
  %v4451 = vmul.f32 %v4419, 6.2831855
  %v4452 = vmul.f32 %v4420, 6.2831855
  %v4453 = vmul.f32 %v4421, 6.2831855
  %v4454 = vmul.f32 %v4422, 6.2831855
  %v4455 = vmul.f32 %v4423, 6.2831855
  %v4456 = vmul.f32 %v4424, 6.2831855
  %v4457 = vsub.f32 %v4233, %v4425
  %v4458 = vsub.f32 %v4234, %v4426
  %v4459 = vsub.f32 %v4235, %v4427
  %v4460 = vsub.f32 %v4236, %v4428
  %v4461 = vsub.f32 %v4237, %v4429
  %v4462 = vsub.f32 %v4238, %v4430
  %v4463 = vsub.f32 %v4239, %v4431
  %v4464 = vsub.f32 %v4240, %v4432
  %v4465 = vsub.f32 %v4241, %v4433
  %v4466 = vsub.f32 %v4242, %v4434
  %v4467 = vsub.f32 %v4243, %v4435
  %v4468 = vsub.f32 %v4244, %v4436
  %v4469 = vsub.f32 %v4245, %v4437
  %v4470 = vsub.f32 %v4246, %v4438
  %v4471 = vsub.f32 %v4247, %v4439
  %v4472 = vsub.f32 %v4248, %v4440
  %v4473 = vsub.f32 %v4249, %v4441
  %v4474 = vsub.f32 %v4250, %v4442
  %v4475 = vsub.f32 %v4251, %v4443
  %v4476 = vsub.f32 %v4252, %v4444
  %v4477 = vsub.f32 %v4253, %v4445
  %v4478 = vsub.f32 %v4254, %v4446
  %v4479 = vsub.f32 %v4255, %v4447
  %v4480 = vsub.f32 %v4256, %v4448
  %v4481 = vsub.f32 %v4257, %v4449
  %v4482 = vsub.f32 %v4258, %v4450
  %v4483 = vsub.f32 %v4259, %v4451
  %v4484 = vsub.f32 %v4260, %v4452
  %v4485 = vsub.f32 %v4261, %v4453
  %v4486 = vsub.f32 %v4262, %v4454
  %v4487 = vsub.f32 %v4263, %v4455
  %v4488 = vsub.f32 %v4264, %v4456
  %v4489 = vlaneseq
  %v4490 = vshrl.u32 %v4489, 7
  %v4491 = vsub.s32 4, %v4490
  %v4492 = vrot.slane %v425, %v4491
  %v4493 = vmul.f32 %v4492, %v4457
  %v4494 = vmul.f32 %v4492, %v4458
  %v4495 = vmul.f32 %v4492, %v4459
  %v4496 = vmul.f32 %v4492, %v4460
  %v4497 = vmul.f32 %v4492, %v4461
  %v4498 = vmul.f32 %v4492, %v4462
  %v4499 = vmul.f32 %v4492, %v4463
  %v4500 = vmul.f32 %v4492, %v4464
  %v4501 = vmul.f32 %v4492, %v4465
  %v4502 = vmul.f32 %v4492, %v4466
  %v4503 = vmul.f32 %v4492, %v4467
  %v4504 = vmul.f32 %v4492, %v4468
  %v4505 = vmul.f32 %v4492, %v4469
  %v4506 = vmul.f32 %v4492, %v4470
  %v4507 = vmul.f32 %v4492, %v4471
  %v4508 = vmul.f32 %v4492, %v4472
  %v4509 = vmul.f32 %v4492, %v4473
  %v4510 = vmul.f32 %v4492, %v4474
  %v4511 = vmul.f32 %v4492, %v4475
  %v4512 = vmul.f32 %v4492, %v4476
  %v4513 = vmul.f32 %v4492, %v4477
  %v4514 = vmul.f32 %v4492, %v4478
  %v4515 = vmul.f32 %v4492, %v4479
  %v4516 = vmul.f32 %v4492, %v4480
  %v4517 = vmul.f32 %v4492, %v4481
  %v4518 = vmul.f32 %v4492, %v4482
  %v4519 = vmul.f32 %v4492, %v4483
  %v4520 = vmul.f32 %v4492, %v4484
  %v4521 = vmul.f32 %v4492, %v4485
  %v4522 = vmul.f32 %v4492, %v4486
  %v4523 = vmul.f32 %v4492, %v4487
  %v4524 = vmul.f32 %v4492, %v4488
  %v4525 = vmul.f32 %v4457, %v4457
  %v4526 = vmul.f32 %v4458, %v4458
  %v4527 = vmul.f32 %v4459, %v4459
  %v4528 = vmul.f32 %v4460, %v4460
  %v4529 = vmul.f32 %v4461, %v4461
  %v4530 = vmul.f32 %v4462, %v4462
  %v4531 = vmul.f32 %v4463, %v4463
  %v4532 = vmul.f32 %v4464, %v4464
  %v4533 = vmul.f32 %v4465, %v4465
  %v4534 = vmul.f32 %v4466, %v4466
  %v4535 = vmul.f32 %v4467, %v4467
  %v4536 = vmul.f32 %v4468, %v4468
  %v4537 = vmul.f32 %v4469, %v4469
  %v4538 = vmul.f32 %v4470, %v4470
  %v4539 = vmul.f32 %v4471, %v4471
  %v4540 = vmul.f32 %v4472, %v4472
  %v4541 = vmul.f32 %v4473, %v4473
  %v4542 = vmul.f32 %v4474, %v4474
  %v4543 = vmul.f32 %v4475, %v4475
  %v4544 = vmul.f32 %v4476, %v4476
  %v4545 = vmul.f32 %v4477, %v4477
  %v4546 = vmul.f32 %v4478, %v4478
  %v4547 = vmul.f32 %v4479, %v4479
  %v4548 = vmul.f32 %v4480, %v4480
  %v4549 = vmul.f32 %v4481, %v4481
  %v4550 = vmul.f32 %v4482, %v4482
  %v4551 = vmul.f32 %v4483, %v4483
  %v4552 = vmul.f32 %v4484, %v4484
  %v4553 = vmul.f32 %v4485, %v4485
  %v4554 = vmul.f32 %v4486, %v4486
  %v4555 = vmul.f32 %v4487, %v4487
  %v4556 = vmul.f32 %v4488, %v4488
  %v4557 = vlaneseq
  %v4558 = vshrl.u32 %v4557, 7
  %v4559 = vsub.s32 1, %v4558
  %v4560 = vrot.slane %v432, %v4559
  %v4561 = vmul.f32 %v4525, %v4560
  %v4562 = vmul.f32 %v4526, %v4560
  %v4563 = vmul.f32 %v4527, %v4560
  %v4564 = vmul.f32 %v4528, %v4560
  %v4565 = vmul.f32 %v4529, %v4560
  %v4566 = vmul.f32 %v4530, %v4560
  %v4567 = vmul.f32 %v4531, %v4560
  %v4568 = vmul.f32 %v4532, %v4560
  %v4569 = vmul.f32 %v4533, %v4560
  %v4570 = vmul.f32 %v4534, %v4560
  %v4571 = vmul.f32 %v4535, %v4560
  %v4572 = vmul.f32 %v4536, %v4560
  %v4573 = vmul.f32 %v4537, %v4560
  %v4574 = vmul.f32 %v4538, %v4560
  %v4575 = vmul.f32 %v4539, %v4560
  %v4576 = vmul.f32 %v4540, %v4560
  %v4577 = vmul.f32 %v4541, %v4560
  %v4578 = vmul.f32 %v4542, %v4560
  %v4579 = vmul.f32 %v4543, %v4560
  %v4580 = vmul.f32 %v4544, %v4560
  %v4581 = vmul.f32 %v4545, %v4560
  %v4582 = vmul.f32 %v4546, %v4560
  %v4583 = vmul.f32 %v4547, %v4560
  %v4584 = vmul.f32 %v4548, %v4560
  %v4585 = vmul.f32 %v4549, %v4560
  %v4586 = vmul.f32 %v4550, %v4560
  %v4587 = vmul.f32 %v4551, %v4560
  %v4588 = vmul.f32 %v4552, %v4560
  %v4589 = vmul.f32 %v4553, %v4560
  %v4590 = vmul.f32 %v4554, %v4560
  %v4591 = vmul.f32 %v4555, %v4560
  %v4592 = vmul.f32 %v4556, %v4560
  %v4593 = vmul.f32 %v4561, 1.442695
  %v4594 = vpow.pop %v4593
  %v4595 = vmul.f32 %v4562, 1.442695
  %v4596 = vpow.pop %v4595
  %v4597 = vmul.f32 %v4563, 1.442695
  %v4598 = vpow.pop %v4597
  %v4599 = vmul.f32 %v4564, 1.442695
  %v4600 = vpow.pop %v4599
  %v4601 = vmul.f32 %v4565, 1.442695
  %v4602 = vpow.pop %v4601
  %v4603 = vmul.f32 %v4566, 1.442695
  %v4604 = vpow.pop %v4603
  %v4605 = vmul.f32 %v4567, 1.442695
  %v4606 = vpow.pop %v4605
  %v4607 = vmul.f32 %v4568, 1.442695
  %v4608 = vpow.pop %v4607
  %v4609 = vmul.f32 %v4569, 1.442695
  %v4610 = vpow.pop %v4609
  %v4611 = vmul.f32 %v4570, 1.442695
  %v4612 = vpow.pop %v4611
  %v4613 = vmul.f32 %v4571, 1.442695
  %v4614 = vpow.pop %v4613
  %v4615 = vmul.f32 %v4572, 1.442695
  %v4616 = vpow.pop %v4615
  %v4617 = vmul.f32 %v4573, 1.442695
  %v4618 = vpow.pop %v4617
  %v4619 = vmul.f32 %v4574, 1.442695
  %v4620 = vpow.pop %v4619
  %v4621 = vmul.f32 %v4575, 1.442695
  %v4622 = vpow.pop %v4621
  %v4623 = vmul.f32 %v4576, 1.442695
  %v4624 = vpow.pop %v4623
  %v4625 = vmul.f32 %v4577, 1.442695
  %v4626 = vpow.pop %v4625
  %v4627 = vmul.f32 %v4578, 1.442695
  %v4628 = vpow.pop %v4627
  %v4629 = vmul.f32 %v4579, 1.442695
  %v4630 = vpow.pop %v4629
  %v4631 = vmul.f32 %v4580, 1.442695
  %v4632 = vpow.pop %v4631
  %v4633 = vmul.f32 %v4581, 1.442695
  %v4634 = vpow.pop %v4633
  %v4635 = vmul.f32 %v4582, 1.442695
  %v4636 = vpow.pop %v4635
  %v4637 = vmul.f32 %v4583, 1.442695
  %v4638 = vpow.pop %v4637
  %v4639 = vmul.f32 %v4584, 1.442695
  %v4640 = vpow.pop %v4639
  %v4641 = vmul.f32 %v4585, 1.442695
  %v4642 = vpow.pop %v4641
  %v4643 = vmul.f32 %v4586, 1.442695
  %v4644 = vpow.pop %v4643
  %v4645 = vmul.f32 %v4587, 1.442695
  %v4646 = vpow.pop %v4645
  %v4647 = vmul.f32 %v4588, 1.442695
  %v4648 = vpow.pop %v4647
  %v4649 = vmul.f32 %v4589, 1.442695
  %v4650 = vpow.pop %v4649
  %v4651 = vmul.f32 %v4590, 1.442695
  %v4652 = vpow.pop %v4651
  %v4653 = vmul.f32 %v4591, 1.442695
  %v4654 = vpow.pop %v4653
  %v4655 = vmul.f32 %v4592, 1.442695
  %v4656 = vpow.pop %v4655
  %v4657 = vmul.f32 %v4493, %v4594
  %v4658 = vmul.f32 %v4494, %v4596
  %v4659 = vmul.f32 %v4495, %v4598
  %v4660 = vmul.f32 %v4496, %v4600
  %v4661 = vmul.f32 %v4497, %v4602
  %v4662 = vmul.f32 %v4498, %v4604
  %v4663 = vmul.f32 %v4499, %v4606
  %v4664 = vmul.f32 %v4500, %v4608
  %v4665 = vmul.f32 %v4501, %v4610
  %v4666 = vmul.f32 %v4502, %v4612
  %v4667 = vmul.f32 %v4503, %v4614
  %v4668 = vmul.f32 %v4504, %v4616
  %v4669 = vmul.f32 %v4505, %v4618
  %v4670 = vmul.f32 %v4506, %v4620
  %v4671 = vmul.f32 %v4507, %v4622
  %v4672 = vmul.f32 %v4508, %v4624
  %v4673 = vmul.f32 %v4509, %v4626
  %v4674 = vmul.f32 %v4510, %v4628
  %v4675 = vmul.f32 %v4511, %v4630
  %v4676 = vmul.f32 %v4512, %v4632
  %v4677 = vmul.f32 %v4513, %v4634
  %v4678 = vmul.f32 %v4514, %v4636
  %v4679 = vmul.f32 %v4515, %v4638
  %v4680 = vmul.f32 %v4516, %v4640
  %v4681 = vmul.f32 %v4517, %v4642
  %v4682 = vmul.f32 %v4518, %v4644
  %v4683 = vmul.f32 %v4519, %v4646
  %v4684 = vmul.f32 %v4520, %v4648
  %v4685 = vmul.f32 %v4521, %v4650
  %v4686 = vmul.f32 %v4522, %v4652
  %v4687 = vmul.f32 %v4523, %v4654
  %v4688 = vmul.f32 %v4524, %v4656
  %v4689 = vadd.f32 %v4197, %v4657
  %v4690 = vadd.f32 %v4198, %v4658
  %v4691 = vadd.f32 %v4199, %v4659
  %v4692 = vadd.f32 %v4200, %v4660
  %v4693 = vadd.f32 %v4201, %v4661
  %v4694 = vadd.f32 %v4202, %v4662
  %v4695 = vadd.f32 %v4203, %v4663
  %v4696 = vadd.f32 %v4204, %v4664
  %v4697 = vadd.f32 %v4205, %v4665
  %v4698 = vadd.f32 %v4206, %v4666
  %v4699 = vadd.f32 %v4207, %v4667
  %v4700 = vadd.f32 %v4208, %v4668
  %v4701 = vadd.f32 %v4209, %v4669
  %v4702 = vadd.f32 %v4210, %v4670
  %v4703 = vadd.f32 %v4211, %v4671
  %v4704 = vadd.f32 %v4212, %v4672
  %v4705 = vadd.f32 %v4213, %v4673
  %v4706 = vadd.f32 %v4214, %v4674
  %v4707 = vadd.f32 %v4215, %v4675
  %v4708 = vadd.f32 %v4216, %v4676
  %v4709 = vadd.f32 %v4217, %v4677
  %v4710 = vadd.f32 %v4218, %v4678
  %v4711 = vadd.f32 %v4219, %v4679
  %v4712 = vadd.f32 %v4220, %v4680
  %v4713 = vadd.f32 %v4221, %v4681
  %v4714 = vadd.f32 %v4222, %v4682
  %v4715 = vadd.f32 %v4223, %v4683
  %v4716 = vadd.f32 %v4224, %v4684
  %v4717 = vadd.f32 %v4225, %v4685
  %v4718 = vadd.f32 %v4226, %v4686
  %v4719 = vadd.f32 %v4227, %v4687
  %v4720 = vadd.f32 %v4228, %v4688
  %v4721 = vld [vmem:[%s8] sm:$0xff]
  %v4722 = vld [vmem:[%s8 + $0x8] sm:$0xff]
  %v4723 = vld [vmem:[%s8 + $0x10] sm:$0xff]
  %v4724 = vld [vmem:[%s8 + $0x18] sm:$0xff]
  %v4725 = vld [vmem:[%s8 + $0x20] sm:$0xff]
  %v4726 = vld [vmem:[%s8 + $0x28] sm:$0xff]
  %v4727 = vld [vmem:[%s8 + $0x30] sm:$0xff]
  %v4728 = vld [vmem:[%s8 + $0x38] sm:$0xff]
  %v4729 = vld [vmem:[%s8 + $0x40] sm:$0xff]
  %v4730 = vld [vmem:[%s8 + $0x48] sm:$0xff]
  %v4731 = vld [vmem:[%s8 + $0x50] sm:$0xff]
  %v4732 = vld [vmem:[%s8 + $0x58] sm:$0xff]
  %v4733 = vld [vmem:[%s8 + $0x60] sm:$0xff]
  %v4734 = vld [vmem:[%s8 + $0x68] sm:$0xff]
  %v4735 = vld [vmem:[%s8 + $0x70] sm:$0xff]
  %v4736 = vld [vmem:[%s8 + $0x78] sm:$0xff]
  %v4737 = vld [vmem:[%s8 + $0x80] sm:$0xff]
  %v4738 = vld [vmem:[%s8 + $0x88] sm:$0xff]
  %v4739 = vld [vmem:[%s8 + $0x90] sm:$0xff]
  %v4740 = vld [vmem:[%s8 + $0x98] sm:$0xff]
  %v4741 = vld [vmem:[%s8 + $0xa0] sm:$0xff]
  %v4742 = vld [vmem:[%s8 + $0xa8] sm:$0xff]
  %v4743 = vld [vmem:[%s8 + $0xb0] sm:$0xff]
  %v4744 = vld [vmem:[%s8 + $0xb8] sm:$0xff]
  %v4745 = vld [vmem:[%s8 + $0xc0] sm:$0xff]
  %v4746 = vld [vmem:[%s8 + $0xc8] sm:$0xff]
  %v4747 = vld [vmem:[%s8 + $0xd0] sm:$0xff]
  %v4748 = vld [vmem:[%s8 + $0xd8] sm:$0xff]
  %v4749 = vld [vmem:[%s8 + $0xe0] sm:$0xff]
  %v4750 = vld [vmem:[%s8 + $0xe8] sm:$0xff]
  %v4751 = vld [vmem:[%s8 + $0xf0] sm:$0xff]
  %v4752 = vld [vmem:[%s8 + $0xf8] sm:$0xff]
  %v4753 = vmul.f32 %v4689, 0.001953125
  %v4754 = vmul.f32 %v4690, 0.001953125
  %v4755 = vmul.f32 %v4691, 0.001953125
  %v4756 = vmul.f32 %v4692, 0.001953125
  %v4757 = vmul.f32 %v4693, 0.001953125
  %v4758 = vmul.f32 %v4694, 0.001953125
  %v4759 = vmul.f32 %v4695, 0.001953125
  %v4760 = vmul.f32 %v4696, 0.001953125
  %v4761 = vmul.f32 %v4697, 0.001953125
  %v4762 = vmul.f32 %v4698, 0.001953125
  %v4763 = vmul.f32 %v4699, 0.001953125
  %v4764 = vmul.f32 %v4700, 0.001953125
  %v4765 = vmul.f32 %v4701, 0.001953125
  %v4766 = vmul.f32 %v4702, 0.001953125
  %v4767 = vmul.f32 %v4703, 0.001953125
  %v4768 = vmul.f32 %v4704, 0.001953125
  %v4769 = vmul.f32 %v4705, 0.001953125
  %v4770 = vmul.f32 %v4706, 0.001953125
  %v4771 = vmul.f32 %v4707, 0.001953125
  %v4772 = vmul.f32 %v4708, 0.001953125
  %v4773 = vmul.f32 %v4709, 0.001953125
  %v4774 = vmul.f32 %v4710, 0.001953125
  %v4775 = vmul.f32 %v4711, 0.001953125
  %v4776 = vmul.f32 %v4712, 0.001953125
  %v4777 = vmul.f32 %v4713, 0.001953125
  %v4778 = vmul.f32 %v4714, 0.001953125
  %v4779 = vmul.f32 %v4715, 0.001953125
  %v4780 = vmul.f32 %v4716, 0.001953125
  %v4781 = vmul.f32 %v4717, 0.001953125
  %v4782 = vmul.f32 %v4718, 0.001953125
  %v4783 = vmul.f32 %v4719, 0.001953125
  %v4784 = vmul.f32 %v4720, 0.001953125
  %4786 = vset.pattern.permute.xlu0 0
  %4787 = vperm.xlu0 %4786, %v4721
  %v4788 = vpop.permute.xlu0 %4787
  %4791 = vset.pattern.permute.xlu0 0
  %4792 = vperm.xlu0 %4791, %v4722
  %v4793 = vpop.permute.xlu0 %4792
  %4796 = vset.pattern.permute.xlu0 0
  %4797 = vperm.xlu0 %4796, %v4723
  %v4798 = vpop.permute.xlu0 %4797
  %4801 = vset.pattern.permute.xlu0 0
  %4802 = vperm.xlu0 %4801, %v4724
  %v4803 = vpop.permute.xlu0 %4802
  %4806 = vset.pattern.permute.xlu0 0
  %4807 = vperm.xlu0 %4806, %v4725
  %v4808 = vpop.permute.xlu0 %4807
  %4811 = vset.pattern.permute.xlu0 0
  %4812 = vperm.xlu0 %4811, %v4726
  %v4813 = vpop.permute.xlu0 %4812
  %4816 = vset.pattern.permute.xlu0 0
  %4817 = vperm.xlu0 %4816, %v4727
  %v4818 = vpop.permute.xlu0 %4817
  %4821 = vset.pattern.permute.xlu0 0
  %4822 = vperm.xlu0 %4821, %v4728
  %v4823 = vpop.permute.xlu0 %4822
  %4826 = vset.pattern.permute.xlu0 0
  %4827 = vperm.xlu0 %4826, %v4729
  %v4828 = vpop.permute.xlu0 %4827
  %4831 = vset.pattern.permute.xlu0 0
  %4832 = vperm.xlu0 %4831, %v4730
  %v4833 = vpop.permute.xlu0 %4832
  %4836 = vset.pattern.permute.xlu0 0
  %4837 = vperm.xlu0 %4836, %v4731
  %v4838 = vpop.permute.xlu0 %4837
  %4841 = vset.pattern.permute.xlu0 0
  %4842 = vperm.xlu0 %4841, %v4732
  %v4843 = vpop.permute.xlu0 %4842
  %4846 = vset.pattern.permute.xlu0 0
  %4847 = vperm.xlu0 %4846, %v4733
  %v4848 = vpop.permute.xlu0 %4847
  %4851 = vset.pattern.permute.xlu0 0
  %4852 = vperm.xlu0 %4851, %v4734
  %v4853 = vpop.permute.xlu0 %4852
  %4856 = vset.pattern.permute.xlu0 0
  %4857 = vperm.xlu0 %4856, %v4735
  %v4858 = vpop.permute.xlu0 %4857
  %4861 = vset.pattern.permute.xlu0 0
  %4862 = vperm.xlu0 %4861, %v4736
  %v4863 = vpop.permute.xlu0 %4862
  %4866 = vset.pattern.permute.xlu0 0
  %4867 = vperm.xlu0 %4866, %v4737
  %v4868 = vpop.permute.xlu0 %4867
  %4871 = vset.pattern.permute.xlu0 0
  %4872 = vperm.xlu0 %4871, %v4738
  %v4873 = vpop.permute.xlu0 %4872
  %4876 = vset.pattern.permute.xlu0 0
  %4877 = vperm.xlu0 %4876, %v4739
  %v4878 = vpop.permute.xlu0 %4877
  %4881 = vset.pattern.permute.xlu0 0
  %4882 = vperm.xlu0 %4881, %v4740
  %v4883 = vpop.permute.xlu0 %4882
  %4886 = vset.pattern.permute.xlu0 0
  %4887 = vperm.xlu0 %4886, %v4741
  %v4888 = vpop.permute.xlu0 %4887
  %4891 = vset.pattern.permute.xlu0 0
  %4892 = vperm.xlu0 %4891, %v4742
  %v4893 = vpop.permute.xlu0 %4892
  %4896 = vset.pattern.permute.xlu0 0
  %4897 = vperm.xlu0 %4896, %v4743
  %v4898 = vpop.permute.xlu0 %4897
  %4901 = vset.pattern.permute.xlu0 0
  %4902 = vperm.xlu0 %4901, %v4744
  %v4903 = vpop.permute.xlu0 %4902
  %4906 = vset.pattern.permute.xlu0 0
  %4907 = vperm.xlu0 %4906, %v4745
  %v4908 = vpop.permute.xlu0 %4907
  %4911 = vset.pattern.permute.xlu0 0
  %4912 = vperm.xlu0 %4911, %v4746
  %v4913 = vpop.permute.xlu0 %4912
  %4916 = vset.pattern.permute.xlu0 0
  %4917 = vperm.xlu0 %4916, %v4747
  %v4918 = vpop.permute.xlu0 %4917
  %4921 = vset.pattern.permute.xlu0 0
  %4922 = vperm.xlu0 %4921, %v4748
  %v4923 = vpop.permute.xlu0 %4922
  %4926 = vset.pattern.permute.xlu0 0
  %4927 = vperm.xlu0 %4926, %v4749
  %v4928 = vpop.permute.xlu0 %4927
  %4931 = vset.pattern.permute.xlu0 0
  %4932 = vperm.xlu0 %4931, %v4750
  %v4933 = vpop.permute.xlu0 %4932
  %4936 = vset.pattern.permute.xlu0 0
  %4937 = vperm.xlu0 %4936, %v4751
  %v4938 = vpop.permute.xlu0 %4937
  %4941 = vset.pattern.permute.xlu0 0
  %4942 = vperm.xlu0 %4941, %v4752
  %v4943 = vpop.permute.xlu0 %4942
  %v4945 = vsub.f32 %v4788, %v4753
  %v4946 = vsub.f32 %v4793, %v4754
  %v4947 = vsub.f32 %v4798, %v4755
  %v4948 = vsub.f32 %v4803, %v4756
  %v4949 = vsub.f32 %v4808, %v4757
  %v4950 = vsub.f32 %v4813, %v4758
  %v4951 = vsub.f32 %v4818, %v4759
  %v4952 = vsub.f32 %v4823, %v4760
  %v4953 = vsub.f32 %v4828, %v4761
  %v4954 = vsub.f32 %v4833, %v4762
  %v4955 = vsub.f32 %v4838, %v4763
  %v4956 = vsub.f32 %v4843, %v4764
  %v4957 = vsub.f32 %v4848, %v4765
  %v4958 = vsub.f32 %v4853, %v4766
  %v4959 = vsub.f32 %v4858, %v4767
  %v4960 = vsub.f32 %v4863, %v4768
  %v4961 = vsub.f32 %v4868, %v4769
  %v4962 = vsub.f32 %v4873, %v4770
  %v4963 = vsub.f32 %v4878, %v4771
  %v4964 = vsub.f32 %v4883, %v4772
  %v4965 = vsub.f32 %v4888, %v4773
  %v4966 = vsub.f32 %v4893, %v4774
  %v4967 = vsub.f32 %v4898, %v4775
  %v4968 = vsub.f32 %v4903, %v4776
  %v4969 = vsub.f32 %v4908, %v4777
  %v4970 = vsub.f32 %v4913, %v4778
  %v4971 = vsub.f32 %v4918, %v4779
  %v4972 = vsub.f32 %v4923, %v4780
  %v4973 = vsub.f32 %v4928, %v4781
  %v4974 = vsub.f32 %v4933, %v4782
  %v4975 = vsub.f32 %v4938, %v4783
  %v4976 = vsub.f32 %v4943, %v4784
  %4977 = vst [vmem:[#allocation4] sm:$0xff] %v4945
  %4978 = vst [vmem:[#allocation4 + $0x8] sm:$0xff] %v4946
  %4979 = vst [vmem:[#allocation4 + $0x10] sm:$0xff] %v4947
  %4980 = vst [vmem:[#allocation4 + $0x18] sm:$0xff] %v4948
  %4981 = vst [vmem:[#allocation4 + $0x20] sm:$0xff] %v4949
  %4982 = vst [vmem:[#allocation4 + $0x28] sm:$0xff] %v4950
  %4983 = vst [vmem:[#allocation4 + $0x30] sm:$0xff] %v4951
  %4984 = vst [vmem:[#allocation4 + $0x38] sm:$0xff] %v4952
  %4985 = vst [vmem:[#allocation4 + $0x40] sm:$0xff] %v4953
  %4986 = vst [vmem:[#allocation4 + $0x48] sm:$0xff] %v4954
  %4987 = vst [vmem:[#allocation4 + $0x50] sm:$0xff] %v4955
  %4988 = vst [vmem:[#allocation4 + $0x58] sm:$0xff] %v4956
  %4989 = vst [vmem:[#allocation4 + $0x60] sm:$0xff] %v4957
  %4990 = vst [vmem:[#allocation4 + $0x68] sm:$0xff] %v4958
  %4991 = vst [vmem:[#allocation4 + $0x70] sm:$0xff] %v4959
  %4992 = vst [vmem:[#allocation4 + $0x78] sm:$0xff] %v4960
  %4993 = vst [vmem:[#allocation4 + $0x80] sm:$0xff] %v4961
  %4994 = vst [vmem:[#allocation4 + $0x88] sm:$0xff] %v4962
  %4995 = vst [vmem:[#allocation4 + $0x90] sm:$0xff] %v4963
  %4996 = vst [vmem:[#allocation4 + $0x98] sm:$0xff] %v4964
  %4997 = vst [vmem:[#allocation4 + $0xa0] sm:$0xff] %v4965
  %4998 = vst [vmem:[#allocation4 + $0xa8] sm:$0xff] %v4966
  %4999 = vst [vmem:[#allocation4 + $0xb0] sm:$0xff] %v4967
  %5000 = vst [vmem:[#allocation4 + $0xb8] sm:$0xff] %v4968
  %5001 = vst [vmem:[#allocation4 + $0xc0] sm:$0xff] %v4969
  %5002 = vst [vmem:[#allocation4 + $0xc8] sm:$0xff] %v4970
  %5003 = vst [vmem:[#allocation4 + $0xd0] sm:$0xff] %v4971
  %5004 = vst [vmem:[#allocation4 + $0xd8] sm:$0xff] %v4972
  %5005 = vst [vmem:[#allocation4 + $0xe0] sm:$0xff] %v4973
  %5006 = vst [vmem:[#allocation4 + $0xe8] sm:$0xff] %v4974
  %5007 = vst [vmem:[#allocation4 + $0xf0] sm:$0xff] %v4975
  %5008 = vst [vmem:[#allocation4 + $0xf8] sm:$0xff] %v4976
  loop: start=0, step=1, limit=27
  $region49: #{ode_generator_forward.1} parent=0 // loop_pre_header
    _
  $region50: #{ode_generator_forward.1} parent=0 // loop_header
    %s5010 = sphi 0, %s5014
    %p5011 = scmp.ge.s32.totalorder %s5010, 27
    %v5015 = vphi %v435, %v5049
  $region51: #{ode_generator_forward.1} parent=0 // loop_header_branch
    %5013 = sbr.rel (%p5011) target = $region55
  $region52: #{ode_generator_forward.1} parent=0 // loop_body
    %s5016 = smul.u32 %s5010, 8
    %s5017 = scalar_lea.vmem [#allocation4], %s5016
    %v5018 = vld [vmem:[%s5017] sm:$0xff]
    %v5019 = vmul.f32 %v5015, 0.9980469
    %v5020 = vadd.f32 %v5019, %v5018
    %v5021 = vmul.f32 %v5020, 0.9980469
    %v5023 = vrot.slane %v5018, 1
    %v5025 = vadd.f32 %v5021, %v5023
    %v5026 = vmul.f32 %v5025, 0.9980469
    %v5027 = vrot.slane %v5018, 2
    %v5029 = vadd.f32 %v5026, %v5027
    %v5030 = vmul.f32 %v5029, 0.9980469
    %v5031 = vrot.slane %v5018, 3
    %v5033 = vadd.f32 %v5030, %v5031
    %v5034 = vmul.f32 %v5033, 0.9980469
    %v5035 = vrot.slane %v5018, 4
    %v5037 = vadd.f32 %v5034, %v5035
    %v5038 = vmul.f32 %v5037, 0.9980469
    %v5039 = vrot.slane %v5018, 5
    %v5041 = vadd.f32 %v5038, %v5039
    %v5042 = vmul.f32 %v5041, 0.9980469
    %v5043 = vrot.slane %v5018, 6
    %v5045 = vadd.f32 %v5042, %v5043
    %v5046 = vmul.f32 %v5045, 0.9980469
    %v5047 = vrot.slane %v5018, 7
    %v5049 = vadd.f32 %v5046, %v5047
    %v5051 = vrot.slane %v5020, 7
    %v5054 = vrot.slane %v5025, 6
    %v5057 = vrot.slane %v5029, 5
    %v5060 = vrot.slane %v5033, 4
    %v5063 = vrot.slane %v5037, 3
    %v5066 = vrot.slane %v5041, 2
    %v5069 = vrot.slane %v5045, 1
    %v5071 = vsel %vm187, %v5015, %v5051
    %v5072 = vsel %vm83, %v5071, %v5054
    %vm5073 = vcmask 1042432
    %v5074 = vsel %vm5073, %v5072, %v5057
    %vm5075 = vcmask 1043456
    %v5076 = vsel %vm5075, %v5074, %v5060
    %vm5077 = vcmask 1044480
    %v5078 = vsel %vm5077, %v5076, %v5063
    %vm5079 = vcmask 1045504
    %v5080 = vsel %vm5079, %v5078, %v5066
    %vm5081 = vcmask 1046528
    %v5082 = vsel %vm5081, %v5080, %v5069
    %s5083 = scalar_lea.vmem %s10, %s5016
    %5084 = vst [vmem:[%s5083] sm:$0xff] %v5082
  $region53: #{ode_generator_forward.1} parent=0 // loop_footer
    %s5014 = sadd.s32 1, %s5010
  $region54: #{ode_generator_forward.1} parent=0 // loop_footer_branch
    %5009 = sbr.rel target = $region50
  $region55: #{ode_generator_forward.1} parent=0 // loop_exit
    _
  // Predicated region
  $region56: #{ode_generator_forward.1} parent=0 // pred_check
    _
  $region57: #{ode_generator_forward.1} parent=0 // pred_check_branch
    %5086 = sbr.rel (0) target = $region59
  $region58: #{ode_generator_forward.1} parent=0 // pred_region
    _
  $region59: #{ode_generator_forward.1} parent=0 // pred_fallthru
    _
  // Predicated region
  $region60: #{ode_generator_forward.1} parent=0 // pred_check
    _
  $region61: #{ode_generator_forward.1} parent=0 // pred_check_branch
    %5088 = sbr.rel (0) target = $region63
  $region62: #{ode_generator_forward.1} parent=0 // pred_region
    _
  $region63: #{ode_generator_forward.1} parent=0 // pred_fallthru
    _

</llo_original>
